<compile_context>
chip_gen: v7x
topology: tpu7x:2x2x1
jax: 0.10.0
libtpu: 0.0.40
codegen_flags: <defaults>
</compile_context>

<pallas_src>
import math
from functools import partial

import jax
import jax.numpy as jnp
from jax.experimental import pallas as pl
from jax.experimental.pallas import tpu as pltpu

_NEG = -1e30


# ----------------------------------------------------------------------------
# Single fused kernel: SAB1 -> SAB2 -> transform_in -> aggregator -> transform_out
# ----------------------------------------------------------------------------
def _fused_kernel(x_ref, mr_ref, mc_ref,
                  wqkv1_ref, bqkv1_ref, wo1_ref, bo1_ref,
                  wqkv2_ref, bqkv2_ref, wo2_ref, bo2_ref,
                  wti_ref, bti_ref, wsc_ref, bsc_ref,
                  w1_ref, w2_ref, w3_ref, bout_ref,
                  out_ref, agg_ref, *, num_heads, n_aggregators):
    f32 = jnp.float32
    Bt, T, Din = x_ref.shape
    F = wti_ref.shape[1]
    A = n_aggregators
    H = num_heads
    dh = F // H
    cdt = wti_ref.dtype                      # MXU operand dtype (bf16 by default)

    x = x_ref[...]                           # [Bt, T, Din] f32
    mr = mr_ref[...]                         # [Bt, 1, T]   key mask (T in lanes)
    mc = mc_ref[...]                         # [Bt, T, 1]   track mask (T in sublanes)
    # hoisted once; reused by both SAB layers (head-batched key mask)
    mrh = jnp.concatenate([mr] * H, axis=0)  # [H*Bt, 1, T]

    def sab(x_in, wqkv, bqkv, wo, bo):
        Dm = x_in.shape[-1]
        # fused Q|K|V projection, rows merged over (Bt, T); 1/sqrt(F) folded into K weights.
        qkv = (jnp.dot(x_in.reshape(Bt * T, Dm).astype(cdt), wqkv,
                       preferred_element_type=f32)
               + bqkv).reshape(Bt, T, 3 * F)

        def heads(base):
            # regroup per-head lane slices into one head-batched tensor [H*Bt, T, dh]
            return jnp.concatenate(
                [qkv[:, :, base + h * dh: base + (h + 1) * dh] for h in range(H)],
                axis=0)

        q, k, v = heads(0), heads(F), heads(2 * F)          # f32, [H*Bt, T, dh]

        # one batched MXU push for all heads
        s = jnp.einsum('zqd,zkd->zqk', q.astype(cdt), k.astype(cdt),
                       preferred_element_type=f32)           # [H*Bt, T, T]
        s = jnp.where(mrh > 0.0, s, _NEG)                    # mask keys BEFORE the max
        mx = jnp.max(s, axis=-1, keepdims=True)
        p = jnp.exp(s - mx)                                  # masked keys underflow to 0
        dem = jnp.sum(p, axis=-1, keepdims=True)             # [H*Bt, T, 1]
        pv = jnp.einsum('zqk,zkd->zqd', p.astype(cdt), v.astype(cdt),
                        preferred_element_type=f32)          # [H*Bt, T, dh]
        # deferred softmax normalization (scale the small PV result, not the T*T probs)
        o = q + pv * pl.reciprocal(dem + 1e-16, approx=True)
        # back to [Bt, T, F] with head-major feature layout
        o = jnp.concatenate([o[h * Bt:(h + 1) * Bt] for h in range(H)], axis=-1)
        ff = (jnp.dot(o.reshape(Bt * T, F).astype(cdt), wo,
                      preferred_element_type=f32)
              + bo).reshape(Bt, T, F)
        # module applies `* mask.unsqueeze(-1)` right after each SAB; fused here.
        return (o + jax.nn.relu(ff)) * mc

    xp = sab(x, wqkv1_ref[...], bqkv1_ref[...], wo1_ref[...], bo1_ref[...])
    xp = sab(xp, wqkv2_ref[...], bqkv2_ref[...], wo2_ref[...], bo2_ref[...])

    # transform_in + mask
    xpt = ((jnp.dot(xp.reshape(Bt * T, F).astype(cdt), wti_ref[...],
                    preferred_element_type=f32)
            + bti_ref[...]).reshape(Bt, T, F)) * mc                     # [Bt, T, F]

    # aggregator_score + masked softmax over the track axis (dim=1)
    score = (jnp.dot(xpt.reshape(Bt * T, F).astype(cdt), wsc_ref[...],
                     preferred_element_type=f32)
             + bsc_ref[...]).reshape(Bt, T, A)
    score_m = jnp.where(mc > 0.0, score, _NEG)                          # robust masked max
    mx = jnp.max(score_m, axis=1, keepdims=True)                        # [Bt, 1, A]
    num = jnp.exp(score_m - mx) * mc                                    # exact zeros on pads
    dem = jnp.sum(num, axis=1, keepdims=True)                           # [Bt, 1, A]
    att = num / (dem + 1e-16)                                           # [Bt, T, A] (exact div)

    n_tracks = jnp.maximum(jnp.sum(mc, axis=1, keepdims=True), 1.0)     # [Bt, 1, 1]

    # masked max-pool over tracks of edges[b,t,a,f] = Xp[b,t,f] * att[b,t,a]
    e = jnp.where(mc[:, :, :, None] > 0.0,
                  xpt[:, :, None, :] * att[:, :, :, None], _NEG)        # [Bt, T, A, F]
    max_pooled = jnp.max(e, axis=1)                                     # [Bt, A, F]

    # mean-pool as an MXU contraction over the track axis (padded tracks contribute 0)
    att_t = jnp.swapaxes(att, 1, 2)                                     # [Bt, A, T]
    mean_pooled = jnp.einsum('bat,btf->baf', att_t.astype(cdt), xpt.astype(cdt),
                             preferred_element_type=f32) / n_tracks     # [Bt, A, F]

    # torch layout: cat((max, mean), -1) over [B, A, F] then flatten -> per-a [max|mean]
    agg = jnp.concatenate([max_pooled, mean_pooled], axis=-1).reshape(Bt, 2 * A * F)
    agg_ref[...] = agg.astype(agg_ref.dtype)

    # transform_out applied to cat(X, Xp, agg_repeated) == split-weight matmuls
    h = (jnp.dot(x.reshape(Bt * T, Din).astype(cdt), w1_ref[...],
                 preferred_element_type=f32)
         + jnp.dot(xpt.reshape(Bt * T, F).astype(cdt), w2_ref[...],
                   preferred_element_type=f32)
         + bout_ref[...]).reshape(Bt, T, F)
    h = h + jnp.dot(agg.astype(cdt), w3_ref[...],
                    preferred_element_type=f32)[:, None, :]
    out = jax.nn.relu(h) * mc                   # hidden_activation = ReLU, then mask
    out_ref[...] = out.reshape(Bt, T * F).astype(out_ref.dtype)         # lane-dense store


# ----------------------------------------------------------------------------
# Wrapper: weight fusion, bf16 cast, batch blocking, single pallas_call.
# ----------------------------------------------------------------------------
def bipartite_forward(X, mask, params, num_heads, n_aggregators,
                      bt_max=32, mxu_dtype=jnp.bfloat16):
    B, T, Din = X.shape
    F = params['wti'].shape[1]
    A = n_aggregators
    AGG = 2 * F * A
    scale = 1.0 / math.sqrt(F)
    f32 = jnp.float32

    def wcast(w):
        return w.astype(mxu_dtype)

    def bcast(b):
        return b.astype(f32)

    def fuse_qkv(wq, bq, wk, bk, wv, bv):
        # Fold the attention scale into the K projection (the Q residual must stay unscaled).
        return (wcast(jnp.concatenate([wq, wk * scale, wv], axis=1)),
                bcast(jnp.concatenate([bq, bk * scale, bv], axis=1)))

    wqkv1, bqkv1 = fuse_qkv(params['sab1_wq'], params['sab1_bq'],
                            params['sab1_wk'], params['sab1_bk'],
                            params['sab1_wv'], params['sab1_bv'])
    wqkv2, bqkv2 = fuse_qkv(params['sab2_wq'], params['sab2_bq'],
                            params['sab2_wk'], params['sab2_bk'],
                            params['sab2_wv'], params['sab2_bv'])

    mask_row = mask.astype(X.dtype)[:, None, :]      # [B, 1, T]
    mask_col = mask.astype(X.dtype)[:, :, None]      # [B, T, 1]

    # Batch blocking: Bt minibatches per grid step; try to give the grid >=2 steps
    # (v7x dual TensorCore) while keeping Bt a sublane multiple and within VMEM budget.
    if B <= 8:
        Bt = B
    else:
        bt_cap = max(8, (bt_max // 8) * 8)
        Bt = min(bt_cap, 8 * ((B + 15) // 16))
    Bpad = ((B + Bt - 1) // Bt) * Bt
    if Bpad != B:
        # padded minibatches have an all-zero mask; all math stays finite and those
        # rows are sliced off below (keep that invariant).
        X = jnp.pad(X, ((0, Bpad - B), (0, 0), (0, 0)))
        mask_row = jnp.pad(mask_row, ((0, Bpad - B), (0, 0), (0, 0)))
        mask_col = jnp.pad(mask_col, ((0, Bpad - B), (0, 0), (0, 0)))

    weights = (wqkv1, bqkv1, wcast(params['sab1_wo']), bcast(params['sab1_bo']),
               wqkv2, bqkv2, wcast(params['sab2_wo']), bcast(params['sab2_bo']),
               wcast(params['wti']), bcast(params['bti']),
               wcast(params['wsc']), bcast(params['bsc']),
               wcast(params['w1']), wcast(params['w2']), wcast(params['w3']),
               bcast(params['bout']))

    def full_spec(arr):
        nd = arr.ndim
        return pl.BlockSpec(arr.shape, lambda b, nd=nd: (0,) * nd)

    # Explicit scoped-VMEM limit sized to the chip (default is 16/32 MiB).
    try:
        vmem_cap = int(pltpu.get_tpu_info().vmem_capacity_bytes)
        if vmem_cap <= 0:
            raise ValueError("bad vmem capacity")
    except Exception:
        vmem_cap = 64 * 1024 * 1024
    vmem_limit = max(32 * 1024 * 1024, min(int(vmem_cap * 0.8), 100 * 1024 * 1024))

    out_flat, agg = pl.pallas_call(
        partial(_fused_kernel, num_heads=num_heads, n_aggregators=A),
        out_shape=(jax.ShapeDtypeStruct((Bpad, T * F), X.dtype),
                   jax.ShapeDtypeStruct((Bpad, AGG), X.dtype)),
        grid=(Bpad // Bt,),
        in_specs=[pl.BlockSpec((Bt, T, Din), lambda b: (b, 0, 0)),
                  pl.BlockSpec((Bt, 1, T), lambda b: (b, 0, 0)),
                  pl.BlockSpec((Bt, T, 1), lambda b: (b, 0, 0))]
                 + [full_spec(w) for w in weights],
        out_specs=(pl.BlockSpec((Bt, T * F), lambda b: (b, 0)),
                   pl.BlockSpec((Bt, AGG), lambda b: (b, 0))),
        compiler_params=pltpu.CompilerParams(
            dimension_semantics=("parallel",),
            vmem_limit_bytes=vmem_limit),
    )(X, mask_row, mask_col, *weights)

    return out_flat[:B].reshape(B, T, F), agg[:B]


# ----------------------------------------------------------------------------
# Parameter init (deterministic, synthetic).
# ----------------------------------------------------------------------------
def _linear_params(key, din, dout):
    kw, kb = jax.random.split(key)
    w = jax.random.normal(kw, (din, dout), jnp.float32) * (1.0 / math.sqrt(din))
    b = jax.random.normal(kb, (1, dout), jnp.float32) * 0.01
    return w, b


def init_params(key, input_dim, feature_dim, n_aggregators):
    ks = jax.random.split(key, 12)
    p = {}
    # Masked_SAB 1: input_dim -> feature_dim
    p['sab1_wq'], p['sab1_bq'] = _linear_params(ks[0], input_dim, feature_dim)
    p['sab1_wk'], p['sab1_bk'] = _linear_params(ks[1], input_dim, feature_dim)
    p['sab1_wv'], p['sab1_bv'] = _linear_params(ks[2], input_dim, feature_dim)
    p['sab1_wo'], p['sab1_bo'] = _linear_params(ks[3], feature_dim, feature_dim)
    # Masked_SAB 2: feature_dim -> feature_dim
    p['sab2_wq'], p['sab2_bq'] = _linear_params(ks[4], feature_dim, feature_dim)
    p['sab2_wk'], p['sab2_bk'] = _linear_params(ks[5], feature_dim, feature_dim)
    p['sab2_wv'], p['sab2_bv'] = _linear_params(ks[6], feature_dim, feature_dim)
    p['sab2_wo'], p['sab2_bo'] = _linear_params(ks[7], feature_dim, feature_dim)
    # transform_in, aggregator_score
    p['wti'], p['bti'] = _linear_params(ks[8], feature_dim, feature_dim)
    p['wsc'], p['bsc'] = _linear_params(ks[9], feature_dim, n_aggregators)
    # transform_out: Linear(Din + F + 2*F*A, F), split along the concat axis (X | Xp | agg)
    h_dim = input_dim + feature_dim + 2 * feature_dim * n_aggregators
    wout, bout = _linear_params(ks[10], h_dim, feature_dim)
    p['w1'] = wout[:input_dim]                               # acts on X
    p['w2'] = wout[input_dim:input_dim + feature_dim]        # acts on Xp
    p['w3'] = wout[input_dim + feature_dim:]                 # acts on aggregator
    p['bout'] = bout
    return p


if __name__ == "__main__":
    B, T = 2, 8
    input_dim, feature_dim, n_aggregators, num_heads = 4, 32, 4, 4

    key = jax.random.PRNGKey(0)
    kx, km, kp = jax.random.split(key, 3)
    X = jax.random.normal(kx, (B, T, input_dim), jnp.float32)
    mask = (jax.random.uniform(km, (B, T)) > 0.3).astype(jnp.float32)
    mask = mask.at[:, 0].set(1.0)   # at least one valid track per minibatch

    params = init_params(kp, input_dim, feature_dim, n_aggregators)

    out, agg = bipartite_forward(X, mask, params, num_heads, n_aggregators)
    out = jax.block_until_ready(out)
    agg = jax.block_until_ready(agg)

    assert out.shape == (B, T, feature_dim)
    assert agg.shape == (B, 2 * feature_dim * n_aggregators)
    assert bool(jnp.all(jnp.isfinite(out))) and bool(jnp.all(jnp.isfinite(agg)))
    print("KERNEL_OK")
</pallas_src>

<mosaic_0001>
module attributes {stable_mosaic.version = 11 : i64} {
  func.func @_fused_kernel(%arg0: i32, %arg1: memref<2x8x4xf32, #tpu.memory_space<vmem>>, %arg2: memref<2x1x8xf32, #tpu.memory_space<vmem>>, %arg3: memref<2x8x1xf32, #tpu.memory_space<vmem>>, %arg4: memref<4x96xbf16, #tpu.memory_space<vmem>>, %arg5: memref<1x96xf32, #tpu.memory_space<vmem>>, %arg6: memref<32x32xbf16, #tpu.memory_space<vmem>>, %arg7: memref<1x32xf32, #tpu.memory_space<vmem>>, %arg8: memref<32x96xbf16, #tpu.memory_space<vmem>>, %arg9: memref<1x96xf32, #tpu.memory_space<vmem>>, %arg10: memref<32x32xbf16, #tpu.memory_space<vmem>>, %arg11: memref<1x32xf32, #tpu.memory_space<vmem>>, %arg12: memref<32x32xbf16, #tpu.memory_space<vmem>>, %arg13: memref<1x32xf32, #tpu.memory_space<vmem>>, %arg14: memref<32x4xbf16, #tpu.memory_space<vmem>>, %arg15: memref<1x4xf32, #tpu.memory_space<vmem>>, %arg16: memref<4x32xbf16, #tpu.memory_space<vmem>>, %arg17: memref<32x32xbf16, #tpu.memory_space<vmem>>, %arg18: memref<256x32xbf16, #tpu.memory_space<vmem>>, %arg19: memref<1x32xf32, #tpu.memory_space<vmem>>, %arg20: memref<2x256xf32, #tpu.memory_space<vmem>>, %arg21: memref<2x256xf32, #tpu.memory_space<vmem>>) attributes {dimension_semantics = [#tpu.dimension_semantics<parallel>], iteration_bounds = array<i64: 1>, scalar_prefetch = 0 : i64, scratch_operands = 0 : i64, tpu.core_type = #tpu.core_type<tc>, window_params = [{transform_indices = @transform_0, window_bounds = array<i64: 2, 8, 4>}, {transform_indices = @transform_1, window_bounds = array<i64: 2, 1, 8>}, {transform_indices = @transform_2, window_bounds = array<i64: 2, 8, 1>}, {pipeline_mode = #tpu.pipeline_mode<synchronous>, transform_indices = @transform_3, window_bounds = array<i64: 4, 96>}, {pipeline_mode = #tpu.pipeline_mode<synchronous>, transform_indices = @transform_4, window_bounds = array<i64: 1, 96>}, {pipeline_mode = #tpu.pipeline_mode<synchronous>, transform_indices = @transform_5, window_bounds = array<i64: 32, 32>}, {pipeline_mode = #tpu.pipeline_mode<synchronous>, transform_indices = @transform_6, window_bounds = array<i64: 1, 32>}, {pipeline_mode = #tpu.pipeline_mode<synchronous>, transform_indices = @transform_7, window_bounds = array<i64: 32, 96>}, {pipeline_mode = #tpu.pipeline_mode<synchronous>, transform_indices = @transform_8, window_bounds = array<i64: 1, 96>}, {pipeline_mode = #tpu.pipeline_mode<synchronous>, transform_indices = @transform_9, window_bounds = array<i64: 32, 32>}, {pipeline_mode = #tpu.pipeline_mode<synchronous>, transform_indices = @transform_10, window_bounds = array<i64: 1, 32>}, {pipeline_mode = #tpu.pipeline_mode<synchronous>, transform_indices = @transform_11, window_bounds = array<i64: 32, 32>}, {pipeline_mode = #tpu.pipeline_mode<synchronous>, transform_indices = @transform_12, window_bounds = array<i64: 1, 32>}, {pipeline_mode = #tpu.pipeline_mode<synchronous>, transform_indices = @transform_13, window_bounds = array<i64: 32, 4>}, {pipeline_mode = #tpu.pipeline_mode<synchronous>, transform_indices = @transform_14, window_bounds = array<i64: 1, 4>}, {pipeline_mode = #tpu.pipeline_mode<synchronous>, transform_indices = @transform_15, window_bounds = array<i64: 4, 32>}, {pipeline_mode = #tpu.pipeline_mode<synchronous>, transform_indices = @transform_16, window_bounds = array<i64: 32, 32>}, {pipeline_mode = #tpu.pipeline_mode<synchronous>, transform_indices = @transform_17, window_bounds = array<i64: 256, 32>}, {pipeline_mode = #tpu.pipeline_mode<synchronous>, transform_indices = @transform_18, window_bounds = array<i64: 1, 32>}, {transform_indices = @transform_19, window_bounds = array<i64: 2, 256>}, {transform_indices = @transform_20, window_bounds = array<i64: 2, 256>}]} {
    %c0 = arith.constant 0 : index
    %c0_0 = arith.constant 0 : index
    %c0_1 = arith.constant 0 : index
    %0 = vector.load %arg1[%c0, %c0_0, %c0_1] : memref<2x8x4xf32, #tpu.memory_space<vmem>>, vector<2x8x4xf32>
    %c0_2 = arith.constant 0 : index
    %c0_3 = arith.constant 0 : index
    %c0_4 = arith.constant 0 : index
    %1 = vector.load %arg2[%c0_2, %c0_3, %c0_4] : memref<2x1x8xf32, #tpu.memory_space<vmem>>, vector<2x1x8xf32>
    %c0_5 = arith.constant 0 : index
    %c0_6 = arith.constant 0 : index
    %c0_7 = arith.constant 0 : index
    %2 = vector.load %arg3[%c0_5, %c0_6, %c0_7] : memref<2x8x1xf32, #tpu.memory_space<vmem>>, vector<2x8x1xf32>
    %3 = tpu.concatenate %1, %1, %1, %1 in 0 : vector<2x1x8xf32>, vector<2x1x8xf32>, vector<2x1x8xf32>, vector<2x1x8xf32> -> vector<8x1x8xf32>
    %c0_8 = arith.constant 0 : index
    %c0_9 = arith.constant 0 : index
    %4 = vector.load %arg4[%c0_8, %c0_9] : memref<4x96xbf16, #tpu.memory_space<vmem>>, vector<4x96xbf16>
    %c0_10 = arith.constant 0 : index
    %c0_11 = arith.constant 0 : index
    %5 = vector.load %arg5[%c0_10, %c0_11] : memref<1x96xf32, #tpu.memory_space<vmem>>, vector<1x96xf32>
    %c0_12 = arith.constant 0 : index
    %c0_13 = arith.constant 0 : index
    %6 = vector.load %arg6[%c0_12, %c0_13] : memref<32x32xbf16, #tpu.memory_space<vmem>>, vector<32x32xbf16>
    %c0_14 = arith.constant 0 : index
    %c0_15 = arith.constant 0 : index
    %7 = vector.load %arg7[%c0_14, %c0_15] : memref<1x32xf32, #tpu.memory_space<vmem>>, vector<1x32xf32>
    %8 = vector.shape_cast %0 : vector<2x8x4xf32> to vector<16x4xf32>
    %9 = arith.truncf %8 : vector<16x4xf32> to vector<16x4xbf16>
    %cst = arith.constant dense<0.000000e+00> : vector<16x96xf32>
    %10 = tpu.matmul %9, %4, %cst {dimension_numbers = #tpu.dot_dimension_numbers<[1], [0], [0], [1], [0, 0, 1, 1], [], []>} : vector<16x4xbf16>, vector<4x96xbf16>, vector<16x96xf32> -> vector<16x96xf32>
    %11 = vector.broadcast %5 : vector<1x96xf32> to vector<16x96xf32>
    %12 = arith.addf %10, %11 : vector<16x96xf32>
    %13 = vector.shape_cast %12 : vector<16x96xf32> to vector<2x8x96xf32>
    %14 = vector.extract_strided_slice %13 {offsets = [0, 0, 0], sizes = [2, 8, 8], strides = [1, 1, 1]} : vector<2x8x96xf32> to vector<2x8x8xf32>
    %15 = vector.extract_strided_slice %13 {offsets = [0, 0, 8], sizes = [2, 8, 8], strides = [1, 1, 1]} : vector<2x8x96xf32> to vector<2x8x8xf32>
    %16 = vector.extract_strided_slice %13 {offsets = [0, 0, 16], sizes = [2, 8, 8], strides = [1, 1, 1]} : vector<2x8x96xf32> to vector<2x8x8xf32>
    %17 = vector.extract_strided_slice %13 {offsets = [0, 0, 24], sizes = [2, 8, 8], strides = [1, 1, 1]} : vector<2x8x96xf32> to vector<2x8x8xf32>
    %18 = tpu.concatenate %14, %15, %16, %17 in 0 : vector<2x8x8xf32>, vector<2x8x8xf32>, vector<2x8x8xf32>, vector<2x8x8xf32> -> vector<8x8x8xf32>
    %19 = vector.extract_strided_slice %13 {offsets = [0, 0, 32], sizes = [2, 8, 8], strides = [1, 1, 1]} : vector<2x8x96xf32> to vector<2x8x8xf32>
    %20 = vector.extract_strided_slice %13 {offsets = [0, 0, 40], sizes = [2, 8, 8], strides = [1, 1, 1]} : vector<2x8x96xf32> to vector<2x8x8xf32>
    %21 = vector.extract_strided_slice %13 {offsets = [0, 0, 48], sizes = [2, 8, 8], strides = [1, 1, 1]} : vector<2x8x96xf32> to vector<2x8x8xf32>
    %22 = vector.extract_strided_slice %13 {offsets = [0, 0, 56], sizes = [2, 8, 8], strides = [1, 1, 1]} : vector<2x8x96xf32> to vector<2x8x8xf32>
    %23 = tpu.concatenate %19, %20, %21, %22 in 0 : vector<2x8x8xf32>, vector<2x8x8xf32>, vector<2x8x8xf32>, vector<2x8x8xf32> -> vector<8x8x8xf32>
    %24 = vector.extract_strided_slice %13 {offsets = [0, 0, 64], sizes = [2, 8, 8], strides = [1, 1, 1]} : vector<2x8x96xf32> to vector<2x8x8xf32>
    %25 = vector.extract_strided_slice %13 {offsets = [0, 0, 72], sizes = [2, 8, 8], strides = [1, 1, 1]} : vector<2x8x96xf32> to vector<2x8x8xf32>
    %26 = vector.extract_strided_slice %13 {offsets = [0, 0, 80], sizes = [2, 8, 8], strides = [1, 1, 1]} : vector<2x8x96xf32> to vector<2x8x8xf32>
    %27 = vector.extract_strided_slice %13 {offsets = [0, 0, 88], sizes = [2, 8, 8], strides = [1, 1, 1]} : vector<2x8x96xf32> to vector<2x8x8xf32>
    %28 = tpu.concatenate %24, %25, %26, %27 in 0 : vector<2x8x8xf32>, vector<2x8x8xf32>, vector<2x8x8xf32>, vector<2x8x8xf32> -> vector<8x8x8xf32>
    %29 = arith.truncf %18 : vector<8x8x8xf32> to vector<8x8x8xbf16>
    %30 = arith.truncf %23 : vector<8x8x8xf32> to vector<8x8x8xbf16>
    "tpu.trace_start"() <{level = 10 : i32, message = "zqd,zkd->zqk"}> : () -> ()
    %cst_16 = arith.constant dense<0.000000e+00> : vector<8x8x8xf32>
    %31 = tpu.matmul %29, %30, %cst_16 {dimension_numbers = #tpu.dot_dimension_numbers<[2], [2], [1], [1], [0, 0, 0, 1, 1, 1], [0], [0]>} : vector<8x8x8xbf16>, vector<8x8x8xbf16>, vector<8x8x8xf32> -> vector<8x8x8xf32>
    %cst_17 = arith.constant 0.000000e+00 : f32
    "tpu.trace_stop"() : () -> ()
    %32 = vector.broadcast %cst_17 : f32 to vector<8x1x8xf32>
    %33 = arith.cmpf ogt, %3, %32 : vector<8x1x8xf32>
    %cst_18 = arith.constant -1.000000e+30 : f32
    %34 = vector.shape_cast %33 : vector<8x1x8xi1> to vector<8x1x8xi1>
    %35 = vector.broadcast %34 : vector<8x1x8xi1> to vector<8x8x8xi1>
    %36 = vector.broadcast %cst_18 : f32 to vector<8x8x8xf32>
    %37 = arith.select %35, %31, %36 : vector<8x8x8xi1>, vector<8x8x8xf32>
    %cst_19 = arith.constant dense<0xFF800000> : vector<8x8xf32>
    %38 = vector.multi_reduction <maximumf>, %37, %cst_19 [2] : vector<8x8x8xf32> to vector<8x8xf32>
    %39 = vector.shape_cast %38 : vector<8x8xf32> to vector<8x8x1xf32>
    %40 = vector.broadcast %39 : vector<8x8x1xf32> to vector<8x8x8xf32>
    %41 = arith.subf %37, %40 : vector<8x8x8xf32>
    %42 = math.exp %41 : vector<8x8x8xf32>
    %cst_20 = arith.constant dense<0.000000e+00> : vector<8x8xf32>
    %43 = vector.multi_reduction <add>, %42, %cst_20 [2] : vector<8x8x8xf32> to vector<8x8xf32>
    %44 = vector.shape_cast %43 : vector<8x8xf32> to vector<8x8x1xf32>
    %45 = arith.truncf %42 : vector<8x8x8xf32> to vector<8x8x8xbf16>
    %46 = arith.truncf %28 : vector<8x8x8xf32> to vector<8x8x8xbf16>
    "tpu.trace_start"() <{level = 10 : i32, message = "zqk,zkd->zqd"}> : () -> ()
    %cst_21 = arith.constant dense<0.000000e+00> : vector<8x8x8xf32>
    %47 = tpu.matmul %45, %46, %cst_21 {dimension_numbers = #tpu.dot_dimension_numbers<[2], [1], [1], [2], [0, 0, 0, 1, 1, 2], [0], [0]>} : vector<8x8x8xbf16>, vector<8x8x8xbf16>, vector<8x8x8xf32> -> vector<8x8x8xf32>
    "tpu.trace_stop"() : () -> ()
    %cst_22 = arith.constant 1.000000e-16 : f32
    %48 = vector.broadcast %cst_22 : f32 to vector<8x8x1xf32>
    %49 = arith.addf %44, %48 : vector<8x8x1xf32>
    %50 = tpu.reciprocal %49 {approx = true} : vector<8x8x1xf32> -> vector<8x8x1xf32>
    %51 = vector.broadcast %50 : vector<8x8x1xf32> to vector<8x8x8xf32>
    %52 = arith.mulf %47, %51 : vector<8x8x8xf32>
    %53 = arith.addf %18, %52 : vector<8x8x8xf32>
    %54 = vector.extract_strided_slice %53 {offsets = [0, 0, 0], sizes = [2, 8, 8], strides = [1, 1, 1]} : vector<8x8x8xf32> to vector<2x8x8xf32>
    %55 = vector.extract_strided_slice %53 {offsets = [2, 0, 0], sizes = [2, 8, 8], strides = [1, 1, 1]} : vector<8x8x8xf32> to vector<2x8x8xf32>
    %56 = vector.extract_strided_slice %53 {offsets = [4, 0, 0], sizes = [2, 8, 8], strides = [1, 1, 1]} : vector<8x8x8xf32> to vector<2x8x8xf32>
    %57 = vector.extract_strided_slice %53 {offsets = [6, 0, 0], sizes = [2, 8, 8], strides = [1, 1, 1]} : vector<8x8x8xf32> to vector<2x8x8xf32>
    %58 = tpu.concatenate %54, %55, %56, %57 in 2 : vector<2x8x8xf32>, vector<2x8x8xf32>, vector<2x8x8xf32>, vector<2x8x8xf32> -> vector<2x8x32xf32>
    %59 = vector.shape_cast %58 : vector<2x8x32xf32> to vector<16x32xf32>
    %60 = arith.truncf %59 : vector<16x32xf32> to vector<16x32xbf16>
    %cst_23 = arith.constant dense<0.000000e+00> : vector<16x32xf32>
    %61 = tpu.matmul %60, %6, %cst_23 {dimension_numbers = #tpu.dot_dimension_numbers<[1], [0], [0], [1], [0, 0, 1, 1], [], []>} : vector<16x32xbf16>, vector<32x32xbf16>, vector<16x32xf32> -> vector<16x32xf32>
    %62 = vector.broadcast %7 : vector<1x32xf32> to vector<16x32xf32>
    %63 = arith.addf %61, %62 : vector<16x32xf32>
    %64 = vector.shape_cast %63 : vector<16x32xf32> to vector<2x8x32xf32>
    %cst_24 = arith.constant 0.000000e+00 : f32
    %65 = vector.broadcast %cst_24 : f32 to vector<2x8x32xf32>
    %66 = arith.maximumf %64, %65 : vector<2x8x32xf32>
    %67 = arith.addf %58, %66 : vector<2x8x32xf32>
    %68 = vector.broadcast %2 : vector<2x8x1xf32> to vector<2x8x32xf32>
    %69 = arith.mulf %67, %68 : vector<2x8x32xf32>
    %c0_25 = arith.constant 0 : index
    %c0_26 = arith.constant 0 : index
    %70 = vector.load %arg8[%c0_25, %c0_26] : memref<32x96xbf16, #tpu.memory_space<vmem>>, vector<32x96xbf16>
    %c0_27 = arith.constant 0 : index
    %c0_28 = arith.constant 0 : index
    %71 = vector.load %arg9[%c0_27, %c0_28] : memref<1x96xf32, #tpu.memory_space<vmem>>, vector<1x96xf32>
    %c0_29 = arith.constant 0 : index
    %c0_30 = arith.constant 0 : index
    %72 = vector.load %arg10[%c0_29, %c0_30] : memref<32x32xbf16, #tpu.memory_space<vmem>>, vector<32x32xbf16>
    %c0_31 = arith.constant 0 : index
    %c0_32 = arith.constant 0 : index
    %73 = vector.load %arg11[%c0_31, %c0_32] : memref<1x32xf32, #tpu.memory_space<vmem>>, vector<1x32xf32>
    %74 = vector.shape_cast %69 : vector<2x8x32xf32> to vector<16x32xf32>
    %75 = arith.truncf %74 : vector<16x32xf32> to vector<16x32xbf16>
    %cst_33 = arith.constant dense<0.000000e+00> : vector<16x96xf32>
    %76 = tpu.matmul %75, %70, %cst_33 {dimension_numbers = #tpu.dot_dimension_numbers<[1], [0], [0], [1], [0, 0, 1, 1], [], []>} : vector<16x32xbf16>, vector<32x96xbf16>, vector<16x96xf32> -> vector<16x96xf32>
    %77 = vector.broadcast %71 : vector<1x96xf32> to vector<16x96xf32>
    %78 = arith.addf %76, %77 : vector<16x96xf32>
    %79 = vector.shape_cast %78 : vector<16x96xf32> to vector<2x8x96xf32>
    %80 = vector.extract_strided_slice %79 {offsets = [0, 0, 0], sizes = [2, 8, 8], strides = [1, 1, 1]} : vector<2x8x96xf32> to vector<2x8x8xf32>
    %81 = vector.extract_strided_slice %79 {offsets = [0, 0, 8], sizes = [2, 8, 8], strides = [1, 1, 1]} : vector<2x8x96xf32> to vector<2x8x8xf32>
    %82 = vector.extract_strided_slice %79 {offsets = [0, 0, 16], sizes = [2, 8, 8], strides = [1, 1, 1]} : vector<2x8x96xf32> to vector<2x8x8xf32>
    %83 = vector.extract_strided_slice %79 {offsets = [0, 0, 24], sizes = [2, 8, 8], strides = [1, 1, 1]} : vector<2x8x96xf32> to vector<2x8x8xf32>
    %84 = tpu.concatenate %80, %81, %82, %83 in 0 : vector<2x8x8xf32>, vector<2x8x8xf32>, vector<2x8x8xf32>, vector<2x8x8xf32> -> vector<8x8x8xf32>
    %85 = vector.extract_strided_slice %79 {offsets = [0, 0, 32], sizes = [2, 8, 8], strides = [1, 1, 1]} : vector<2x8x96xf32> to vector<2x8x8xf32>
    %86 = vector.extract_strided_slice %79 {offsets = [0, 0, 40], sizes = [2, 8, 8], strides = [1, 1, 1]} : vector<2x8x96xf32> to vector<2x8x8xf32>
    %87 = vector.extract_strided_slice %79 {offsets = [0, 0, 48], sizes = [2, 8, 8], strides = [1, 1, 1]} : vector<2x8x96xf32> to vector<2x8x8xf32>
    %88 = vector.extract_strided_slice %79 {offsets = [0, 0, 56], sizes = [2, 8, 8], strides = [1, 1, 1]} : vector<2x8x96xf32> to vector<2x8x8xf32>
    %89 = tpu.concatenate %85, %86, %87, %88 in 0 : vector<2x8x8xf32>, vector<2x8x8xf32>, vector<2x8x8xf32>, vector<2x8x8xf32> -> vector<8x8x8xf32>
    %90 = vector.extract_strided_slice %79 {offsets = [0, 0, 64], sizes = [2, 8, 8], strides = [1, 1, 1]} : vector<2x8x96xf32> to vector<2x8x8xf32>
    %91 = vector.extract_strided_slice %79 {offsets = [0, 0, 72], sizes = [2, 8, 8], strides = [1, 1, 1]} : vector<2x8x96xf32> to vector<2x8x8xf32>
    %92 = vector.extract_strided_slice %79 {offsets = [0, 0, 80], sizes = [2, 8, 8], strides = [1, 1, 1]} : vector<2x8x96xf32> to vector<2x8x8xf32>
    %93 = vector.extract_strided_slice %79 {offsets = [0, 0, 88], sizes = [2, 8, 8], strides = [1, 1, 1]} : vector<2x8x96xf32> to vector<2x8x8xf32>
    %94 = tpu.concatenate %90, %91, %92, %93 in 0 : vector<2x8x8xf32>, vector<2x8x8xf32>, vector<2x8x8xf32>, vector<2x8x8xf32> -> vector<8x8x8xf32>
    %95 = arith.truncf %84 : vector<8x8x8xf32> to vector<8x8x8xbf16>
    %96 = arith.truncf %89 : vector<8x8x8xf32> to vector<8x8x8xbf16>
    "tpu.trace_start"() <{level = 10 : i32, message = "zqd,zkd->zqk"}> : () -> ()
    %cst_34 = arith.constant dense<0.000000e+00> : vector<8x8x8xf32>
    %97 = tpu.matmul %95, %96, %cst_34 {dimension_numbers = #tpu.dot_dimension_numbers<[2], [2], [1], [1], [0, 0, 0, 1, 1, 1], [0], [0]>} : vector<8x8x8xbf16>, vector<8x8x8xbf16>, vector<8x8x8xf32> -> vector<8x8x8xf32>
    %cst_35 = arith.constant 0.000000e+00 : f32
    "tpu.trace_stop"() : () -> ()
    %98 = vector.broadcast %cst_35 : f32 to vector<8x1x8xf32>
    %99 = arith.cmpf ogt, %3, %98 : vector<8x1x8xf32>
    %cst_36 = arith.constant -1.000000e+30 : f32
    %100 = vector.shape_cast %99 : vector<8x1x8xi1> to vector<8x1x8xi1>
    %101 = vector.broadcast %100 : vector<8x1x8xi1> to vector<8x8x8xi1>
    %102 = vector.broadcast %cst_36 : f32 to vector<8x8x8xf32>
    %103 = arith.select %101, %97, %102 : vector<8x8x8xi1>, vector<8x8x8xf32>
    %cst_37 = arith.constant dense<0xFF800000> : vector<8x8xf32>
    %104 = vector.multi_reduction <maximumf>, %103, %cst_37 [2] : vector<8x8x8xf32> to vector<8x8xf32>
    %105 = vector.shape_cast %104 : vector<8x8xf32> to vector<8x8x1xf32>
    %106 = vector.broadcast %105 : vector<8x8x1xf32> to vector<8x8x8xf32>
    %107 = arith.subf %103, %106 : vector<8x8x8xf32>
    %108 = math.exp %107 : vector<8x8x8xf32>
    %cst_38 = arith.constant dense<0.000000e+00> : vector<8x8xf32>
    %109 = vector.multi_reduction <add>, %108, %cst_38 [2] : vector<8x8x8xf32> to vector<8x8xf32>
    %110 = vector.shape_cast %109 : vector<8x8xf32> to vector<8x8x1xf32>
    %111 = arith.truncf %108 : vector<8x8x8xf32> to vector<8x8x8xbf16>
    %112 = arith.truncf %94 : vector<8x8x8xf32> to vector<8x8x8xbf16>
    "tpu.trace_start"() <{level = 10 : i32, message = "zqk,zkd->zqd"}> : () -> ()
    %cst_39 = arith.constant dense<0.000000e+00> : vector<8x8x8xf32>
    %113 = tpu.matmul %111, %112, %cst_39 {dimension_numbers = #tpu.dot_dimension_numbers<[2], [1], [1], [2], [0, 0, 0, 1, 1, 2], [0], [0]>} : vector<8x8x8xbf16>, vector<8x8x8xbf16>, vector<8x8x8xf32> -> vector<8x8x8xf32>
    "tpu.trace_stop"() : () -> ()
    %cst_40 = arith.constant 1.000000e-16 : f32
    %114 = vector.broadcast %cst_40 : f32 to vector<8x8x1xf32>
    %115 = arith.addf %110, %114 : vector<8x8x1xf32>
    %116 = tpu.reciprocal %115 {approx = true} : vector<8x8x1xf32> -> vector<8x8x1xf32>
    %117 = vector.broadcast %116 : vector<8x8x1xf32> to vector<8x8x8xf32>
    %118 = arith.mulf %113, %117 : vector<8x8x8xf32>
    %119 = arith.addf %84, %118 : vector<8x8x8xf32>
    %120 = vector.extract_strided_slice %119 {offsets = [0, 0, 0], sizes = [2, 8, 8], strides = [1, 1, 1]} : vector<8x8x8xf32> to vector<2x8x8xf32>
    %121 = vector.extract_strided_slice %119 {offsets = [2, 0, 0], sizes = [2, 8, 8], strides = [1, 1, 1]} : vector<8x8x8xf32> to vector<2x8x8xf32>
    %122 = vector.extract_strided_slice %119 {offsets = [4, 0, 0], sizes = [2, 8, 8], strides = [1, 1, 1]} : vector<8x8x8xf32> to vector<2x8x8xf32>
    %123 = vector.extract_strided_slice %119 {offsets = [6, 0, 0], sizes = [2, 8, 8], strides = [1, 1, 1]} : vector<8x8x8xf32> to vector<2x8x8xf32>
    %124 = tpu.concatenate %120, %121, %122, %123 in 2 : vector<2x8x8xf32>, vector<2x8x8xf32>, vector<2x8x8xf32>, vector<2x8x8xf32> -> vector<2x8x32xf32>
    %125 = vector.shape_cast %124 : vector<2x8x32xf32> to vector<16x32xf32>
    %126 = arith.truncf %125 : vector<16x32xf32> to vector<16x32xbf16>
    %cst_41 = arith.constant dense<0.000000e+00> : vector<16x32xf32>
    %127 = tpu.matmul %126, %72, %cst_41 {dimension_numbers = #tpu.dot_dimension_numbers<[1], [0], [0], [1], [0, 0, 1, 1], [], []>} : vector<16x32xbf16>, vector<32x32xbf16>, vector<16x32xf32> -> vector<16x32xf32>
    %128 = vector.broadcast %73 : vector<1x32xf32> to vector<16x32xf32>
    %129 = arith.addf %127, %128 : vector<16x32xf32>
    %130 = vector.shape_cast %129 : vector<16x32xf32> to vector<2x8x32xf32>
    %cst_42 = arith.constant 0.000000e+00 : f32
    %131 = vector.broadcast %cst_42 : f32 to vector<2x8x32xf32>
    %132 = arith.maximumf %130, %131 : vector<2x8x32xf32>
    %133 = arith.addf %124, %132 : vector<2x8x32xf32>
    %134 = vector.broadcast %2 : vector<2x8x1xf32> to vector<2x8x32xf32>
    %135 = arith.mulf %133, %134 : vector<2x8x32xf32>
    %136 = vector.shape_cast %135 : vector<2x8x32xf32> to vector<16x32xf32>
    %137 = arith.truncf %136 : vector<16x32xf32> to vector<16x32xbf16>
    %c0_43 = arith.constant 0 : index
    %c0_44 = arith.constant 0 : index
    %138 = vector.load %arg12[%c0_43, %c0_44] : memref<32x32xbf16, #tpu.memory_space<vmem>>, vector<32x32xbf16>
    %cst_45 = arith.constant dense<0.000000e+00> : vector<16x32xf32>
    %139 = tpu.matmul %137, %138, %cst_45 {dimension_numbers = #tpu.dot_dimension_numbers<[1], [0], [0], [1], [0, 0, 1, 1], [], []>} : vector<16x32xbf16>, vector<32x32xbf16>, vector<16x32xf32> -> vector<16x32xf32>
    %c0_46 = arith.constant 0 : index
    %c0_47 = arith.constant 0 : index
    %140 = vector.load %arg13[%c0_46, %c0_47] : memref<1x32xf32, #tpu.memory_space<vmem>>, vector<1x32xf32>
    %141 = vector.broadcast %140 : vector<1x32xf32> to vector<16x32xf32>
    %142 = arith.addf %139, %141 : vector<16x32xf32>
    %143 = vector.shape_cast %142 : vector<16x32xf32> to vector<2x8x32xf32>
    %144 = vector.broadcast %2 : vector<2x8x1xf32> to vector<2x8x32xf32>
    %145 = arith.mulf %143, %144 : vector<2x8x32xf32>
    %146 = vector.shape_cast %145 : vector<2x8x32xf32> to vector<16x32xf32>
    %147 = arith.truncf %146 : vector<16x32xf32> to vector<16x32xbf16>
    %c0_48 = arith.constant 0 : index
    %c0_49 = arith.constant 0 : index
    %148 = vector.load %arg14[%c0_48, %c0_49] : memref<32x4xbf16, #tpu.memory_space<vmem>>, vector<32x4xbf16>
    %cst_50 = arith.constant dense<0.000000e+00> : vector<16x4xf32>
    %149 = tpu.matmul %147, %148, %cst_50 {dimension_numbers = #tpu.dot_dimension_numbers<[1], [0], [0], [1], [0, 0, 1, 1], [], []>} : vector<16x32xbf16>, vector<32x4xbf16>, vector<16x4xf32> -> vector<16x4xf32>
    %c0_51 = arith.constant 0 : index
    %c0_52 = arith.constant 0 : index
    %150 = vector.load %arg15[%c0_51, %c0_52] : memref<1x4xf32, #tpu.memory_space<vmem>>, vector<1x4xf32>
    %151 = vector.broadcast %150 : vector<1x4xf32> to vector<16x4xf32>
    %152 = arith.addf %149, %151 : vector<16x4xf32>
    %153 = vector.shape_cast %152 : vector<16x4xf32> to vector<2x8x4xf32>
    %cst_53 = arith.constant 0.000000e+00 : f32
    %154 = vector.broadcast %cst_53 : f32 to vector<2x8x1xf32>
    %155 = arith.cmpf ogt, %2, %154 : vector<2x8x1xf32>
    %cst_54 = arith.constant -1.000000e+30 : f32
    %156 = vector.shape_cast %155 : vector<2x8x1xi1> to vector<2x8x1xi1>
    %157 = vector.broadcast %156 : vector<2x8x1xi1> to vector<2x8x4xi1>
    %158 = vector.broadcast %cst_54 : f32 to vector<2x8x4xf32>
    %159 = arith.select %157, %153, %158 : vector<2x8x4xi1>, vector<2x8x4xf32>
    %cst_55 = arith.constant dense<0xFF800000> : vector<2x4xf32>
    %160 = vector.multi_reduction <maximumf>, %159, %cst_55 [1] : vector<2x8x4xf32> to vector<2x4xf32>
    %161 = vector.shape_cast %160 : vector<2x4xf32> to vector<2x1x4xf32>
    %162 = vector.broadcast %161 : vector<2x1x4xf32> to vector<2x8x4xf32>
    %163 = arith.subf %159, %162 : vector<2x8x4xf32>
    %164 = math.exp %163 : vector<2x8x4xf32>
    %165 = vector.broadcast %2 : vector<2x8x1xf32> to vector<2x8x4xf32>
    %166 = arith.mulf %164, %165 : vector<2x8x4xf32>
    %cst_56 = arith.constant dense<0.000000e+00> : vector<2x4xf32>
    %167 = vector.multi_reduction <add>, %166, %cst_56 [1] : vector<2x8x4xf32> to vector<2x4xf32>
    %168 = vector.shape_cast %167 : vector<2x4xf32> to vector<2x1x4xf32>
    %cst_57 = arith.constant 1.000000e-16 : f32
    %169 = vector.broadcast %cst_57 : f32 to vector<2x1x4xf32>
    %170 = arith.addf %168, %169 : vector<2x1x4xf32>
    %171 = vector.broadcast %170 : vector<2x1x4xf32> to vector<2x8x4xf32>
    %172 = arith.divf %166, %171 : vector<2x8x4xf32>
    %cst_58 = arith.constant dense<0.000000e+00> : vector<2x1xf32>
    %173 = vector.multi_reduction <add>, %2, %cst_58 [1] : vector<2x8x1xf32> to vector<2x1xf32>
    %174 = vector.shape_cast %173 : vector<2x1xf32> to vector<2x1x1xf32>
    %cst_59 = arith.constant 1.000000e+00 : f32
    %175 = vector.broadcast %cst_59 : f32 to vector<2x1x1xf32>
    %176 = arith.maximumf %174, %175 : vector<2x1x1xf32>
    %177 = vector.shape_cast %2 : vector<2x8x1xf32> to vector<2x8x1x1xf32>
    %cst_60 = arith.constant 0.000000e+00 : f32
    %178 = vector.broadcast %cst_60 : f32 to vector<2x8x1x1xf32>
    %179 = arith.cmpf ogt, %177, %178 : vector<2x8x1x1xf32>
    %180 = vector.shape_cast %145 : vector<2x8x32xf32> to vector<2x8x1x32xf32>
    %181 = vector.shape_cast %172 : vector<2x8x4xf32> to vector<2x8x4x1xf32>
    %182 = vector.broadcast %180 : vector<2x8x1x32xf32> to vector<2x8x4x32xf32>
    %183 = vector.broadcast %181 : vector<2x8x4x1xf32> to vector<2x8x4x32xf32>
    %184 = arith.mulf %182, %183 : vector<2x8x4x32xf32>
    %cst_61 = arith.constant -1.000000e+30 : f32
    %185 = vector.shape_cast %179 : vector<2x8x1x1xi1> to vector<2x8x1x1xi1>
    %186 = vector.broadcast %185 : vector<2x8x1x1xi1> to vector<2x8x4x32xi1>
    %187 = vector.broadcast %cst_61 : f32 to vector<2x8x4x32xf32>
    %188 = arith.select %186, %184, %187 : vector<2x8x4x32xi1>, vector<2x8x4x32xf32>
    %cst_62 = arith.constant dense<0xFF800000> : vector<2x4x32xf32>
    %189 = vector.multi_reduction <maximumf>, %188, %cst_62 [1] : vector<2x8x4x32xf32> to vector<2x4x32xf32>
    %190 = tpu.transpose %172, [0, 2, 1] : vector<2x8x4xf32> -> vector<2x4x8xf32>
    %191 = arith.truncf %190 : vector<2x4x8xf32> to vector<2x4x8xbf16>
    %192 = arith.truncf %145 : vector<2x8x32xf32> to vector<2x8x32xbf16>
    "tpu.trace_start"() <{level = 10 : i32, message = "bat,btf->baf"}> : () -> ()
    %cst_63 = arith.constant dense<0.000000e+00> : vector<2x4x32xf32>
    %193 = tpu.matmul %191, %192, %cst_63 {dimension_numbers = #tpu.dot_dimension_numbers<[2], [1], [1], [2], [0, 0, 0, 1, 1, 2], [0], [0]>} : vector<2x4x8xbf16>, vector<2x8x32xbf16>, vector<2x4x32xf32> -> vector<2x4x32xf32>
    "tpu.trace_stop"() : () -> ()
    %194 = vector.broadcast %176 : vector<2x1x1xf32> to vector<2x4x32xf32>
    %195 = arith.divf %193, %194 : vector<2x4x32xf32>
    %196 = tpu.concatenate %189, %195 in 2 : vector<2x4x32xf32>, vector<2x4x32xf32> -> vector<2x4x64xf32>
    %197 = vector.shape_cast %196 : vector<2x4x64xf32> to vector<2x256xf32>
    %c0_64 = arith.constant 0 : index
    %c0_65 = arith.constant 0 : index
    %198 = vector.load %arg21[%c0_64, %c0_65] : memref<2x256xf32, #tpu.memory_space<vmem>>, vector<2x256xf32>
    tpu.vector_store %arg21[%c0_64, %c0_65], %197 {strides = array<i32>} : memref<2x256xf32, #tpu.memory_space<vmem>>, vector<2x256xf32>,
    %199 = vector.shape_cast %0 : vector<2x8x4xf32> to vector<16x4xf32>
    %200 = arith.truncf %199 : vector<16x4xf32> to vector<16x4xbf16>
    %c0_66 = arith.constant 0 : index
    %c0_67 = arith.constant 0 : index
    %201 = vector.load %arg16[%c0_66, %c0_67] : memref<4x32xbf16, #tpu.memory_space<vmem>>, vector<4x32xbf16>
    %cst_68 = arith.constant dense<0.000000e+00> : vector<16x32xf32>
    %202 = tpu.matmul %200, %201, %cst_68 {dimension_numbers = #tpu.dot_dimension_numbers<[1], [0], [0], [1], [0, 0, 1, 1], [], []>} : vector<16x4xbf16>, vector<4x32xbf16>, vector<16x32xf32> -> vector<16x32xf32>
    %203 = vector.shape_cast %145 : vector<2x8x32xf32> to vector<16x32xf32>
    %204 = arith.truncf %203 : vector<16x32xf32> to vector<16x32xbf16>
    %c0_69 = arith.constant 0 : index
    %c0_70 = arith.constant 0 : index
    %205 = vector.load %arg17[%c0_69, %c0_70] : memref<32x32xbf16, #tpu.memory_space<vmem>>, vector<32x32xbf16>
    %cst_71 = arith.constant dense<0.000000e+00> : vector<16x32xf32>
    %206 = tpu.matmul %204, %205, %cst_71 {dimension_numbers = #tpu.dot_dimension_numbers<[1], [0], [0], [1], [0, 0, 1, 1], [], []>} : vector<16x32xbf16>, vector<32x32xbf16>, vector<16x32xf32> -> vector<16x32xf32>
    %207 = arith.addf %202, %206 : vector<16x32xf32>
    %c0_72 = arith.constant 0 : index
    %c0_73 = arith.constant 0 : index
    %208 = vector.load %arg19[%c0_72, %c0_73] : memref<1x32xf32, #tpu.memory_space<vmem>>, vector<1x32xf32>
    %209 = vector.broadcast %208 : vector<1x32xf32> to vector<16x32xf32>
    %210 = arith.addf %207, %209 : vector<16x32xf32>
    %211 = vector.shape_cast %210 : vector<16x32xf32> to vector<2x8x32xf32>
    %212 = arith.truncf %197 : vector<2x256xf32> to vector<2x256xbf16>
    %c0_74 = arith.constant 0 : index
    %c0_75 = arith.constant 0 : index
    %213 = vector.load %arg18[%c0_74, %c0_75] : memref<256x32xbf16, #tpu.memory_space<vmem>>, vector<256x32xbf16>
    %cst_76 = arith.constant dense<0.000000e+00> : vector<2x32xf32>
    %214 = tpu.matmul %212, %213, %cst_76 {dimension_numbers = #tpu.dot_dimension_numbers<[1], [0], [0], [1], [0, 0, 1, 1], [], []>} : vector<2x256xbf16>, vector<256x32xbf16>, vector<2x32xf32> -> vector<2x32xf32>
    %215 = vector.shape_cast %214 : vector<2x32xf32> to vector<2x1x32xf32>
    %216 = vector.broadcast %215 : vector<2x1x32xf32> to vector<2x8x32xf32>
    %217 = arith.addf %211, %216 : vector<2x8x32xf32>
    %cst_77 = arith.constant 0.000000e+00 : f32
    %218 = vector.broadcast %cst_77 : f32 to vector<2x8x32xf32>
    %219 = arith.maximumf %217, %218 : vector<2x8x32xf32>
    %220 = vector.broadcast %2 : vector<2x8x1xf32> to vector<2x8x32xf32>
    %221 = arith.mulf %219, %220 : vector<2x8x32xf32>
    %222 = vector.shape_cast %221 : vector<2x8x32xf32> to vector<2x256xf32>
    %c0_78 = arith.constant 0 : index
    %c0_79 = arith.constant 0 : index
    %223 = vector.load %arg20[%c0_78, %c0_79] : memref<2x256xf32, #tpu.memory_space<vmem>>, vector<2x256xf32>
    tpu.vector_store %arg20[%c0_78, %c0_79], %222 {strides = array<i32>} : memref<2x256xf32, #tpu.memory_space<vmem>>, vector<2x256xf32>,
    return
  }
  func.func @transform_0(%arg0: i32) -> (i32, i32, i32) {
    %c0_i32 = arith.constant 0 : i32
    %c0_i32_0 = arith.constant 0 : i32
    %c0_i32_1 = arith.constant 0 : i32
    return %arg0, %c0_i32, %c0_i32_0 : i32, i32, i32
  }
  func.func @transform_1(%arg0: i32) -> (i32, i32, i32) {
    %c0_i32 = arith.constant 0 : i32
    %c0_i32_0 = arith.constant 0 : i32
    %c0_i32_1 = arith.constant 0 : i32
    return %arg0, %c0_i32, %c0_i32_0 : i32, i32, i32
  }
  func.func @transform_2(%arg0: i32) -> (i32, i32, i32) {
    %c0_i32 = arith.constant 0 : i32
    %c0_i32_0 = arith.constant 0 : i32
    %c0_i32_1 = arith.constant 0 : i32
    return %arg0, %c0_i32, %c0_i32_0 : i32, i32, i32
  }
  func.func @transform_3(%arg0: i32) -> (i32, i32) {
    %c0_i32 = arith.constant 0 : i32
    %c0_i32_0 = arith.constant 0 : i32
    %c0_i32_1 = arith.constant 0 : i32
    return %c0_i32, %c0_i32_0 : i32, i32
  }
  func.func @transform_4(%arg0: i32) -> (i32, i32) {
    %c0_i32 = arith.constant 0 : i32
    %c0_i32_0 = arith.constant 0 : i32
    %c0_i32_1 = arith.constant 0 : i32
    return %c0_i32, %c0_i32_0 : i32, i32
  }
  func.func @transform_5(%arg0: i32) -> (i32, i32) {
    %c0_i32 = arith.constant 0 : i32
    %c0_i32_0 = arith.constant 0 : i32
    %c0_i32_1 = arith.constant 0 : i32
    return %c0_i32, %c0_i32_0 : i32, i32
  }
  func.func @transform_6(%arg0: i32) -> (i32, i32) {
    %c0_i32 = arith.constant 0 : i32
    %c0_i32_0 = arith.constant 0 : i32
    %c0_i32_1 = arith.constant 0 : i32
    return %c0_i32, %c0_i32_0 : i32, i32
  }
  func.func @transform_7(%arg0: i32) -> (i32, i32) {
    %c0_i32 = arith.constant 0 : i32
    %c0_i32_0 = arith.constant 0 : i32
    %c0_i32_1 = arith.constant 0 : i32
    return %c0_i32, %c0_i32_0 : i32, i32
  }
  func.func @transform_8(%arg0: i32) -> (i32, i32) {
    %c0_i32 = arith.constant 0 : i32
    %c0_i32_0 = arith.constant 0 : i32
    %c0_i32_1 = arith.constant 0 : i32
    return %c0_i32, %c0_i32_0 : i32, i32
  }
  func.func @transform_9(%arg0: i32) -> (i32, i32) {
    %c0_i32 = arith.constant 0 : i32
    %c0_i32_0 = arith.constant 0 : i32
    %c0_i32_1 = arith.constant 0 : i32
    return %c0_i32, %c0_i32_0 : i32, i32
  }
  func.func @transform_10(%arg0: i32) -> (i32, i32) {
    %c0_i32 = arith.constant 0 : i32
    %c0_i32_0 = arith.constant 0 : i32
    %c0_i32_1 = arith.constant 0 : i32
    return %c0_i32, %c0_i32_0 : i32, i32
  }
  func.func @transform_11(%arg0: i32) -> (i32, i32) {
    %c0_i32 = arith.constant 0 : i32
    %c0_i32_0 = arith.constant 0 : i32
    %c0_i32_1 = arith.constant 0 : i32
    return %c0_i32, %c0_i32_0 : i32, i32
  }
  func.func @transform_12(%arg0: i32) -> (i32, i32) {
    %c0_i32 = arith.constant 0 : i32
    %c0_i32_0 = arith.constant 0 : i32
    %c0_i32_1 = arith.constant 0 : i32
    return %c0_i32, %c0_i32_0 : i32, i32
  }
  func.func @transform_13(%arg0: i32) -> (i32, i32) {
    %c0_i32 = arith.constant 0 : i32
    %c0_i32_0 = arith.constant 0 : i32
    %c0_i32_1 = arith.constant 0 : i32
    return %c0_i32, %c0_i32_0 : i32, i32
  }
  func.func @transform_14(%arg0: i32) -> (i32, i32) {
    %c0_i32 = arith.constant 0 : i32
    %c0_i32_0 = arith.constant 0 : i32
    %c0_i32_1 = arith.constant 0 : i32
    return %c0_i32, %c0_i32_0 : i32, i32
  }
  func.func @transform_15(%arg0: i32) -> (i32, i32) {
    %c0_i32 = arith.constant 0 : i32
    %c0_i32_0 = arith.constant 0 : i32
    %c0_i32_1 = arith.constant 0 : i32
    return %c0_i32, %c0_i32_0 : i32, i32
  }
  func.func @transform_16(%arg0: i32) -> (i32, i32) {
    %c0_i32 = arith.constant 0 : i32
    %c0_i32_0 = arith.constant 0 : i32
    %c0_i32_1 = arith.constant 0 : i32
    return %c0_i32, %c0_i32_0 : i32, i32
  }
  func.func @transform_17(%arg0: i32) -> (i32, i32) {
    %c0_i32 = arith.constant 0 : i32
    %c0_i32_0 = arith.constant 0 : i32
    %c0_i32_1 = arith.constant 0 : i32
    return %c0_i32, %c0_i32_0 : i32, i32
  }
  func.func @transform_18(%arg0: i32) -> (i32, i32) {
    %c0_i32 = arith.constant 0 : i32
    %c0_i32_0 = arith.constant 0 : i32
    %c0_i32_1 = arith.constant 0 : i32
    return %c0_i32, %c0_i32_0 : i32, i32
  }
  func.func @transform_19(%arg0: i32) -> (i32, i32) {
    %c0_i32 = arith.constant 0 : i32
    %c0_i32_0 = arith.constant 0 : i32
    return %arg0, %c0_i32 : i32, i32
  }
  func.func @transform_20(%arg0: i32) -> (i32, i32) {
    %c0_i32 = arith.constant 0 : i32
    %c0_i32_0 = arith.constant 0 : i32
    return %arg0, %c0_i32 : i32, i32
  }
}

</mosaic_0001>

<llo_original>
// kernel: tpu_custom_call.1
$region0: #{tpu_custom_call.1}
  #allocation0 [shape = 'u32[]', space=smem, size = 0x4, offset = 0x4, fixed_abs, tag = 'smem constant byte address 0x4 - core index']
  #allocation1 [shape = 'u32[144,128]{1,0:T(1,128)}', space=vmem, size = 0x12000, scoped, tag = 'internal scratch']
  %s0 = inlined_call_operand.vmem [shape: f32[2,8,4], index: 0, kind: input, shape index: {}]
  %s1 = inlined_call_operand.vmem [shape: f32[2,1,8], index: 1, kind: input, shape index: {}]
  %s2 = inlined_call_operand.vmem [shape: f32[2,8,1], index: 2, kind: input, shape index: {}]
  %s3 = inlined_call_operand.vmem [shape: bf16[4,96], index: 3, kind: input, shape index: {}]
  %s4 = inlined_call_operand.vmem [shape: f32[1,96], index: 4, kind: input, shape index: {}]
  %s5 = inlined_call_operand.vmem [shape: bf16[32,32], index: 5, kind: input, shape index: {}]
  %s6 = inlined_call_operand.vmem [shape: f32[1,32], index: 6, kind: input, shape index: {}]
  %s7 = inlined_call_operand.vmem [shape: bf16[32,96], index: 7, kind: input, shape index: {}]
  %s8 = inlined_call_operand.vmem [shape: f32[1,96], index: 8, kind: input, shape index: {}]
  %s9 = inlined_call_operand.vmem [shape: bf16[32,32], index: 9, kind: input, shape index: {}]
  %s10 = inlined_call_operand.vmem [shape: f32[1,32], index: 10, kind: input, shape index: {}]
  %s11 = inlined_call_operand.vmem [shape: bf16[32,32], index: 11, kind: input, shape index: {}]
  %s12 = inlined_call_operand.vmem [shape: f32[1,32], index: 12, kind: input, shape index: {}]
  %s13 = inlined_call_operand.vmem [shape: bf16[32,4], index: 13, kind: input, shape index: {}]
  %s14 = inlined_call_operand.vmem [shape: f32[1,4], index: 14, kind: input, shape index: {}]
  %s15 = inlined_call_operand.vmem [shape: bf16[4,32], index: 15, kind: input, shape index: {}]
  %s16 = inlined_call_operand.vmem [shape: bf16[32,32], index: 16, kind: input, shape index: {}]
  %s17 = inlined_call_operand.vmem [shape: bf16[256,32], index: 17, kind: input, shape index: {}]
  %s18 = inlined_call_operand.vmem [shape: f32[1,32], index: 18, kind: input, shape index: {}]
  %s19 = inlined_call_operand.hbm [shape: f32[2,256], index: 19, kind: output, shape index: {0}]
  %s20 = inlined_call_operand.hbm [shape: f32[2,256], index: 20, kind: output, shape index: {1}]
  %21 = xla_tuple %s19, %s20
  %s22 = sld [smem:[#allocation0]]
  $region94: #{tpu_custom_call.1} parent=0
    _
  %s24 = ssub.s32 1, %s22
  %s25 = scalar_select 0, %s24, %s22
  $region1: #{tpu_custom_call.1} parent=0
    #allocation2 [shape = 'u8[2048]{0}', space=vmem, size = 0x800, scoped, tag = 'output window, operand 0, single buffered']
    #allocation3 [shape = 's32[1]{0}', space=sflag, size = 0x4, scoped, tag = 'scoped memory for tpu_custom_call.1']
    #allocation4 [shape = 'u8[2048]{0}', space=vmem, size = 0x800, scoped, tag = 'output window, operand 1, single buffered']
    #allocation5 [shape = 's32[1]{0}', space=sflag, size = 0x4, scoped, tag = 'scoped memory for tpu_custom_call.1']
    %26 = vsyncpa [#allocation3], 0
    %27 = vsyncpa [#allocation5], 0
    // Predicated region
    $region2: #{tpu_custom_call.1} parent=1 // pred_check
      _
    $region3: #{tpu_custom_call.1} parent=1 // pred_check_branch
      %29 = sbr.rel (0) target = $region5
    $region4: #{tpu_custom_call.1} parent=1 // pred_region
      _
    $region5: #{tpu_custom_call.1} parent=1 // pred_fallthru
      _
    // Predicated region
    $region6: #{tpu_custom_call.1} parent=1 // pred_check
      _
    $region7: #{tpu_custom_call.1} parent=1 // pred_check_branch
      %31 = sbr.rel (0) target = $region9
    $region8: #{tpu_custom_call.1} parent=1 // pred_region
      _
    $region9: #{tpu_custom_call.1} parent=1 // pred_fallthru
      _
    // Predicated region
    $region10: #{tpu_custom_call.1} parent=1 // pred_check
      _
    $region11: #{tpu_custom_call.1} parent=1 // pred_check_branch
      %33 = sbr.rel (0) target = $region13
    $region12: #{tpu_custom_call.1} parent=1 // pred_region
      _
    $region13: #{tpu_custom_call.1} parent=1 // pred_fallthru
      _
    // Predicated region
    $region14: #{tpu_custom_call.1} parent=1 // pred_check
      _
    $region15: #{tpu_custom_call.1} parent=1 // pred_check_branch
      %35 = sbr.rel (0) target = $region17
    $region16: #{tpu_custom_call.1} parent=1 // pred_region
      _
    $region17: #{tpu_custom_call.1} parent=1 // pred_fallthru
      _
    // Predicated region
    $region18: #{tpu_custom_call.1} parent=1 // pred_check
      _
    $region19: #{tpu_custom_call.1} parent=1 // pred_check_branch
      %37 = sbr.rel (0) target = $region21
    $region20: #{tpu_custom_call.1} parent=1 // pred_region
      _
    $region21: #{tpu_custom_call.1} parent=1 // pred_fallthru
      _
    // Predicated region
    $region22: #{tpu_custom_call.1} parent=1 // pred_check
      _
    $region23: #{tpu_custom_call.1} parent=1 // pred_check_branch
      %39 = sbr.rel (0) target = $region25
    $region24: #{tpu_custom_call.1} parent=1 // pred_region
      _
    $region25: #{tpu_custom_call.1} parent=1 // pred_fallthru
      _
    // Predicated region
    $region26: #{tpu_custom_call.1} parent=1 // pred_check
      _
    $region27: #{tpu_custom_call.1} parent=1 // pred_check_branch
      %41 = sbr.rel (0) target = $region29
    $region28: #{tpu_custom_call.1} parent=1 // pred_region
      _
    $region29: #{tpu_custom_call.1} parent=1 // pred_fallthru
      _
    // Predicated region
    $region30: #{tpu_custom_call.1} parent=1 // pred_check
      _
    $region31: #{tpu_custom_call.1} parent=1 // pred_check_branch
      %43 = sbr.rel (0) target = $region33
    $region32: #{tpu_custom_call.1} parent=1 // pred_region
      _
    $region33: #{tpu_custom_call.1} parent=1 // pred_fallthru
      _
    // Predicated region
    $region34: #{tpu_custom_call.1} parent=1 // pred_check
      _
    $region35: #{tpu_custom_call.1} parent=1 // pred_check_branch
      %45 = sbr.rel (0) target = $region37
    $region36: #{tpu_custom_call.1} parent=1 // pred_region
      _
    $region37: #{tpu_custom_call.1} parent=1 // pred_fallthru
      _
    // Predicated region
    $region38: #{tpu_custom_call.1} parent=1 // pred_check
      _
    $region39: #{tpu_custom_call.1} parent=1 // pred_check_branch
      %47 = sbr.rel (0) target = $region41
    $region40: #{tpu_custom_call.1} parent=1 // pred_region
      _
    $region41: #{tpu_custom_call.1} parent=1 // pred_fallthru
      _
    // Predicated region
    $region42: #{tpu_custom_call.1} parent=1 // pred_check
      _
    $region43: #{tpu_custom_call.1} parent=1 // pred_check_branch
      %49 = sbr.rel (0) target = $region45
    $region44: #{tpu_custom_call.1} parent=1 // pred_region
      _
    $region45: #{tpu_custom_call.1} parent=1 // pred_fallthru
      _
    // Predicated region
    $region46: #{tpu_custom_call.1} parent=1 // pred_check
      _
    $region47: #{tpu_custom_call.1} parent=1 // pred_check_branch
      %51 = sbr.rel (0) target = $region49
    $region48: #{tpu_custom_call.1} parent=1 // pred_region
      _
    $region49: #{tpu_custom_call.1} parent=1 // pred_fallthru
      _
    // Predicated region
    $region50: #{tpu_custom_call.1} parent=1 // pred_check
      _
    $region51: #{tpu_custom_call.1} parent=1 // pred_check_branch
      %53 = sbr.rel (0) target = $region53
    $region52: #{tpu_custom_call.1} parent=1 // pred_region
      _
    $region53: #{tpu_custom_call.1} parent=1 // pred_fallthru
      _
    // Predicated region
    $region54: #{tpu_custom_call.1} parent=1 // pred_check
      _
    $region55: #{tpu_custom_call.1} parent=1 // pred_check_branch
      %55 = sbr.rel (0) target = $region57
    $region56: #{tpu_custom_call.1} parent=1 // pred_region
      _
    $region57: #{tpu_custom_call.1} parent=1 // pred_fallthru
      _
    // Predicated region
    $region58: #{tpu_custom_call.1} parent=1 // pred_check
      _
    $region59: #{tpu_custom_call.1} parent=1 // pred_check_branch
      %57 = sbr.rel (0) target = $region61
    $region60: #{tpu_custom_call.1} parent=1 // pred_region
      _
    $region61: #{tpu_custom_call.1} parent=1 // pred_fallthru
      _
    // Predicated region
    $region62: #{tpu_custom_call.1} parent=1 // pred_check
      _
    $region63: #{tpu_custom_call.1} parent=1 // pred_check_branch
      %59 = sbr.rel (0) target = $region65
    $region64: #{tpu_custom_call.1} parent=1 // pred_region
      _
    $region65: #{tpu_custom_call.1} parent=1 // pred_fallthru
      _
    // Predicated region
    $region66: #{tpu_custom_call.1} parent=1 // pred_check
      _
    $region67: #{tpu_custom_call.1} parent=1 // pred_check_branch
      %61 = sbr.rel (0) target = $region69
    $region68: #{tpu_custom_call.1} parent=1 // pred_region
      _
    $region69: #{tpu_custom_call.1} parent=1 // pred_fallthru
      _
    // Predicated region
    $region70: #{tpu_custom_call.1} parent=1 // pred_check
      _
    $region71: #{tpu_custom_call.1} parent=1 // pred_check_branch
      %63 = sbr.rel (0) target = $region73
    $region72: #{tpu_custom_call.1} parent=1 // pred_region
      _
    $region73: #{tpu_custom_call.1} parent=1 // pred_fallthru
      _
    // Predicated region
    $region74: #{tpu_custom_call.1} parent=1 // pred_check
      _
    $region75: #{tpu_custom_call.1} parent=1 // pred_check_branch
      %65 = sbr.rel (0) target = $region77
    $region76: #{tpu_custom_call.1} parent=1 // pred_region
      _
    $region77: #{tpu_custom_call.1} parent=1 // pred_fallthru
      _
    %v67 = vld [vmem:[%s0] sm:$0xff]
    %v68 = vld [vmem:[%s0 + $0x8] sm:$0xff]
    %v69 = vld [vmem:[%s1] sm:$0x1]
    %v70 = vld [vmem:[%s1 + $0x1] sm:$0x1]
    %v71 = vld [vmem:[%s2] sm:$0xff]
    %v72 = vld [vmem:[%s2 + $0x8] sm:$0xff]
    %v73 = vld [vmem:[%s3] sm:$0x3]
    %v74 = vld [vmem:[%s4] sm:$0x1]
    %v75 = vld [vmem:[%s5] sm:$0xf]
    %v76 = vld [vmem:[%s5 + $0x4] sm:$0xf]
    %v77 = vld [vmem:[%s5 + $0x8] sm:$0xf]
    %v78 = vld [vmem:[%s5 + $0xc] sm:$0xf]
    %v79 = vld [vmem:[%s6] sm:$0x1]
    %v80 = vpack.c.bf16 %v68, %v67
    %v82 = vlaneseq
    %v83 = vshrl.u32 %v82, 7
    %v84 = vsub.s32 0, %v83
    %v85 = vrot.slane %v74, %v84
    %vm87 = vcmask 31744
    %v89 = vsel %vm87, %v80, 0
    %vm91 = vcmask 1041408
    %v93 = vsel %vm91, %v73, 0
    %95 = vmatprep.subr.bf16.mxu0 0
    %96 = vmatpush1.bf16.msra.mxu0 %v93
    %97 = vmatprep.subr.bf16.mxu0 0
    %98 = vmatpush1.bf16.msra.mxu0 0
    %99 = vmatprep.subr.bf16.mxu0 0
    %100 = vmatpush1.bf16.msra.mxu0 0
    %101 = vmatprep.subr.bf16.mxu0 0
    %102 = vmatpush1.bf16.msra.mxu0 0
    %103 = vmatprep.subr.bf16.mxu0 0
    %104 = vmatpush1.bf16.msra.mxu0 0
    %105 = vmatprep.subr.bf16.mxu0 0
    %106 = vmatpush1.bf16.msra.mxu0 0
    %107 = vmatprep.subr.bf16.mxu0 0
    %108 = vmatpush1.bf16.msra.mxu0 0
    %109 = vmatprep.subr.bf16.mxu0 0
    %110 = vmatpush1.bf16.msra.mxu0 0
    %111 = vmatprep.subr.bf16.mxu0 0
    %112 = vmatpush1.bf16.msra.mxu0 0
    %113 = vmatprep.subr.bf16.mxu0 0
    %114 = vmatpush1.bf16.msra.mxu0 0
    %115 = vmatprep.subr.bf16.mxu0 0
    %116 = vmatpush1.bf16.msra.mxu0 0
    %117 = vmatprep.subr.bf16.mxu0 0
    %118 = vmatpush1.bf16.msra.mxu0 0
    %119 = vmatprep.subr.bf16.mxu0 0
    %120 = vmatpush1.bf16.msra.mxu0 0
    %121 = vmatprep.subr.bf16.mxu0 0
    %122 = vmatpush1.bf16.msra.mxu0 0
    %123 = vmatprep.subr.bf16.mxu0 0
    %124 = vmatpush1.bf16.msra.mxu0 0
    %125 = vmatprep.subr.bf16.mxu0 0
    %126 = vmatpush1.bf16.msra.mxu0 0
    %127 = vmatprep.mubr.bf16.mxu0 0
    %128 = vmatmul.mubr.bf16.gmra.mrb[0].mxu0 %v89
    %v129 = vpop.f32.mrb[0].mxu0
    %v130 = vadd.f32 %v85, %v129
    %v131 = vpop.f32.mrb[0].mxu0
    %v132 = vpop.f32.mrb[0].mxu0
    %v133 = vadd.f32 %v85, %v132
    %v134 = vpop.f32.mrb[0].mxu0
    %135 = vdwg.mxu0
    %138 = vrot.lane.b32.xlu0 %v130, 120
    %v139 = vpop.permute.xlu0 %138
    %140 = vrot.lane.b32.xlu0 %v133, 120
    %v141 = vpop.permute.xlu0 %140
    %144 = vrot.lane.b32.xlu0 %v130, 112
    %v145 = vpop.permute.xlu0 %144
    %146 = vrot.lane.b32.xlu0 %v133, 112
    %v147 = vpop.permute.xlu0 %146
    %150 = vrot.lane.b32.xlu0 %v130, 104
    %v151 = vpop.permute.xlu0 %150
    %152 = vrot.lane.b32.xlu0 %v133, 104
    %v153 = vpop.permute.xlu0 %152
    %v156 = vpack.c.bf16 %v130, %v130
    %v157 = vpack.c.bf16 %v133, %v133
    %v158 = vpack.c.bf16 %v139, %v139
    %v159 = vpack.c.bf16 %v141, %v141
    %v160 = vpack.c.bf16 %v145, %v145
    %v161 = vpack.c.bf16 %v147, %v147
    %v162 = vpack.c.bf16 %v151, %v151
    %v163 = vpack.c.bf16 %v153, %v153
    %165 = vrot.lane.b32.xlu0 %v156, 96
    %v166 = vpop.permute.xlu0 %165
    %vm167 = vcmask 64512
    %v169 = vsel %vm167, %v156, 0
    %v172 = vsel %vm167, %v166, 0
    %174 = vmatprep.subr.bf16.mxu0 0
    %175 = vmatpush1.bf16.xpose.msra.mxu0 %v172
    %176 = vmatprep.subr.bf16.mxu0 0
    %177 = vmatpush1.bf16.xpose.msra.mxu0 0
    %178 = vmatprep.subr.bf16.mxu0 0
    %179 = vmatpush1.bf16.xpose.msra.mxu0 0
    %180 = vmatprep.subr.bf16.mxu0 0
    %181 = vmatpush1.bf16.xpose.msra.mxu0 0
    %182 = vmatprep.subr.bf16.mxu0 0
    %183 = vmatpush1.bf16.xpose.msra.mxu0 0
    %184 = vmatprep.subr.bf16.mxu0 0
    %185 = vmatpush1.bf16.xpose.msra.mxu0 0
    %186 = vmatprep.subr.bf16.mxu0 0
    %187 = vmatpush1.bf16.xpose.msra.mxu0 0
    %188 = vmatprep.subr.bf16.mxu0 0
    %189 = vmatpush1.bf16.xpose.msra.mxu0 0
    %190 = vmatprep.subr.bf16.mxu0 0
    %191 = vmatpush1.bf16.xpose.msra.mxu0 0
    %192 = vmatprep.subr.bf16.mxu0 0
    %193 = vmatpush1.bf16.xpose.msra.mxu0 0
    %194 = vmatprep.subr.bf16.mxu0 0
    %195 = vmatpush1.bf16.xpose.msra.mxu0 0
    %196 = vmatprep.subr.bf16.mxu0 0
    %197 = vmatpush1.bf16.xpose.msra.mxu0 0
    %198 = vmatprep.subr.bf16.mxu0 0
    %199 = vmatpush1.bf16.xpose.msra.mxu0 0
    %200 = vmatprep.subr.bf16.mxu0 0
    %201 = vmatpush1.bf16.xpose.msra.mxu0 0
    %202 = vmatprep.subr.bf16.mxu0 0
    %203 = vmatpush1.bf16.xpose.msra.mxu0 0
    %204 = vmatprep.subr.bf16.mxu0 0
    %205 = vmatpush1.bf16.xpose.msra.mxu0 0
    %206 = vmatprep.mubr.bf16.mxu0 0
    %207 = vmatmul.mubr.bf16.gmra.mrb[0].mxu0 %v169
    %v208 = vpop.f32.mrb[0].mxu0
    %v209 = vadd.f32 0.0, %v208
    %v210 = vpop.f32.mrb[0].mxu0
    %v211 = vpop.f32.mrb[0].mxu0
    %v212 = vpop.f32.mrb[0].mxu0
    %213 = vdwg.mxu0
    %215 = vrot.lane.b32.xlu0 %v157, 96
    %v216 = vpop.permute.xlu0 %215
    %v218 = vsel %vm167, %v157, 0
    %v221 = vsel %vm167, %v216, 0
    %223 = vmatprep.subr.bf16.mxu0 0
    %224 = vmatpush1.bf16.xpose.msra.mxu0 %v221
    %225 = vmatprep.subr.bf16.mxu0 0
    %226 = vmatpush1.bf16.xpose.msra.mxu0 0
    %227 = vmatprep.subr.bf16.mxu0 0
    %228 = vmatpush1.bf16.xpose.msra.mxu0 0
    %229 = vmatprep.subr.bf16.mxu0 0
    %230 = vmatpush1.bf16.xpose.msra.mxu0 0
    %231 = vmatprep.subr.bf16.mxu0 0
    %232 = vmatpush1.bf16.xpose.msra.mxu0 0
    %233 = vmatprep.subr.bf16.mxu0 0
    %234 = vmatpush1.bf16.xpose.msra.mxu0 0
    %235 = vmatprep.subr.bf16.mxu0 0
    %236 = vmatpush1.bf16.xpose.msra.mxu0 0
    %237 = vmatprep.subr.bf16.mxu0 0
    %238 = vmatpush1.bf16.xpose.msra.mxu0 0
    %239 = vmatprep.subr.bf16.mxu0 0
    %240 = vmatpush1.bf16.xpose.msra.mxu0 0
    %241 = vmatprep.subr.bf16.mxu0 0
    %242 = vmatpush1.bf16.xpose.msra.mxu0 0
    %243 = vmatprep.subr.bf16.mxu0 0
    %244 = vmatpush1.bf16.xpose.msra.mxu0 0
    %245 = vmatprep.subr.bf16.mxu0 0
    %246 = vmatpush1.bf16.xpose.msra.mxu0 0
    %247 = vmatprep.subr.bf16.mxu0 0
    %248 = vmatpush1.bf16.xpose.msra.mxu0 0
    %249 = vmatprep.subr.bf16.mxu0 0
    %250 = vmatpush1.bf16.xpose.msra.mxu0 0
    %251 = vmatprep.subr.bf16.mxu0 0
    %252 = vmatpush1.bf16.xpose.msra.mxu0 0
    %253 = vmatprep.subr.bf16.mxu0 0
    %254 = vmatpush1.bf16.xpose.msra.mxu0 0
    %255 = vmatprep.mubr.bf16.mxu0 0
    %256 = vmatmul.mubr.bf16.gmra.mrb[0].mxu0 %v218
    %v257 = vpop.f32.mrb[0].mxu0
    %v258 = vadd.f32 0.0, %v257
    %v259 = vpop.f32.mrb[0].mxu0
    %v260 = vpop.f32.mrb[0].mxu0
    %v261 = vpop.f32.mrb[0].mxu0
    %262 = vdwg.mxu0
    %264 = vrot.lane.b32.xlu0 %v158, 96
    %v265 = vpop.permute.xlu0 %264
    %v267 = vsel %vm167, %v158, 0
    %v270 = vsel %vm167, %v265, 0
    %272 = vmatprep.subr.bf16.mxu0 0
    %273 = vmatpush1.bf16.xpose.msra.mxu0 %v270
    %274 = vmatprep.subr.bf16.mxu0 0
    %275 = vmatpush1.bf16.xpose.msra.mxu0 0
    %276 = vmatprep.subr.bf16.mxu0 0
    %277 = vmatpush1.bf16.xpose.msra.mxu0 0
    %278 = vmatprep.subr.bf16.mxu0 0
    %279 = vmatpush1.bf16.xpose.msra.mxu0 0
    %280 = vmatprep.subr.bf16.mxu0 0
    %281 = vmatpush1.bf16.xpose.msra.mxu0 0
    %282 = vmatprep.subr.bf16.mxu0 0
    %283 = vmatpush1.bf16.xpose.msra.mxu0 0
    %284 = vmatprep.subr.bf16.mxu0 0
    %285 = vmatpush1.bf16.xpose.msra.mxu0 0
    %286 = vmatprep.subr.bf16.mxu0 0
    %287 = vmatpush1.bf16.xpose.msra.mxu0 0
    %288 = vmatprep.subr.bf16.mxu0 0
    %289 = vmatpush1.bf16.xpose.msra.mxu0 0
    %290 = vmatprep.subr.bf16.mxu0 0
    %291 = vmatpush1.bf16.xpose.msra.mxu0 0
    %292 = vmatprep.subr.bf16.mxu0 0
    %293 = vmatpush1.bf16.xpose.msra.mxu0 0
    %294 = vmatprep.subr.bf16.mxu0 0
    %295 = vmatpush1.bf16.xpose.msra.mxu0 0
    %296 = vmatprep.subr.bf16.mxu0 0
    %297 = vmatpush1.bf16.xpose.msra.mxu0 0
    %298 = vmatprep.subr.bf16.mxu0 0
    %299 = vmatpush1.bf16.xpose.msra.mxu0 0
    %300 = vmatprep.subr.bf16.mxu0 0
    %301 = vmatpush1.bf16.xpose.msra.mxu0 0
    %302 = vmatprep.subr.bf16.mxu0 0
    %303 = vmatpush1.bf16.xpose.msra.mxu0 0
    %304 = vmatprep.mubr.bf16.mxu0 0
    %305 = vmatmul.mubr.bf16.gmra.mrb[0].mxu0 %v267
    %v306 = vpop.f32.mrb[0].mxu0
    %v307 = vadd.f32 0.0, %v306
    %v308 = vpop.f32.mrb[0].mxu0
    %v309 = vpop.f32.mrb[0].mxu0
    %v310 = vpop.f32.mrb[0].mxu0
    %311 = vdwg.mxu0
    %313 = vrot.lane.b32.xlu0 %v159, 96
    %v314 = vpop.permute.xlu0 %313
    %v316 = vsel %vm167, %v159, 0
    %v319 = vsel %vm167, %v314, 0
    %321 = vmatprep.subr.bf16.mxu0 0
    %322 = vmatpush1.bf16.xpose.msra.mxu0 %v319
    %323 = vmatprep.subr.bf16.mxu0 0
    %324 = vmatpush1.bf16.xpose.msra.mxu0 0
    %325 = vmatprep.subr.bf16.mxu0 0
    %326 = vmatpush1.bf16.xpose.msra.mxu0 0
    %327 = vmatprep.subr.bf16.mxu0 0
    %328 = vmatpush1.bf16.xpose.msra.mxu0 0
    %329 = vmatprep.subr.bf16.mxu0 0
    %330 = vmatpush1.bf16.xpose.msra.mxu0 0
    %331 = vmatprep.subr.bf16.mxu0 0
    %332 = vmatpush1.bf16.xpose.msra.mxu0 0
    %333 = vmatprep.subr.bf16.mxu0 0
    %334 = vmatpush1.bf16.xpose.msra.mxu0 0
    %335 = vmatprep.subr.bf16.mxu0 0
    %336 = vmatpush1.bf16.xpose.msra.mxu0 0
    %337 = vmatprep.subr.bf16.mxu0 0
    %338 = vmatpush1.bf16.xpose.msra.mxu0 0
    %339 = vmatprep.subr.bf16.mxu0 0
    %340 = vmatpush1.bf16.xpose.msra.mxu0 0
    %341 = vmatprep.subr.bf16.mxu0 0
    %342 = vmatpush1.bf16.xpose.msra.mxu0 0
    %343 = vmatprep.subr.bf16.mxu0 0
    %344 = vmatpush1.bf16.xpose.msra.mxu0 0
    %345 = vmatprep.subr.bf16.mxu0 0
    %346 = vmatpush1.bf16.xpose.msra.mxu0 0
    %347 = vmatprep.subr.bf16.mxu0 0
    %348 = vmatpush1.bf16.xpose.msra.mxu0 0
    %349 = vmatprep.subr.bf16.mxu0 0
    %350 = vmatpush1.bf16.xpose.msra.mxu0 0
    %351 = vmatprep.subr.bf16.mxu0 0
    %352 = vmatpush1.bf16.xpose.msra.mxu0 0
    %353 = vmatprep.mubr.bf16.mxu0 0
    %354 = vmatmul.mubr.bf16.gmra.mrb[0].mxu0 %v316
    %v355 = vpop.f32.mrb[0].mxu0
    %v356 = vadd.f32 0.0, %v355
    %v357 = vpop.f32.mrb[0].mxu0
    %v358 = vpop.f32.mrb[0].mxu0
    %v359 = vpop.f32.mrb[0].mxu0
    %360 = vdwg.mxu0
    %362 = vrot.lane.b32.xlu0 %v160, 96
    %v363 = vpop.permute.xlu0 %362
    %v365 = vsel %vm167, %v160, 0
    %v368 = vsel %vm167, %v363, 0
    %370 = vmatprep.subr.bf16.mxu0 0
    %371 = vmatpush1.bf16.xpose.msra.mxu0 %v368
    %372 = vmatprep.subr.bf16.mxu0 0
    %373 = vmatpush1.bf16.xpose.msra.mxu0 0
    %374 = vmatprep.subr.bf16.mxu0 0
    %375 = vmatpush1.bf16.xpose.msra.mxu0 0
    %376 = vmatprep.subr.bf16.mxu0 0
    %377 = vmatpush1.bf16.xpose.msra.mxu0 0
    %378 = vmatprep.subr.bf16.mxu0 0
    %379 = vmatpush1.bf16.xpose.msra.mxu0 0
    %380 = vmatprep.subr.bf16.mxu0 0
    %381 = vmatpush1.bf16.xpose.msra.mxu0 0
    %382 = vmatprep.subr.bf16.mxu0 0
    %383 = vmatpush1.bf16.xpose.msra.mxu0 0
    %384 = vmatprep.subr.bf16.mxu0 0
    %385 = vmatpush1.bf16.xpose.msra.mxu0 0
    %386 = vmatprep.subr.bf16.mxu0 0
    %387 = vmatpush1.bf16.xpose.msra.mxu0 0
    %388 = vmatprep.subr.bf16.mxu0 0
    %389 = vmatpush1.bf16.xpose.msra.mxu0 0
    %390 = vmatprep.subr.bf16.mxu0 0
    %391 = vmatpush1.bf16.xpose.msra.mxu0 0
    %392 = vmatprep.subr.bf16.mxu0 0
    %393 = vmatpush1.bf16.xpose.msra.mxu0 0
    %394 = vmatprep.subr.bf16.mxu0 0
    %395 = vmatpush1.bf16.xpose.msra.mxu0 0
    %396 = vmatprep.subr.bf16.mxu0 0
    %397 = vmatpush1.bf16.xpose.msra.mxu0 0
    %398 = vmatprep.subr.bf16.mxu0 0
    %399 = vmatpush1.bf16.xpose.msra.mxu0 0
    %400 = vmatprep.subr.bf16.mxu0 0
    %401 = vmatpush1.bf16.xpose.msra.mxu0 0
    %402 = vmatprep.mubr.bf16.mxu0 0
    %403 = vmatmul.mubr.bf16.gmra.mrb[0].mxu0 %v365
    %v404 = vpop.f32.mrb[0].mxu0
    %v405 = vadd.f32 0.0, %v404
    %v406 = vpop.f32.mrb[0].mxu0
    %v407 = vpop.f32.mrb[0].mxu0
    %v408 = vpop.f32.mrb[0].mxu0
    %409 = vdwg.mxu0
    %411 = vrot.lane.b32.xlu0 %v161, 96
    %v412 = vpop.permute.xlu0 %411
    %v414 = vsel %vm167, %v161, 0
    %v417 = vsel %vm167, %v412, 0
    %419 = vmatprep.subr.bf16.mxu0 0
    %420 = vmatpush1.bf16.xpose.msra.mxu0 %v417
    %421 = vmatprep.subr.bf16.mxu0 0
    %422 = vmatpush1.bf16.xpose.msra.mxu0 0
    %423 = vmatprep.subr.bf16.mxu0 0
    %424 = vmatpush1.bf16.xpose.msra.mxu0 0
    %425 = vmatprep.subr.bf16.mxu0 0
    %426 = vmatpush1.bf16.xpose.msra.mxu0 0
    %427 = vmatprep.subr.bf16.mxu0 0
    %428 = vmatpush1.bf16.xpose.msra.mxu0 0
    %429 = vmatprep.subr.bf16.mxu0 0
    %430 = vmatpush1.bf16.xpose.msra.mxu0 0
    %431 = vmatprep.subr.bf16.mxu0 0
    %432 = vmatpush1.bf16.xpose.msra.mxu0 0
    %433 = vmatprep.subr.bf16.mxu0 0
    %434 = vmatpush1.bf16.xpose.msra.mxu0 0
    %435 = vmatprep.subr.bf16.mxu0 0
    %436 = vmatpush1.bf16.xpose.msra.mxu0 0
    %437 = vmatprep.subr.bf16.mxu0 0
    %438 = vmatpush1.bf16.xpose.msra.mxu0 0
    %439 = vmatprep.subr.bf16.mxu0 0
    %440 = vmatpush1.bf16.xpose.msra.mxu0 0
    %441 = vmatprep.subr.bf16.mxu0 0
    %442 = vmatpush1.bf16.xpose.msra.mxu0 0
    %443 = vmatprep.subr.bf16.mxu0 0
    %444 = vmatpush1.bf16.xpose.msra.mxu0 0
    %445 = vmatprep.subr.bf16.mxu0 0
    %446 = vmatpush1.bf16.xpose.msra.mxu0 0
    %447 = vmatprep.subr.bf16.mxu0 0
    %448 = vmatpush1.bf16.xpose.msra.mxu0 0
    %449 = vmatprep.subr.bf16.mxu0 0
    %450 = vmatpush1.bf16.xpose.msra.mxu0 0
    %451 = vmatprep.mubr.bf16.mxu0 0
    %452 = vmatmul.mubr.bf16.gmra.mrb[0].mxu0 %v414
    %v453 = vpop.f32.mrb[0].mxu0
    %v454 = vadd.f32 0.0, %v453
    %v455 = vpop.f32.mrb[0].mxu0
    %v456 = vpop.f32.mrb[0].mxu0
    %v457 = vpop.f32.mrb[0].mxu0
    %458 = vdwg.mxu0
    %460 = vrot.lane.b32.xlu0 %v162, 96
    %v461 = vpop.permute.xlu0 %460
    %v463 = vsel %vm167, %v162, 0
    %v466 = vsel %vm167, %v461, 0
    %468 = vmatprep.subr.bf16.mxu0 0
    %469 = vmatpush1.bf16.xpose.msra.mxu0 %v466
    %470 = vmatprep.subr.bf16.mxu0 0
    %471 = vmatpush1.bf16.xpose.msra.mxu0 0
    %472 = vmatprep.subr.bf16.mxu0 0
    %473 = vmatpush1.bf16.xpose.msra.mxu0 0
    %474 = vmatprep.subr.bf16.mxu0 0
    %475 = vmatpush1.bf16.xpose.msra.mxu0 0
    %476 = vmatprep.subr.bf16.mxu0 0
    %477 = vmatpush1.bf16.xpose.msra.mxu0 0
    %478 = vmatprep.subr.bf16.mxu0 0
    %479 = vmatpush1.bf16.xpose.msra.mxu0 0
    %480 = vmatprep.subr.bf16.mxu0 0
    %481 = vmatpush1.bf16.xpose.msra.mxu0 0
    %482 = vmatprep.subr.bf16.mxu0 0
    %483 = vmatpush1.bf16.xpose.msra.mxu0 0
    %484 = vmatprep.subr.bf16.mxu0 0
    %485 = vmatpush1.bf16.xpose.msra.mxu0 0
    %486 = vmatprep.subr.bf16.mxu0 0
    %487 = vmatpush1.bf16.xpose.msra.mxu0 0
    %488 = vmatprep.subr.bf16.mxu0 0
    %489 = vmatpush1.bf16.xpose.msra.mxu0 0
    %490 = vmatprep.subr.bf16.mxu0 0
    %491 = vmatpush1.bf16.xpose.msra.mxu0 0
    %492 = vmatprep.subr.bf16.mxu0 0
    %493 = vmatpush1.bf16.xpose.msra.mxu0 0
    %494 = vmatprep.subr.bf16.mxu0 0
    %495 = vmatpush1.bf16.xpose.msra.mxu0 0
    %496 = vmatprep.subr.bf16.mxu0 0
    %497 = vmatpush1.bf16.xpose.msra.mxu0 0
    %498 = vmatprep.subr.bf16.mxu0 0
    %499 = vmatpush1.bf16.xpose.msra.mxu0 0
    %500 = vmatprep.mubr.bf16.mxu0 0
    %501 = vmatmul.mubr.bf16.gmra.mrb[0].mxu0 %v463
    %v502 = vpop.f32.mrb[0].mxu0
    %v503 = vadd.f32 0.0, %v502
    %v504 = vpop.f32.mrb[0].mxu0
    %v505 = vpop.f32.mrb[0].mxu0
    %v506 = vpop.f32.mrb[0].mxu0
    %507 = vdwg.mxu0
    %509 = vrot.lane.b32.xlu0 %v163, 96
    %v510 = vpop.permute.xlu0 %509
    %v512 = vsel %vm167, %v163, 0
    %v515 = vsel %vm167, %v510, 0
    %517 = vmatprep.subr.bf16.mxu0 0
    %518 = vmatpush1.bf16.xpose.msra.mxu0 %v515
    %519 = vmatprep.subr.bf16.mxu0 0
    %520 = vmatpush1.bf16.xpose.msra.mxu0 0
    %521 = vmatprep.subr.bf16.mxu0 0
    %522 = vmatpush1.bf16.xpose.msra.mxu0 0
    %523 = vmatprep.subr.bf16.mxu0 0
    %524 = vmatpush1.bf16.xpose.msra.mxu0 0
    %525 = vmatprep.subr.bf16.mxu0 0
    %526 = vmatpush1.bf16.xpose.msra.mxu0 0
    %527 = vmatprep.subr.bf16.mxu0 0
    %528 = vmatpush1.bf16.xpose.msra.mxu0 0
    %529 = vmatprep.subr.bf16.mxu0 0
    %530 = vmatpush1.bf16.xpose.msra.mxu0 0
    %531 = vmatprep.subr.bf16.mxu0 0
    %532 = vmatpush1.bf16.xpose.msra.mxu0 0
    %533 = vmatprep.subr.bf16.mxu0 0
    %534 = vmatpush1.bf16.xpose.msra.mxu0 0
    %535 = vmatprep.subr.bf16.mxu0 0
    %536 = vmatpush1.bf16.xpose.msra.mxu0 0
    %537 = vmatprep.subr.bf16.mxu0 0
    %538 = vmatpush1.bf16.xpose.msra.mxu0 0
    %539 = vmatprep.subr.bf16.mxu0 0
    %540 = vmatpush1.bf16.xpose.msra.mxu0 0
    %541 = vmatprep.subr.bf16.mxu0 0
    %542 = vmatpush1.bf16.xpose.msra.mxu0 0
    %543 = vmatprep.subr.bf16.mxu0 0
    %544 = vmatpush1.bf16.xpose.msra.mxu0 0
    %545 = vmatprep.subr.bf16.mxu0 0
    %546 = vmatpush1.bf16.xpose.msra.mxu0 0
    %547 = vmatprep.subr.bf16.mxu0 0
    %548 = vmatpush1.bf16.xpose.msra.mxu0 0
    %549 = vmatprep.mubr.bf16.mxu0 0
    %550 = vmatmul.mubr.bf16.gmra.mrb[0].mxu0 %v512
    %v551 = vpop.f32.mrb[0].mxu0
    %v552 = vadd.f32 0.0, %v551
    %v553 = vpop.f32.mrb[0].mxu0
    %v554 = vpop.f32.mrb[0].mxu0
    %v555 = vpop.f32.mrb[0].mxu0
    %556 = vdwg.mxu0
    %vm557 = vcmp.gt.f32.partialorder %v69, 0.0
    %vm558 = vcmp.gt.f32.partialorder %v70, 0.0
    %v559 = vsel %vm557, 1, 0
    %v560 = vsel %vm558, 1, 0
    %v561 = vlaneseq
    %v562 = vshrl.u32 %v561, 7
    %v563 = vsub.s32 0, %v562
    %v564 = vrot.slane %v559, %v563
    %v565 = vlaneseq
    %v566 = vshrl.u32 %v565, 7
    %v567 = vsub.s32 0, %v566
    %v568 = vrot.slane %v560, %v567
    %vm569 = vcmp.eq.s32.totalorder %v564, 1
    %vm570 = vcmp.eq.s32.totalorder %v568, 1
    %v571 = vsel %vm569, %v209, -1e+30
    %v572 = vsel %vm570, %v258, -1e+30
    %v573 = vsel %vm569, %v307, -1e+30
    %v574 = vsel %vm570, %v356, -1e+30
    %v575 = vsel %vm569, %v405, -1e+30
    %v576 = vsel %vm570, %v454, -1e+30
    %v577 = vsel %vm569, %v503, -1e+30
    %v578 = vsel %vm570, %v552, -1e+30
    %v579 = vsel %vm167, %v571, -inf
    %580 = vmax.xlane.f32.xlu0 %v579
    %v581 = vpop.xlane.xlu0 %580
    %v582 = vsel %vm167, %v572, -inf
    %583 = vmax.xlane.f32.xlu0 %v582
    %v584 = vpop.xlane.xlu0 %583
    %v585 = vsel %vm167, %v573, -inf
    %586 = vmax.xlane.f32.xlu0 %v585
    %v587 = vpop.xlane.xlu0 %586
    %v588 = vsel %vm167, %v574, -inf
    %589 = vmax.xlane.f32.xlu0 %v588
    %v590 = vpop.xlane.xlu0 %589
    %v591 = vsel %vm167, %v575, -inf
    %592 = vmax.xlane.f32.xlu0 %v591
    %v593 = vpop.xlane.xlu0 %592
    %v594 = vsel %vm167, %v576, -inf
    %595 = vmax.xlane.f32.xlu0 %v594
    %v596 = vpop.xlane.xlu0 %595
    %v597 = vsel %vm167, %v577, -inf
    %598 = vmax.xlane.f32.xlu0 %v597
    %v599 = vpop.xlane.xlu0 %598
    %v600 = vsel %vm167, %v578, -inf
    %601 = vmax.xlane.f32.xlu0 %v600
    %v602 = vpop.xlane.xlu0 %601
    %v603 = vsub.f32 %v571, %v581
    %v604 = vsub.f32 %v572, %v584
    %v605 = vsub.f32 %v573, %v587
    %v606 = vsub.f32 %v574, %v590
    %v607 = vsub.f32 %v575, %v593
    %v608 = vsub.f32 %v576, %v596
    %v609 = vsub.f32 %v577, %v599
    %v610 = vsub.f32 %v578, %v602
    %v611 = vmul.f32 %v603, 1.442695
    %v612 = vpow.pop %v611
    %v613 = vmul.f32 %v604, 1.442695
    %v614 = vpow.pop %v613
    %v615 = vmul.f32 %v605, 1.442695
    %v616 = vpow.pop %v615
    %v617 = vmul.f32 %v606, 1.442695
    %v618 = vpow.pop %v617
    %v619 = vmul.f32 %v607, 1.442695
    %v620 = vpow.pop %v619
    %v621 = vmul.f32 %v608, 1.442695
    %v622 = vpow.pop %v621
    %v623 = vmul.f32 %v609, 1.442695
    %v624 = vpow.pop %v623
    %v625 = vmul.f32 %v610, 1.442695
    %v626 = vpow.pop %v625
    %v627 = vsel %vm167, %v612, 0.0
    %628 = vadd.xlane.f32.xlu0 %v627
    %v629 = vpop.xlane.xlu0 %628
    %v630 = vsel %vm167, %v614, 0.0
    %631 = vadd.xlane.f32.xlu0 %v630
    %v632 = vpop.xlane.xlu0 %631
    %v633 = vsel %vm167, %v616, 0.0
    %634 = vadd.xlane.f32.xlu0 %v633
    %v635 = vpop.xlane.xlu0 %634
    %v636 = vsel %vm167, %v618, 0.0
    %637 = vadd.xlane.f32.xlu0 %v636
    %v638 = vpop.xlane.xlu0 %637
    %v639 = vsel %vm167, %v620, 0.0
    %640 = vadd.xlane.f32.xlu0 %v639
    %v641 = vpop.xlane.xlu0 %640
    %v642 = vsel %vm167, %v622, 0.0
    %643 = vadd.xlane.f32.xlu0 %v642
    %v644 = vpop.xlane.xlu0 %643
    %v645 = vsel %vm167, %v624, 0.0
    %646 = vadd.xlane.f32.xlu0 %v645
    %v647 = vpop.xlane.xlu0 %646
    %v648 = vsel %vm167, %v626, 0.0
    %649 = vadd.xlane.f32.xlu0 %v648
    %v650 = vpop.xlane.xlu0 %649
    %v651 = vpack.c.bf16 %v612, %v612
    %v652 = vpack.c.bf16 %v614, %v614
    %v653 = vpack.c.bf16 %v616, %v616
    %v654 = vpack.c.bf16 %v618, %v618
    %v655 = vpack.c.bf16 %v620, %v620
    %v656 = vpack.c.bf16 %v622, %v622
    %v657 = vpack.c.bf16 %v624, %v624
    %v658 = vpack.c.bf16 %v626, %v626
    %659 = vrot.lane.b32.xlu0 %v156, 64
    %v660 = vpop.permute.xlu0 %659
    %v662 = vsel %vm167, %v651, 0
    %vm664 = vcmask 1043456
    %v666 = vsel %vm664, %v660, 0
    %668 = vmatprep.subr.bf16.mxu0 0
    %669 = vmatpush1.bf16.msra.mxu0 %v666
    %670 = vmatprep.subr.bf16.mxu0 0
    %671 = vmatpush1.bf16.msra.mxu0 0
    %672 = vmatprep.subr.bf16.mxu0 0
    %673 = vmatpush1.bf16.msra.mxu0 0
    %674 = vmatprep.subr.bf16.mxu0 0
    %675 = vmatpush1.bf16.msra.mxu0 0
    %676 = vmatprep.subr.bf16.mxu0 0
    %677 = vmatpush1.bf16.msra.mxu0 0
    %678 = vmatprep.subr.bf16.mxu0 0
    %679 = vmatpush1.bf16.msra.mxu0 0
    %680 = vmatprep.subr.bf16.mxu0 0
    %681 = vmatpush1.bf16.msra.mxu0 0
    %682 = vmatprep.subr.bf16.mxu0 0
    %683 = vmatpush1.bf16.msra.mxu0 0
    %684 = vmatprep.subr.bf16.mxu0 0
    %685 = vmatpush1.bf16.msra.mxu0 0
    %686 = vmatprep.subr.bf16.mxu0 0
    %687 = vmatpush1.bf16.msra.mxu0 0
    %688 = vmatprep.subr.bf16.mxu0 0
    %689 = vmatpush1.bf16.msra.mxu0 0
    %690 = vmatprep.subr.bf16.mxu0 0
    %691 = vmatpush1.bf16.msra.mxu0 0
    %692 = vmatprep.subr.bf16.mxu0 0
    %693 = vmatpush1.bf16.msra.mxu0 0
    %694 = vmatprep.subr.bf16.mxu0 0
    %695 = vmatpush1.bf16.msra.mxu0 0
    %696 = vmatprep.subr.bf16.mxu0 0
    %697 = vmatpush1.bf16.msra.mxu0 0
    %698 = vmatprep.subr.bf16.mxu0 0
    %699 = vmatpush1.bf16.msra.mxu0 0
    %700 = vmatprep.mubr.bf16.mxu0 0
    %701 = vmatmul.mubr.bf16.gmra.mrb[0].mxu0 %v662
    %v702 = vpop.f32.mrb[0].mxu0
    %v703 = vadd.f32 0.0, %v702
    %v704 = vpop.f32.mrb[0].mxu0
    %v705 = vpop.f32.mrb[0].mxu0
    %v706 = vpop.f32.mrb[0].mxu0
    %707 = vdwg.mxu0
    %708 = vrot.lane.b32.xlu0 %v157, 64
    %v709 = vpop.permute.xlu0 %708
    %v711 = vsel %vm167, %v652, 0
    %v714 = vsel %vm664, %v709, 0
    %716 = vmatprep.subr.bf16.mxu0 0
    %717 = vmatpush1.bf16.msra.mxu0 %v714
    %718 = vmatprep.subr.bf16.mxu0 0
    %719 = vmatpush1.bf16.msra.mxu0 0
    %720 = vmatprep.subr.bf16.mxu0 0
    %721 = vmatpush1.bf16.msra.mxu0 0
    %722 = vmatprep.subr.bf16.mxu0 0
    %723 = vmatpush1.bf16.msra.mxu0 0
    %724 = vmatprep.subr.bf16.mxu0 0
    %725 = vmatpush1.bf16.msra.mxu0 0
    %726 = vmatprep.subr.bf16.mxu0 0
    %727 = vmatpush1.bf16.msra.mxu0 0
    %728 = vmatprep.subr.bf16.mxu0 0
    %729 = vmatpush1.bf16.msra.mxu0 0
    %730 = vmatprep.subr.bf16.mxu0 0
    %731 = vmatpush1.bf16.msra.mxu0 0
    %732 = vmatprep.subr.bf16.mxu0 0
    %733 = vmatpush1.bf16.msra.mxu0 0
    %734 = vmatprep.subr.bf16.mxu0 0
    %735 = vmatpush1.bf16.msra.mxu0 0
    %736 = vmatprep.subr.bf16.mxu0 0
    %737 = vmatpush1.bf16.msra.mxu0 0
    %738 = vmatprep.subr.bf16.mxu0 0
    %739 = vmatpush1.bf16.msra.mxu0 0
    %740 = vmatprep.subr.bf16.mxu0 0
    %741 = vmatpush1.bf16.msra.mxu0 0
    %742 = vmatprep.subr.bf16.mxu0 0
    %743 = vmatpush1.bf16.msra.mxu0 0
    %744 = vmatprep.subr.bf16.mxu0 0
    %745 = vmatpush1.bf16.msra.mxu0 0
    %746 = vmatprep.subr.bf16.mxu0 0
    %747 = vmatpush1.bf16.msra.mxu0 0
    %748 = vmatprep.mubr.bf16.mxu0 0
    %749 = vmatmul.mubr.bf16.gmra.mrb[0].mxu0 %v711
    %v750 = vpop.f32.mrb[0].mxu0
    %v751 = vadd.f32 0.0, %v750
    %v752 = vpop.f32.mrb[0].mxu0
    %v753 = vpop.f32.mrb[0].mxu0
    %v754 = vpop.f32.mrb[0].mxu0
    %755 = vdwg.mxu0
    %756 = vrot.lane.b32.xlu0 %v158, 64
    %v757 = vpop.permute.xlu0 %756
    %v759 = vsel %vm167, %v653, 0
    %v762 = vsel %vm664, %v757, 0
    %764 = vmatprep.subr.bf16.mxu0 0
    %765 = vmatpush1.bf16.msra.mxu0 %v762
    %766 = vmatprep.subr.bf16.mxu0 0
    %767 = vmatpush1.bf16.msra.mxu0 0
    %768 = vmatprep.subr.bf16.mxu0 0
    %769 = vmatpush1.bf16.msra.mxu0 0
    %770 = vmatprep.subr.bf16.mxu0 0
    %771 = vmatpush1.bf16.msra.mxu0 0
    %772 = vmatprep.subr.bf16.mxu0 0
    %773 = vmatpush1.bf16.msra.mxu0 0
    %774 = vmatprep.subr.bf16.mxu0 0
    %775 = vmatpush1.bf16.msra.mxu0 0
    %776 = vmatprep.subr.bf16.mxu0 0
    %777 = vmatpush1.bf16.msra.mxu0 0
    %778 = vmatprep.subr.bf16.mxu0 0
    %779 = vmatpush1.bf16.msra.mxu0 0
    %780 = vmatprep.subr.bf16.mxu0 0
    %781 = vmatpush1.bf16.msra.mxu0 0
    %782 = vmatprep.subr.bf16.mxu0 0
    %783 = vmatpush1.bf16.msra.mxu0 0
    %784 = vmatprep.subr.bf16.mxu0 0
    %785 = vmatpush1.bf16.msra.mxu0 0
    %786 = vmatprep.subr.bf16.mxu0 0
    %787 = vmatpush1.bf16.msra.mxu0 0
    %788 = vmatprep.subr.bf16.mxu0 0
    %789 = vmatpush1.bf16.msra.mxu0 0
    %790 = vmatprep.subr.bf16.mxu0 0
    %791 = vmatpush1.bf16.msra.mxu0 0
    %792 = vmatprep.subr.bf16.mxu0 0
    %793 = vmatpush1.bf16.msra.mxu0 0
    %794 = vmatprep.subr.bf16.mxu0 0
    %795 = vmatpush1.bf16.msra.mxu0 0
    %796 = vmatprep.mubr.bf16.mxu0 0
    %797 = vmatmul.mubr.bf16.gmra.mrb[0].mxu0 %v759
    %v798 = vpop.f32.mrb[0].mxu0
    %v799 = vadd.f32 0.0, %v798
    %v800 = vpop.f32.mrb[0].mxu0
    %v801 = vpop.f32.mrb[0].mxu0
    %v802 = vpop.f32.mrb[0].mxu0
    %803 = vdwg.mxu0
    %804 = vrot.lane.b32.xlu0 %v159, 64
    %v805 = vpop.permute.xlu0 %804
    %v807 = vsel %vm167, %v654, 0
    %v810 = vsel %vm664, %v805, 0
    %812 = vmatprep.subr.bf16.mxu0 0
    %813 = vmatpush1.bf16.msra.mxu0 %v810
    %814 = vmatprep.subr.bf16.mxu0 0
    %815 = vmatpush1.bf16.msra.mxu0 0
    %816 = vmatprep.subr.bf16.mxu0 0
    %817 = vmatpush1.bf16.msra.mxu0 0
    %818 = vmatprep.subr.bf16.mxu0 0
    %819 = vmatpush1.bf16.msra.mxu0 0
    %820 = vmatprep.subr.bf16.mxu0 0
    %821 = vmatpush1.bf16.msra.mxu0 0
    %822 = vmatprep.subr.bf16.mxu0 0
    %823 = vmatpush1.bf16.msra.mxu0 0
    %824 = vmatprep.subr.bf16.mxu0 0
    %825 = vmatpush1.bf16.msra.mxu0 0
    %826 = vmatprep.subr.bf16.mxu0 0
    %827 = vmatpush1.bf16.msra.mxu0 0
    %828 = vmatprep.subr.bf16.mxu0 0
    %829 = vmatpush1.bf16.msra.mxu0 0
    %830 = vmatprep.subr.bf16.mxu0 0
    %831 = vmatpush1.bf16.msra.mxu0 0
    %832 = vmatprep.subr.bf16.mxu0 0
    %833 = vmatpush1.bf16.msra.mxu0 0
    %834 = vmatprep.subr.bf16.mxu0 0
    %835 = vmatpush1.bf16.msra.mxu0 0
    %836 = vmatprep.subr.bf16.mxu0 0
    %837 = vmatpush1.bf16.msra.mxu0 0
    %838 = vmatprep.subr.bf16.mxu0 0
    %839 = vmatpush1.bf16.msra.mxu0 0
    %840 = vmatprep.subr.bf16.mxu0 0
    %841 = vmatpush1.bf16.msra.mxu0 0
    %842 = vmatprep.subr.bf16.mxu0 0
    %843 = vmatpush1.bf16.msra.mxu0 0
    %844 = vmatprep.mubr.bf16.mxu0 0
    %845 = vmatmul.mubr.bf16.gmra.mrb[0].mxu0 %v807
    %v846 = vpop.f32.mrb[0].mxu0
    %v847 = vadd.f32 0.0, %v846
    %v848 = vpop.f32.mrb[0].mxu0
    %v849 = vpop.f32.mrb[0].mxu0
    %v850 = vpop.f32.mrb[0].mxu0
    %851 = vdwg.mxu0
    %852 = vrot.lane.b32.xlu0 %v160, 64
    %v853 = vpop.permute.xlu0 %852
    %v855 = vsel %vm167, %v655, 0
    %v858 = vsel %vm664, %v853, 0
    %860 = vmatprep.subr.bf16.mxu0 0
    %861 = vmatpush1.bf16.msra.mxu0 %v858
    %862 = vmatprep.subr.bf16.mxu0 0
    %863 = vmatpush1.bf16.msra.mxu0 0
    %864 = vmatprep.subr.bf16.mxu0 0
    %865 = vmatpush1.bf16.msra.mxu0 0
    %866 = vmatprep.subr.bf16.mxu0 0
    %867 = vmatpush1.bf16.msra.mxu0 0
    %868 = vmatprep.subr.bf16.mxu0 0
    %869 = vmatpush1.bf16.msra.mxu0 0
    %870 = vmatprep.subr.bf16.mxu0 0
    %871 = vmatpush1.bf16.msra.mxu0 0
    %872 = vmatprep.subr.bf16.mxu0 0
    %873 = vmatpush1.bf16.msra.mxu0 0
    %874 = vmatprep.subr.bf16.mxu0 0
    %875 = vmatpush1.bf16.msra.mxu0 0
    %876 = vmatprep.subr.bf16.mxu0 0
    %877 = vmatpush1.bf16.msra.mxu0 0
    %878 = vmatprep.subr.bf16.mxu0 0
    %879 = vmatpush1.bf16.msra.mxu0 0
    %880 = vmatprep.subr.bf16.mxu0 0
    %881 = vmatpush1.bf16.msra.mxu0 0
    %882 = vmatprep.subr.bf16.mxu0 0
    %883 = vmatpush1.bf16.msra.mxu0 0
    %884 = vmatprep.subr.bf16.mxu0 0
    %885 = vmatpush1.bf16.msra.mxu0 0
    %886 = vmatprep.subr.bf16.mxu0 0
    %887 = vmatpush1.bf16.msra.mxu0 0
    %888 = vmatprep.subr.bf16.mxu0 0
    %889 = vmatpush1.bf16.msra.mxu0 0
    %890 = vmatprep.subr.bf16.mxu0 0
    %891 = vmatpush1.bf16.msra.mxu0 0
    %892 = vmatprep.mubr.bf16.mxu0 0
    %893 = vmatmul.mubr.bf16.gmra.mrb[0].mxu0 %v855
    %v894 = vpop.f32.mrb[0].mxu0
    %v895 = vadd.f32 0.0, %v894
    %v896 = vpop.f32.mrb[0].mxu0
    %v897 = vpop.f32.mrb[0].mxu0
    %v898 = vpop.f32.mrb[0].mxu0
    %899 = vdwg.mxu0
    %900 = vrot.lane.b32.xlu0 %v161, 64
    %v901 = vpop.permute.xlu0 %900
    %v903 = vsel %vm167, %v656, 0
    %v906 = vsel %vm664, %v901, 0
    %908 = vmatprep.subr.bf16.mxu0 0
    %909 = vmatpush1.bf16.msra.mxu0 %v906
    %910 = vmatprep.subr.bf16.mxu0 0
    %911 = vmatpush1.bf16.msra.mxu0 0
    %912 = vmatprep.subr.bf16.mxu0 0
    %913 = vmatpush1.bf16.msra.mxu0 0
    %914 = vmatprep.subr.bf16.mxu0 0
    %915 = vmatpush1.bf16.msra.mxu0 0
    %916 = vmatprep.subr.bf16.mxu0 0
    %917 = vmatpush1.bf16.msra.mxu0 0
    %918 = vmatprep.subr.bf16.mxu0 0
    %919 = vmatpush1.bf16.msra.mxu0 0
    %920 = vmatprep.subr.bf16.mxu0 0
    %921 = vmatpush1.bf16.msra.mxu0 0
    %922 = vmatprep.subr.bf16.mxu0 0
    %923 = vmatpush1.bf16.msra.mxu0 0
    %924 = vmatprep.subr.bf16.mxu0 0
    %925 = vmatpush1.bf16.msra.mxu0 0
    %926 = vmatprep.subr.bf16.mxu0 0
    %927 = vmatpush1.bf16.msra.mxu0 0
    %928 = vmatprep.subr.bf16.mxu0 0
    %929 = vmatpush1.bf16.msra.mxu0 0
    %930 = vmatprep.subr.bf16.mxu0 0
    %931 = vmatpush1.bf16.msra.mxu0 0
    %932 = vmatprep.subr.bf16.mxu0 0
    %933 = vmatpush1.bf16.msra.mxu0 0
    %934 = vmatprep.subr.bf16.mxu0 0
    %935 = vmatpush1.bf16.msra.mxu0 0
    %936 = vmatprep.subr.bf16.mxu0 0
    %937 = vmatpush1.bf16.msra.mxu0 0
    %938 = vmatprep.subr.bf16.mxu0 0
    %939 = vmatpush1.bf16.msra.mxu0 0
    %940 = vmatprep.mubr.bf16.mxu0 0
    %941 = vmatmul.mubr.bf16.gmra.mrb[0].mxu0 %v903
    %v942 = vpop.f32.mrb[0].mxu0
    %v943 = vadd.f32 0.0, %v942
    %v944 = vpop.f32.mrb[0].mxu0
    %v945 = vpop.f32.mrb[0].mxu0
    %v946 = vpop.f32.mrb[0].mxu0
    %947 = vdwg.mxu0
    %948 = vrot.lane.b32.xlu0 %v162, 64
    %v949 = vpop.permute.xlu0 %948
    %v951 = vsel %vm167, %v657, 0
    %v954 = vsel %vm664, %v949, 0
    %956 = vmatprep.subr.bf16.mxu0 0
    %957 = vmatpush1.bf16.msra.mxu0 %v954
    %958 = vmatprep.subr.bf16.mxu0 0
    %959 = vmatpush1.bf16.msra.mxu0 0
    %960 = vmatprep.subr.bf16.mxu0 0
    %961 = vmatpush1.bf16.msra.mxu0 0
    %962 = vmatprep.subr.bf16.mxu0 0
    %963 = vmatpush1.bf16.msra.mxu0 0
    %964 = vmatprep.subr.bf16.mxu0 0
    %965 = vmatpush1.bf16.msra.mxu0 0
    %966 = vmatprep.subr.bf16.mxu0 0
    %967 = vmatpush1.bf16.msra.mxu0 0
    %968 = vmatprep.subr.bf16.mxu0 0
    %969 = vmatpush1.bf16.msra.mxu0 0
    %970 = vmatprep.subr.bf16.mxu0 0
    %971 = vmatpush1.bf16.msra.mxu0 0
    %972 = vmatprep.subr.bf16.mxu0 0
    %973 = vmatpush1.bf16.msra.mxu0 0
    %974 = vmatprep.subr.bf16.mxu0 0
    %975 = vmatpush1.bf16.msra.mxu0 0
    %976 = vmatprep.subr.bf16.mxu0 0
    %977 = vmatpush1.bf16.msra.mxu0 0
    %978 = vmatprep.subr.bf16.mxu0 0
    %979 = vmatpush1.bf16.msra.mxu0 0
    %980 = vmatprep.subr.bf16.mxu0 0
    %981 = vmatpush1.bf16.msra.mxu0 0
    %982 = vmatprep.subr.bf16.mxu0 0
    %983 = vmatpush1.bf16.msra.mxu0 0
    %984 = vmatprep.subr.bf16.mxu0 0
    %985 = vmatpush1.bf16.msra.mxu0 0
    %986 = vmatprep.subr.bf16.mxu0 0
    %987 = vmatpush1.bf16.msra.mxu0 0
    %988 = vmatprep.mubr.bf16.mxu0 0
    %989 = vmatmul.mubr.bf16.gmra.mrb[0].mxu0 %v951
    %v990 = vpop.f32.mrb[0].mxu0
    %v991 = vadd.f32 0.0, %v990
    %v992 = vpop.f32.mrb[0].mxu0
    %v993 = vpop.f32.mrb[0].mxu0
    %v994 = vpop.f32.mrb[0].mxu0
    %995 = vdwg.mxu0
    %996 = vrot.lane.b32.xlu0 %v163, 64
    %v997 = vpop.permute.xlu0 %996
    %v999 = vsel %vm167, %v658, 0
    %v1002 = vsel %vm664, %v997, 0
    %1004 = vmatprep.subr.bf16.mxu0 0
    %1005 = vmatpush1.bf16.msra.mxu0 %v1002
    %1006 = vmatprep.subr.bf16.mxu0 0
    %1007 = vmatpush1.bf16.msra.mxu0 0
    %1008 = vmatprep.subr.bf16.mxu0 0
    %1009 = vmatpush1.bf16.msra.mxu0 0
    %1010 = vmatprep.subr.bf16.mxu0 0
    %1011 = vmatpush1.bf16.msra.mxu0 0
    %1012 = vmatprep.subr.bf16.mxu0 0
    %1013 = vmatpush1.bf16.msra.mxu0 0
    %1014 = vmatprep.subr.bf16.mxu0 0
    %1015 = vmatpush1.bf16.msra.mxu0 0
    %1016 = vmatprep.subr.bf16.mxu0 0
    %1017 = vmatpush1.bf16.msra.mxu0 0
    %1018 = vmatprep.subr.bf16.mxu0 0
    %1019 = vmatpush1.bf16.msra.mxu0 0
    %1020 = vmatprep.subr.bf16.mxu0 0
    %1021 = vmatpush1.bf16.msra.mxu0 0
    %1022 = vmatprep.subr.bf16.mxu0 0
    %1023 = vmatpush1.bf16.msra.mxu0 0
    %1024 = vmatprep.subr.bf16.mxu0 0
    %1025 = vmatpush1.bf16.msra.mxu0 0
    %1026 = vmatprep.subr.bf16.mxu0 0
    %1027 = vmatpush1.bf16.msra.mxu0 0
    %1028 = vmatprep.subr.bf16.mxu0 0
    %1029 = vmatpush1.bf16.msra.mxu0 0
    %1030 = vmatprep.subr.bf16.mxu0 0
    %1031 = vmatpush1.bf16.msra.mxu0 0
    %1032 = vmatprep.subr.bf16.mxu0 0
    %1033 = vmatpush1.bf16.msra.mxu0 0
    %1034 = vmatprep.subr.bf16.mxu0 0
    %1035 = vmatpush1.bf16.msra.mxu0 0
    %1036 = vmatprep.mubr.bf16.mxu0 0
    %1037 = vmatmul.mubr.bf16.gmra.mrb[0].mxu0 %v999
    %v1038 = vpop.f32.mrb[0].mxu0
    %v1039 = vadd.f32 0.0, %v1038
    %v1040 = vpop.f32.mrb[0].mxu0
    %v1041 = vpop.f32.mrb[0].mxu0
    %v1042 = vpop.f32.mrb[0].mxu0
    %1043 = vdwg.mxu0
    %v1044 = vadd.f32 %v629, 1e-16
    %v1045 = vadd.f32 %v632, 1e-16
    %v1046 = vadd.f32 %v635, 1e-16
    %v1047 = vadd.f32 %v638, 1e-16
    %v1048 = vadd.f32 %v641, 1e-16
    %v1049 = vadd.f32 %v644, 1e-16
    %v1050 = vadd.f32 %v647, 1e-16
    %v1051 = vadd.f32 %v650, 1e-16
    %v1052 = vrcp.pop %v1044
    %v1053 = vrcp.pop %v1045
    %v1054 = vrcp.pop %v1046
    %v1055 = vrcp.pop %v1047
    %v1056 = vrcp.pop %v1048
    %v1057 = vrcp.pop %v1049
    %v1058 = vrcp.pop %v1050
    %v1059 = vrcp.pop %v1051
    %v1060 = vmul.f32 %v703, %v1052
    %v1061 = vmul.f32 %v751, %v1053
    %v1062 = vmul.f32 %v799, %v1054
    %v1063 = vmul.f32 %v847, %v1055
    %v1064 = vmul.f32 %v895, %v1056
    %v1065 = vmul.f32 %v943, %v1057
    %v1066 = vmul.f32 %v991, %v1058
    %v1067 = vmul.f32 %v1039, %v1059
    %v1068 = vadd.f32 %v130, %v1060
    %v1069 = vadd.f32 %v133, %v1061
    %v1070 = vadd.f32 %v139, %v1062
    %v1071 = vadd.f32 %v141, %v1063
    %v1072 = vadd.f32 %v145, %v1064
    %v1073 = vadd.f32 %v147, %v1065
    %v1074 = vadd.f32 %v151, %v1066
    %v1075 = vadd.f32 %v153, %v1067
    %1078 = vrot.lane.b32.xlu0 %v1070, 8
    %v1079 = vpop.permute.xlu0 %1078
    %1080 = vrot.lane.b32.xlu0 %v1071, 8
    %v1081 = vpop.permute.xlu0 %1080
    %1086 = vrot.lane.b32.xlu0 %v1072, 16
    %v1087 = vpop.permute.xlu0 %1086
    %1088 = vrot.lane.b32.xlu0 %v1073, 16
    %v1089 = vpop.permute.xlu0 %1088
    %1094 = vrot.lane.b32.xlu0 %v1074, 24
    %v1095 = vpop.permute.xlu0 %1094
    %1096 = vrot.lane.b32.xlu0 %v1075, 24
    %v1097 = vpop.permute.xlu0 %1096
    %v1100 = vsel %vm167, %v1068, %v1079
    %v1101 = vsel %vm167, %v1069, %v1081
    %vm1102 = vcmask 130048
    %v1103 = vsel %vm1102, %v1100, %v1087
    %v1104 = vsel %vm1102, %v1101, %v1089
    %vm1105 = vcmask 195584
    %v1106 = vsel %vm1105, %v1103, %v1095
    %v1107 = vsel %vm1105, %v1104, %v1097
    %v1108 = vpack.c.bf16 %v1107, %v1106
    %v1110 = vlaneseq
    %v1111 = vshrl.u32 %v1110, 7
    %v1112 = vsub.s32 0, %v1111
    %v1113 = vrot.slane %v79, %v1112
    %v1119 = vunpack.c.l.b16 %v75
    %v1120 = vunpack.c.l.b16 %v76
    %v1121 = vunpack.c.l.b16 %v77
    %v1122 = vunpack.c.l.b16 %v78
    %v1123 = vpack.c.b16 %v1120, %v1119
    %v1124 = vpack.c.b16 %v1122, %v1121
    %vm1127 = vcmask 261120
    %v1129 = vsel %vm1127, %v1108, 0
    %1131 = vmatprep.subr.bf16.mxu0 0
    %1132 = vmatpush1.bf16.msra.mxu0 %v1123
    %1133 = vmatprep.subr.bf16.mxu0 0
    %1134 = vmatpush1.bf16.msra.mxu0 %v1124
    %1135 = vmatprep.subr.bf16.mxu0 0
    %1136 = vmatpush1.bf16.msra.mxu0 0
    %1137 = vmatprep.subr.bf16.mxu0 0
    %1138 = vmatpush1.bf16.msra.mxu0 0
    %1139 = vmatprep.subr.bf16.mxu0 0
    %1140 = vmatpush1.bf16.msra.mxu0 0
    %1141 = vmatprep.subr.bf16.mxu0 0
    %1142 = vmatpush1.bf16.msra.mxu0 0
    %1143 = vmatprep.subr.bf16.mxu0 0
    %1144 = vmatpush1.bf16.msra.mxu0 0
    %1145 = vmatprep.subr.bf16.mxu0 0
    %1146 = vmatpush1.bf16.msra.mxu0 0
    %1147 = vmatprep.subr.bf16.mxu0 0
    %1148 = vmatpush1.bf16.msra.mxu0 0
    %1149 = vmatprep.subr.bf16.mxu0 0
    %1150 = vmatpush1.bf16.msra.mxu0 0
    %1151 = vmatprep.subr.bf16.mxu0 0
    %1152 = vmatpush1.bf16.msra.mxu0 0
    %1153 = vmatprep.subr.bf16.mxu0 0
    %1154 = vmatpush1.bf16.msra.mxu0 0
    %1155 = vmatprep.subr.bf16.mxu0 0
    %1156 = vmatpush1.bf16.msra.mxu0 0
    %1157 = vmatprep.subr.bf16.mxu0 0
    %1158 = vmatpush1.bf16.msra.mxu0 0
    %1159 = vmatprep.subr.bf16.mxu0 0
    %1160 = vmatpush1.bf16.msra.mxu0 0
    %1161 = vmatprep.subr.bf16.mxu0 0
    %1162 = vmatpush1.bf16.msra.mxu0 0
    %1163 = vmatprep.mubr.bf16.mxu0 0
    %1164 = vmatmul.mubr.bf16.gmra.mrb[0].mxu0 %v1129
    %v1165 = vpop.f32.mrb[0].mxu0
    %v1166 = vadd.f32 %v1113, %v1165
    %v1167 = vpop.f32.mrb[0].mxu0
    %v1168 = vpop.f32.mrb[0].mxu0
    %v1169 = vadd.f32 %v1113, %v1168
    %v1170 = vpop.f32.mrb[0].mxu0
    %1171 = vdwg.mxu0
    %v1172 = vmax.f32 %v1166, 0.0
    %v1173 = vmax.f32 %v1169, 0.0
    %v1174 = vadd.f32 %v1106, %v1172
    %v1175 = vadd.f32 %v1107, %v1173
    %1177 = vset.pattern.permute.xlu0 0
    %1178 = vperm.xlu0 %1177, %v71
    %v1179 = vpop.permute.xlu0 %1178
    %1182 = vset.pattern.permute.xlu0 0
    %1183 = vperm.xlu0 %1182, %v72
    %v1184 = vpop.permute.xlu0 %1183
    %v1186 = vmul.f32 %v1174, %v1179
    %v1187 = vmul.f32 %v1175, %v1184
    %v1188 = vld [vmem:[%s7] sm:$0xf]
    %v1189 = vld [vmem:[%s7 + $0x4] sm:$0xf]
    %v1190 = vld [vmem:[%s7 + $0x8] sm:$0xf]
    %v1191 = vld [vmem:[%s7 + $0xc] sm:$0xf]
    %v1192 = vld [vmem:[%s8] sm:$0x1]
    %v1193 = vld [vmem:[%s9] sm:$0xf]
    %v1194 = vld [vmem:[%s9 + $0x4] sm:$0xf]
    %v1195 = vld [vmem:[%s9 + $0x8] sm:$0xf]
    %v1196 = vld [vmem:[%s9 + $0xc] sm:$0xf]
    %v1197 = vld [vmem:[%s10] sm:$0x1]
    %v1198 = vpack.c.bf16 %v1187, %v1186
    %v1200 = vlaneseq
    %v1201 = vshrl.u32 %v1200, 7
    %v1202 = vsub.s32 0, %v1201
    %v1203 = vrot.slane %v1192, %v1202
    %v1209 = vunpack.c.l.b16 %v1188
    %v1210 = vunpack.c.l.b16 %v1189
    %v1211 = vunpack.c.l.b16 %v1190
    %v1212 = vunpack.c.l.b16 %v1191
    %v1213 = vpack.c.b16 %v1210, %v1209
    %v1214 = vpack.c.b16 %v1212, %v1211
    %v1218 = vsel %vm1127, %v1198, 0
    %1220 = vmatprep.subr.bf16.mxu0 0
    %1221 = vmatpush1.bf16.msra.mxu0 %v1213
    %1222 = vmatprep.subr.bf16.mxu0 0
    %1223 = vmatpush1.bf16.msra.mxu0 %v1214
    %1224 = vmatprep.subr.bf16.mxu0 0
    %1225 = vmatpush1.bf16.msra.mxu0 0
    %1226 = vmatprep.subr.bf16.mxu0 0
    %1227 = vmatpush1.bf16.msra.mxu0 0
    %1228 = vmatprep.subr.bf16.mxu0 0
    %1229 = vmatpush1.bf16.msra.mxu0 0
    %1230 = vmatprep.subr.bf16.mxu0 0
    %1231 = vmatpush1.bf16.msra.mxu0 0
    %1232 = vmatprep.subr.bf16.mxu0 0
    %1233 = vmatpush1.bf16.msra.mxu0 0
    %1234 = vmatprep.subr.bf16.mxu0 0
    %1235 = vmatpush1.bf16.msra.mxu0 0
    %1236 = vmatprep.subr.bf16.mxu0 0
    %1237 = vmatpush1.bf16.msra.mxu0 0
    %1238 = vmatprep.subr.bf16.mxu0 0
    %1239 = vmatpush1.bf16.msra.mxu0 0
    %1240 = vmatprep.subr.bf16.mxu0 0
    %1241 = vmatpush1.bf16.msra.mxu0 0
    %1242 = vmatprep.subr.bf16.mxu0 0
    %1243 = vmatpush1.bf16.msra.mxu0 0
    %1244 = vmatprep.subr.bf16.mxu0 0
    %1245 = vmatpush1.bf16.msra.mxu0 0
    %1246 = vmatprep.subr.bf16.mxu0 0
    %1247 = vmatpush1.bf16.msra.mxu0 0
    %1248 = vmatprep.subr.bf16.mxu0 0
    %1249 = vmatpush1.bf16.msra.mxu0 0
    %1250 = vmatprep.subr.bf16.mxu0 0
    %1251 = vmatpush1.bf16.msra.mxu0 0
    %1252 = vmatprep.mubr.bf16.mxu0 0
    %1253 = vmatmul.mubr.bf16.gmra.mrb[0].mxu0 %v1218
    %v1254 = vpop.f32.mrb[0].mxu0
    %v1255 = vadd.f32 %v1203, %v1254
    %v1256 = vpop.f32.mrb[0].mxu0
    %v1257 = vpop.f32.mrb[0].mxu0
    %v1258 = vadd.f32 %v1203, %v1257
    %v1259 = vpop.f32.mrb[0].mxu0
    %1260 = vdwg.mxu0
    %1263 = vrot.lane.b32.xlu0 %v1255, 120
    %v1264 = vpop.permute.xlu0 %1263
    %1265 = vrot.lane.b32.xlu0 %v1258, 120
    %v1266 = vpop.permute.xlu0 %1265
    %1269 = vrot.lane.b32.xlu0 %v1255, 112
    %v1270 = vpop.permute.xlu0 %1269
    %1271 = vrot.lane.b32.xlu0 %v1258, 112
    %v1272 = vpop.permute.xlu0 %1271
    %1275 = vrot.lane.b32.xlu0 %v1255, 104
    %v1276 = vpop.permute.xlu0 %1275
    %1277 = vrot.lane.b32.xlu0 %v1258, 104
    %v1278 = vpop.permute.xlu0 %1277
    %v1281 = vpack.c.bf16 %v1255, %v1255
    %v1282 = vpack.c.bf16 %v1258, %v1258
    %v1283 = vpack.c.bf16 %v1264, %v1264
    %v1284 = vpack.c.bf16 %v1266, %v1266
    %v1285 = vpack.c.bf16 %v1270, %v1270
    %v1286 = vpack.c.bf16 %v1272, %v1272
    %v1287 = vpack.c.bf16 %v1276, %v1276
    %v1288 = vpack.c.bf16 %v1278, %v1278
    %1290 = vrot.lane.b32.xlu0 %v1281, 96
    %v1291 = vpop.permute.xlu0 %1290
    %v1293 = vsel %vm167, %v1281, 0
    %v1296 = vsel %vm167, %v1291, 0
    %1298 = vmatprep.subr.bf16.mxu0 0
    %1299 = vmatpush1.bf16.xpose.msra.mxu0 %v1296
    %1300 = vmatprep.subr.bf16.mxu0 0
    %1301 = vmatpush1.bf16.xpose.msra.mxu0 0
    %1302 = vmatprep.subr.bf16.mxu0 0
    %1303 = vmatpush1.bf16.xpose.msra.mxu0 0
    %1304 = vmatprep.subr.bf16.mxu0 0
    %1305 = vmatpush1.bf16.xpose.msra.mxu0 0
    %1306 = vmatprep.subr.bf16.mxu0 0
    %1307 = vmatpush1.bf16.xpose.msra.mxu0 0
    %1308 = vmatprep.subr.bf16.mxu0 0
    %1309 = vmatpush1.bf16.xpose.msra.mxu0 0
    %1310 = vmatprep.subr.bf16.mxu0 0
    %1311 = vmatpush1.bf16.xpose.msra.mxu0 0
    %1312 = vmatprep.subr.bf16.mxu0 0
    %1313 = vmatpush1.bf16.xpose.msra.mxu0 0
    %1314 = vmatprep.subr.bf16.mxu0 0
    %1315 = vmatpush1.bf16.xpose.msra.mxu0 0
    %1316 = vmatprep.subr.bf16.mxu0 0
    %1317 = vmatpush1.bf16.xpose.msra.mxu0 0
    %1318 = vmatprep.subr.bf16.mxu0 0
    %1319 = vmatpush1.bf16.xpose.msra.mxu0 0
    %1320 = vmatprep.subr.bf16.mxu0 0
    %1321 = vmatpush1.bf16.xpose.msra.mxu0 0
    %1322 = vmatprep.subr.bf16.mxu0 0
    %1323 = vmatpush1.bf16.xpose.msra.mxu0 0
    %1324 = vmatprep.subr.bf16.mxu0 0
    %1325 = vmatpush1.bf16.xpose.msra.mxu0 0
    %1326 = vmatprep.subr.bf16.mxu0 0
    %1327 = vmatpush1.bf16.xpose.msra.mxu0 0
    %1328 = vmatprep.subr.bf16.mxu0 0
    %1329 = vmatpush1.bf16.xpose.msra.mxu0 0
    %1330 = vmatprep.mubr.bf16.mxu0 0
    %1331 = vmatmul.mubr.bf16.gmra.mrb[0].mxu0 %v1293
    %v1332 = vpop.f32.mrb[0].mxu0
    %v1333 = vadd.f32 0.0, %v1332
    %v1334 = vpop.f32.mrb[0].mxu0
    %v1335 = vpop.f32.mrb[0].mxu0
    %v1336 = vpop.f32.mrb[0].mxu0
    %1337 = vdwg.mxu0
    %1339 = vrot.lane.b32.xlu0 %v1282, 96
    %v1340 = vpop.permute.xlu0 %1339
    %v1342 = vsel %vm167, %v1282, 0
    %v1345 = vsel %vm167, %v1340, 0
    %1347 = vmatprep.subr.bf16.mxu0 0
    %1348 = vmatpush1.bf16.xpose.msra.mxu0 %v1345
    %1349 = vmatprep.subr.bf16.mxu0 0
    %1350 = vmatpush1.bf16.xpose.msra.mxu0 0
    %1351 = vmatprep.subr.bf16.mxu0 0
    %1352 = vmatpush1.bf16.xpose.msra.mxu0 0
    %1353 = vmatprep.subr.bf16.mxu0 0
    %1354 = vmatpush1.bf16.xpose.msra.mxu0 0
    %1355 = vmatprep.subr.bf16.mxu0 0
    %1356 = vmatpush1.bf16.xpose.msra.mxu0 0
    %1357 = vmatprep.subr.bf16.mxu0 0
    %1358 = vmatpush1.bf16.xpose.msra.mxu0 0
    %1359 = vmatprep.subr.bf16.mxu0 0
    %1360 = vmatpush1.bf16.xpose.msra.mxu0 0
    %1361 = vmatprep.subr.bf16.mxu0 0
    %1362 = vmatpush1.bf16.xpose.msra.mxu0 0
    %1363 = vmatprep.subr.bf16.mxu0 0
    %1364 = vmatpush1.bf16.xpose.msra.mxu0 0
    %1365 = vmatprep.subr.bf16.mxu0 0
    %1366 = vmatpush1.bf16.xpose.msra.mxu0 0
    %1367 = vmatprep.subr.bf16.mxu0 0
    %1368 = vmatpush1.bf16.xpose.msra.mxu0 0
    %1369 = vmatprep.subr.bf16.mxu0 0
    %1370 = vmatpush1.bf16.xpose.msra.mxu0 0
    %1371 = vmatprep.subr.bf16.mxu0 0
    %1372 = vmatpush1.bf16.xpose.msra.mxu0 0
    %1373 = vmatprep.subr.bf16.mxu0 0
    %1374 = vmatpush1.bf16.xpose.msra.mxu0 0
    %1375 = vmatprep.subr.bf16.mxu0 0
    %1376 = vmatpush1.bf16.xpose.msra.mxu0 0
    %1377 = vmatprep.subr.bf16.mxu0 0
    %1378 = vmatpush1.bf16.xpose.msra.mxu0 0
    %1379 = vmatprep.mubr.bf16.mxu0 0
    %1380 = vmatmul.mubr.bf16.gmra.mrb[0].mxu0 %v1342
    %v1381 = vpop.f32.mrb[0].mxu0
    %v1382 = vadd.f32 0.0, %v1381
    %v1383 = vpop.f32.mrb[0].mxu0
    %v1384 = vpop.f32.mrb[0].mxu0
    %v1385 = vpop.f32.mrb[0].mxu0
    %1386 = vdwg.mxu0
    %1388 = vrot.lane.b32.xlu0 %v1283, 96
    %v1389 = vpop.permute.xlu0 %1388
    %v1391 = vsel %vm167, %v1283, 0
    %v1394 = vsel %vm167, %v1389, 0
    %1396 = vmatprep.subr.bf16.mxu0 0
    %1397 = vmatpush1.bf16.xpose.msra.mxu0 %v1394
    %1398 = vmatprep.subr.bf16.mxu0 0
    %1399 = vmatpush1.bf16.xpose.msra.mxu0 0
    %1400 = vmatprep.subr.bf16.mxu0 0
    %1401 = vmatpush1.bf16.xpose.msra.mxu0 0
    %1402 = vmatprep.subr.bf16.mxu0 0
    %1403 = vmatpush1.bf16.xpose.msra.mxu0 0
    %1404 = vmatprep.subr.bf16.mxu0 0
    %1405 = vmatpush1.bf16.xpose.msra.mxu0 0
    %1406 = vmatprep.subr.bf16.mxu0 0
    %1407 = vmatpush1.bf16.xpose.msra.mxu0 0
    %1408 = vmatprep.subr.bf16.mxu0 0
    %1409 = vmatpush1.bf16.xpose.msra.mxu0 0
    %1410 = vmatprep.subr.bf16.mxu0 0
    %1411 = vmatpush1.bf16.xpose.msra.mxu0 0
    %1412 = vmatprep.subr.bf16.mxu0 0
    %1413 = vmatpush1.bf16.xpose.msra.mxu0 0
    %1414 = vmatprep.subr.bf16.mxu0 0
    %1415 = vmatpush1.bf16.xpose.msra.mxu0 0
    %1416 = vmatprep.subr.bf16.mxu0 0
    %1417 = vmatpush1.bf16.xpose.msra.mxu0 0
    %1418 = vmatprep.subr.bf16.mxu0 0
    %1419 = vmatpush1.bf16.xpose.msra.mxu0 0
    %1420 = vmatprep.subr.bf16.mxu0 0
    %1421 = vmatpush1.bf16.xpose.msra.mxu0 0
    %1422 = vmatprep.subr.bf16.mxu0 0
    %1423 = vmatpush1.bf16.xpose.msra.mxu0 0
    %1424 = vmatprep.subr.bf16.mxu0 0
    %1425 = vmatpush1.bf16.xpose.msra.mxu0 0
    %1426 = vmatprep.subr.bf16.mxu0 0
    %1427 = vmatpush1.bf16.xpose.msra.mxu0 0
    %1428 = vmatprep.mubr.bf16.mxu0 0
    %1429 = vmatmul.mubr.bf16.gmra.mrb[0].mxu0 %v1391
    %v1430 = vpop.f32.mrb[0].mxu0
    %v1431 = vadd.f32 0.0, %v1430
    %v1432 = vpop.f32.mrb[0].mxu0
    %v1433 = vpop.f32.mrb[0].mxu0
    %v1434 = vpop.f32.mrb[0].mxu0
    %1435 = vdwg.mxu0
    %1437 = vrot.lane.b32.xlu0 %v1284, 96
    %v1438 = vpop.permute.xlu0 %1437
    %v1440 = vsel %vm167, %v1284, 0
    %v1443 = vsel %vm167, %v1438, 0
    %1445 = vmatprep.subr.bf16.mxu0 0
    %1446 = vmatpush1.bf16.xpose.msra.mxu0 %v1443
    %1447 = vmatprep.subr.bf16.mxu0 0
    %1448 = vmatpush1.bf16.xpose.msra.mxu0 0
    %1449 = vmatprep.subr.bf16.mxu0 0
    %1450 = vmatpush1.bf16.xpose.msra.mxu0 0
    %1451 = vmatprep.subr.bf16.mxu0 0
    %1452 = vmatpush1.bf16.xpose.msra.mxu0 0
    %1453 = vmatprep.subr.bf16.mxu0 0
    %1454 = vmatpush1.bf16.xpose.msra.mxu0 0
    %1455 = vmatprep.subr.bf16.mxu0 0
    %1456 = vmatpush1.bf16.xpose.msra.mxu0 0
    %1457 = vmatprep.subr.bf16.mxu0 0
    %1458 = vmatpush1.bf16.xpose.msra.mxu0 0
    %1459 = vmatprep.subr.bf16.mxu0 0
    %1460 = vmatpush1.bf16.xpose.msra.mxu0 0
    %1461 = vmatprep.subr.bf16.mxu0 0
    %1462 = vmatpush1.bf16.xpose.msra.mxu0 0
    %1463 = vmatprep.subr.bf16.mxu0 0
    %1464 = vmatpush1.bf16.xpose.msra.mxu0 0
    %1465 = vmatprep.subr.bf16.mxu0 0
    %1466 = vmatpush1.bf16.xpose.msra.mxu0 0
    %1467 = vmatprep.subr.bf16.mxu0 0
    %1468 = vmatpush1.bf16.xpose.msra.mxu0 0
    %1469 = vmatprep.subr.bf16.mxu0 0
    %1470 = vmatpush1.bf16.xpose.msra.mxu0 0
    %1471 = vmatprep.subr.bf16.mxu0 0
    %1472 = vmatpush1.bf16.xpose.msra.mxu0 0
    %1473 = vmatprep.subr.bf16.mxu0 0
    %1474 = vmatpush1.bf16.xpose.msra.mxu0 0
    %1475 = vmatprep.subr.bf16.mxu0 0
    %1476 = vmatpush1.bf16.xpose.msra.mxu0 0
    %1477 = vmatprep.mubr.bf16.mxu0 0
    %1478 = vmatmul.mubr.bf16.gmra.mrb[0].mxu0 %v1440
    %v1479 = vpop.f32.mrb[0].mxu0
    %v1480 = vadd.f32 0.0, %v1479
    %v1481 = vpop.f32.mrb[0].mxu0
    %v1482 = vpop.f32.mrb[0].mxu0
    %v1483 = vpop.f32.mrb[0].mxu0
    %1484 = vdwg.mxu0
    %1486 = vrot.lane.b32.xlu0 %v1285, 96
    %v1487 = vpop.permute.xlu0 %1486
    %v1489 = vsel %vm167, %v1285, 0
    %v1492 = vsel %vm167, %v1487, 0
    %1494 = vmatprep.subr.bf16.mxu0 0
    %1495 = vmatpush1.bf16.xpose.msra.mxu0 %v1492
    %1496 = vmatprep.subr.bf16.mxu0 0
    %1497 = vmatpush1.bf16.xpose.msra.mxu0 0
    %1498 = vmatprep.subr.bf16.mxu0 0
    %1499 = vmatpush1.bf16.xpose.msra.mxu0 0
    %1500 = vmatprep.subr.bf16.mxu0 0
    %1501 = vmatpush1.bf16.xpose.msra.mxu0 0
    %1502 = vmatprep.subr.bf16.mxu0 0
    %1503 = vmatpush1.bf16.xpose.msra.mxu0 0
    %1504 = vmatprep.subr.bf16.mxu0 0
    %1505 = vmatpush1.bf16.xpose.msra.mxu0 0
    %1506 = vmatprep.subr.bf16.mxu0 0
    %1507 = vmatpush1.bf16.xpose.msra.mxu0 0
    %1508 = vmatprep.subr.bf16.mxu0 0
    %1509 = vmatpush1.bf16.xpose.msra.mxu0 0
    %1510 = vmatprep.subr.bf16.mxu0 0
    %1511 = vmatpush1.bf16.xpose.msra.mxu0 0
    %1512 = vmatprep.subr.bf16.mxu0 0
    %1513 = vmatpush1.bf16.xpose.msra.mxu0 0
    %1514 = vmatprep.subr.bf16.mxu0 0
    %1515 = vmatpush1.bf16.xpose.msra.mxu0 0
    %1516 = vmatprep.subr.bf16.mxu0 0
    %1517 = vmatpush1.bf16.xpose.msra.mxu0 0
    %1518 = vmatprep.subr.bf16.mxu0 0
    %1519 = vmatpush1.bf16.xpose.msra.mxu0 0
    %1520 = vmatprep.subr.bf16.mxu0 0
    %1521 = vmatpush1.bf16.xpose.msra.mxu0 0
    %1522 = vmatprep.subr.bf16.mxu0 0
    %1523 = vmatpush1.bf16.xpose.msra.mxu0 0
    %1524 = vmatprep.subr.bf16.mxu0 0
    %1525 = vmatpush1.bf16.xpose.msra.mxu0 0
    %1526 = vmatprep.mubr.bf16.mxu0 0
    %1527 = vmatmul.mubr.bf16.gmra.mrb[0].mxu0 %v1489
    %v1528 = vpop.f32.mrb[0].mxu0
    %v1529 = vadd.f32 0.0, %v1528
    %v1530 = vpop.f32.mrb[0].mxu0
    %v1531 = vpop.f32.mrb[0].mxu0
    %v1532 = vpop.f32.mrb[0].mxu0
    %1533 = vdwg.mxu0
    %1535 = vrot.lane.b32.xlu0 %v1286, 96
    %v1536 = vpop.permute.xlu0 %1535
    %v1538 = vsel %vm167, %v1286, 0
    %v1541 = vsel %vm167, %v1536, 0
    %1543 = vmatprep.subr.bf16.mxu0 0
    %1544 = vmatpush1.bf16.xpose.msra.mxu0 %v1541
    %1545 = vmatprep.subr.bf16.mxu0 0
    %1546 = vmatpush1.bf16.xpose.msra.mxu0 0
    %1547 = vmatprep.subr.bf16.mxu0 0
    %1548 = vmatpush1.bf16.xpose.msra.mxu0 0
    %1549 = vmatprep.subr.bf16.mxu0 0
    %1550 = vmatpush1.bf16.xpose.msra.mxu0 0
    %1551 = vmatprep.subr.bf16.mxu0 0
    %1552 = vmatpush1.bf16.xpose.msra.mxu0 0
    %1553 = vmatprep.subr.bf16.mxu0 0
    %1554 = vmatpush1.bf16.xpose.msra.mxu0 0
    %1555 = vmatprep.subr.bf16.mxu0 0
    %1556 = vmatpush1.bf16.xpose.msra.mxu0 0
    %1557 = vmatprep.subr.bf16.mxu0 0
    %1558 = vmatpush1.bf16.xpose.msra.mxu0 0
    %1559 = vmatprep.subr.bf16.mxu0 0
    %1560 = vmatpush1.bf16.xpose.msra.mxu0 0
    %1561 = vmatprep.subr.bf16.mxu0 0
    %1562 = vmatpush1.bf16.xpose.msra.mxu0 0
    %1563 = vmatprep.subr.bf16.mxu0 0
    %1564 = vmatpush1.bf16.xpose.msra.mxu0 0
    %1565 = vmatprep.subr.bf16.mxu0 0
    %1566 = vmatpush1.bf16.xpose.msra.mxu0 0
    %1567 = vmatprep.subr.bf16.mxu0 0
    %1568 = vmatpush1.bf16.xpose.msra.mxu0 0
    %1569 = vmatprep.subr.bf16.mxu0 0
    %1570 = vmatpush1.bf16.xpose.msra.mxu0 0
    %1571 = vmatprep.subr.bf16.mxu0 0
    %1572 = vmatpush1.bf16.xpose.msra.mxu0 0
    %1573 = vmatprep.subr.bf16.mxu0 0
    %1574 = vmatpush1.bf16.xpose.msra.mxu0 0
    %1575 = vmatprep.mubr.bf16.mxu0 0
    %1576 = vmatmul.mubr.bf16.gmra.mrb[0].mxu0 %v1538
    %v1577 = vpop.f32.mrb[0].mxu0
    %v1578 = vadd.f32 0.0, %v1577
    %v1579 = vpop.f32.mrb[0].mxu0
    %v1580 = vpop.f32.mrb[0].mxu0
    %v1581 = vpop.f32.mrb[0].mxu0
    %1582 = vdwg.mxu0
    %1584 = vrot.lane.b32.xlu0 %v1287, 96
    %v1585 = vpop.permute.xlu0 %1584
    %v1587 = vsel %vm167, %v1287, 0
    %v1590 = vsel %vm167, %v1585, 0
    %1592 = vmatprep.subr.bf16.mxu0 0
    %1593 = vmatpush1.bf16.xpose.msra.mxu0 %v1590
    %1594 = vmatprep.subr.bf16.mxu0 0
    %1595 = vmatpush1.bf16.xpose.msra.mxu0 0
    %1596 = vmatprep.subr.bf16.mxu0 0
    %1597 = vmatpush1.bf16.xpose.msra.mxu0 0
    %1598 = vmatprep.subr.bf16.mxu0 0
    %1599 = vmatpush1.bf16.xpose.msra.mxu0 0
    %1600 = vmatprep.subr.bf16.mxu0 0
    %1601 = vmatpush1.bf16.xpose.msra.mxu0 0
    %1602 = vmatprep.subr.bf16.mxu0 0
    %1603 = vmatpush1.bf16.xpose.msra.mxu0 0
    %1604 = vmatprep.subr.bf16.mxu0 0
    %1605 = vmatpush1.bf16.xpose.msra.mxu0 0
    %1606 = vmatprep.subr.bf16.mxu0 0
    %1607 = vmatpush1.bf16.xpose.msra.mxu0 0
    %1608 = vmatprep.subr.bf16.mxu0 0
    %1609 = vmatpush1.bf16.xpose.msra.mxu0 0
    %1610 = vmatprep.subr.bf16.mxu0 0
    %1611 = vmatpush1.bf16.xpose.msra.mxu0 0
    %1612 = vmatprep.subr.bf16.mxu0 0
    %1613 = vmatpush1.bf16.xpose.msra.mxu0 0
    %1614 = vmatprep.subr.bf16.mxu0 0
    %1615 = vmatpush1.bf16.xpose.msra.mxu0 0
    %1616 = vmatprep.subr.bf16.mxu0 0
    %1617 = vmatpush1.bf16.xpose.msra.mxu0 0
    %1618 = vmatprep.subr.bf16.mxu0 0
    %1619 = vmatpush1.bf16.xpose.msra.mxu0 0
    %1620 = vmatprep.subr.bf16.mxu0 0
    %1621 = vmatpush1.bf16.xpose.msra.mxu0 0
    %1622 = vmatprep.subr.bf16.mxu0 0
    %1623 = vmatpush1.bf16.xpose.msra.mxu0 0
    %1624 = vmatprep.mubr.bf16.mxu0 0
    %1625 = vmatmul.mubr.bf16.gmra.mrb[0].mxu0 %v1587
    %v1626 = vpop.f32.mrb[0].mxu0
    %v1627 = vadd.f32 0.0, %v1626
    %v1628 = vpop.f32.mrb[0].mxu0
    %v1629 = vpop.f32.mrb[0].mxu0
    %v1630 = vpop.f32.mrb[0].mxu0
    %1631 = vdwg.mxu0
    %1633 = vrot.lane.b32.xlu0 %v1288, 96
    %v1634 = vpop.permute.xlu0 %1633
    %v1636 = vsel %vm167, %v1288, 0
    %v1639 = vsel %vm167, %v1634, 0
    %1641 = vmatprep.subr.bf16.mxu0 0
    %1642 = vmatpush1.bf16.xpose.msra.mxu0 %v1639
    %1643 = vmatprep.subr.bf16.mxu0 0
    %1644 = vmatpush1.bf16.xpose.msra.mxu0 0
    %1645 = vmatprep.subr.bf16.mxu0 0
    %1646 = vmatpush1.bf16.xpose.msra.mxu0 0
    %1647 = vmatprep.subr.bf16.mxu0 0
    %1648 = vmatpush1.bf16.xpose.msra.mxu0 0
    %1649 = vmatprep.subr.bf16.mxu0 0
    %1650 = vmatpush1.bf16.xpose.msra.mxu0 0
    %1651 = vmatprep.subr.bf16.mxu0 0
    %1652 = vmatpush1.bf16.xpose.msra.mxu0 0
    %1653 = vmatprep.subr.bf16.mxu0 0
    %1654 = vmatpush1.bf16.xpose.msra.mxu0 0
    %1655 = vmatprep.subr.bf16.mxu0 0
    %1656 = vmatpush1.bf16.xpose.msra.mxu0 0
    %1657 = vmatprep.subr.bf16.mxu0 0
    %1658 = vmatpush1.bf16.xpose.msra.mxu0 0
    %1659 = vmatprep.subr.bf16.mxu0 0
    %1660 = vmatpush1.bf16.xpose.msra.mxu0 0
    %1661 = vmatprep.subr.bf16.mxu0 0
    %1662 = vmatpush1.bf16.xpose.msra.mxu0 0
    %1663 = vmatprep.subr.bf16.mxu0 0
    %1664 = vmatpush1.bf16.xpose.msra.mxu0 0
    %1665 = vmatprep.subr.bf16.mxu0 0
    %1666 = vmatpush1.bf16.xpose.msra.mxu0 0
    %1667 = vmatprep.subr.bf16.mxu0 0
    %1668 = vmatpush1.bf16.xpose.msra.mxu0 0
    %1669 = vmatprep.subr.bf16.mxu0 0
    %1670 = vmatpush1.bf16.xpose.msra.mxu0 0
    %1671 = vmatprep.subr.bf16.mxu0 0
    %1672 = vmatpush1.bf16.xpose.msra.mxu0 0
    %1673 = vmatprep.mubr.bf16.mxu0 0
    %1674 = vmatmul.mubr.bf16.gmra.mrb[0].mxu0 %v1636
    %v1675 = vpop.f32.mrb[0].mxu0
    %v1676 = vadd.f32 0.0, %v1675
    %v1677 = vpop.f32.mrb[0].mxu0
    %v1678 = vpop.f32.mrb[0].mxu0
    %v1679 = vpop.f32.mrb[0].mxu0
    %1680 = vdwg.mxu0
    %v1681 = vsel %vm569, %v1333, -1e+30
    %v1682 = vsel %vm570, %v1382, -1e+30
    %v1683 = vsel %vm569, %v1431, -1e+30
    %v1684 = vsel %vm570, %v1480, -1e+30
    %v1685 = vsel %vm569, %v1529, -1e+30
    %v1686 = vsel %vm570, %v1578, -1e+30
    %v1687 = vsel %vm569, %v1627, -1e+30
    %v1688 = vsel %vm570, %v1676, -1e+30
    %v1689 = vsel %vm167, %v1681, -inf
    %1690 = vmax.xlane.f32.xlu0 %v1689
    %v1691 = vpop.xlane.xlu0 %1690
    %v1692 = vsel %vm167, %v1682, -inf
    %1693 = vmax.xlane.f32.xlu0 %v1692
    %v1694 = vpop.xlane.xlu0 %1693
    %v1695 = vsel %vm167, %v1683, -inf
    %1696 = vmax.xlane.f32.xlu0 %v1695
    %v1697 = vpop.xlane.xlu0 %1696
    %v1698 = vsel %vm167, %v1684, -inf
    %1699 = vmax.xlane.f32.xlu0 %v1698
    %v1700 = vpop.xlane.xlu0 %1699
    %v1701 = vsel %vm167, %v1685, -inf
    %1702 = vmax.xlane.f32.xlu0 %v1701
    %v1703 = vpop.xlane.xlu0 %1702
    %v1704 = vsel %vm167, %v1686, -inf
    %1705 = vmax.xlane.f32.xlu0 %v1704
    %v1706 = vpop.xlane.xlu0 %1705
    %v1707 = vsel %vm167, %v1687, -inf
    %1708 = vmax.xlane.f32.xlu0 %v1707
    %v1709 = vpop.xlane.xlu0 %1708
    %v1710 = vsel %vm167, %v1688, -inf
    %1711 = vmax.xlane.f32.xlu0 %v1710
    %v1712 = vpop.xlane.xlu0 %1711
    %v1713 = vsub.f32 %v1681, %v1691
    %v1714 = vsub.f32 %v1682, %v1694
    %v1715 = vsub.f32 %v1683, %v1697
    %v1716 = vsub.f32 %v1684, %v1700
    %v1717 = vsub.f32 %v1685, %v1703
    %v1718 = vsub.f32 %v1686, %v1706
    %v1719 = vsub.f32 %v1687, %v1709
    %v1720 = vsub.f32 %v1688, %v1712
    %v1721 = vmul.f32 %v1713, 1.442695
    %v1722 = vpow.pop %v1721
    %v1723 = vmul.f32 %v1714, 1.442695
    %v1724 = vpow.pop %v1723
    %v1725 = vmul.f32 %v1715, 1.442695
    %v1726 = vpow.pop %v1725
    %v1727 = vmul.f32 %v1716, 1.442695
    %v1728 = vpow.pop %v1727
    %v1729 = vmul.f32 %v1717, 1.442695
    %v1730 = vpow.pop %v1729
    %v1731 = vmul.f32 %v1718, 1.442695
    %v1732 = vpow.pop %v1731
    %v1733 = vmul.f32 %v1719, 1.442695
    %v1734 = vpow.pop %v1733
    %v1735 = vmul.f32 %v1720, 1.442695
    %v1736 = vpow.pop %v1735
    %v1737 = vsel %vm167, %v1722, 0.0
    %1738 = vadd.xlane.f32.xlu0 %v1737
    %v1739 = vpop.xlane.xlu0 %1738
    %v1740 = vsel %vm167, %v1724, 0.0
    %1741 = vadd.xlane.f32.xlu0 %v1740
    %v1742 = vpop.xlane.xlu0 %1741
    %v1743 = vsel %vm167, %v1726, 0.0
    %1744 = vadd.xlane.f32.xlu0 %v1743
    %v1745 = vpop.xlane.xlu0 %1744
    %v1746 = vsel %vm167, %v1728, 0.0
    %1747 = vadd.xlane.f32.xlu0 %v1746
    %v1748 = vpop.xlane.xlu0 %1747
    %v1749 = vsel %vm167, %v1730, 0.0
    %1750 = vadd.xlane.f32.xlu0 %v1749
    %v1751 = vpop.xlane.xlu0 %1750
    %v1752 = vsel %vm167, %v1732, 0.0
    %1753 = vadd.xlane.f32.xlu0 %v1752
    %v1754 = vpop.xlane.xlu0 %1753
    %v1755 = vsel %vm167, %v1734, 0.0
    %1756 = vadd.xlane.f32.xlu0 %v1755
    %v1757 = vpop.xlane.xlu0 %1756
    %v1758 = vsel %vm167, %v1736, 0.0
    %1759 = vadd.xlane.f32.xlu0 %v1758
    %v1760 = vpop.xlane.xlu0 %1759
    %v1761 = vpack.c.bf16 %v1722, %v1722
    %v1762 = vpack.c.bf16 %v1724, %v1724
    %v1763 = vpack.c.bf16 %v1726, %v1726
    %v1764 = vpack.c.bf16 %v1728, %v1728
    %v1765 = vpack.c.bf16 %v1730, %v1730
    %v1766 = vpack.c.bf16 %v1732, %v1732
    %v1767 = vpack.c.bf16 %v1734, %v1734
    %v1768 = vpack.c.bf16 %v1736, %v1736
    %1769 = vrot.lane.b32.xlu0 %v1281, 64
    %v1770 = vpop.permute.xlu0 %1769
    %v1772 = vsel %vm167, %v1761, 0
    %v1775 = vsel %vm664, %v1770, 0
    %1777 = vmatprep.subr.bf16.mxu0 0
    %1778 = vmatpush1.bf16.msra.mxu0 %v1775
    %1779 = vmatprep.subr.bf16.mxu0 0
    %1780 = vmatpush1.bf16.msra.mxu0 0
    %1781 = vmatprep.subr.bf16.mxu0 0
    %1782 = vmatpush1.bf16.msra.mxu0 0
    %1783 = vmatprep.subr.bf16.mxu0 0
    %1784 = vmatpush1.bf16.msra.mxu0 0
    %1785 = vmatprep.subr.bf16.mxu0 0
    %1786 = vmatpush1.bf16.msra.mxu0 0
    %1787 = vmatprep.subr.bf16.mxu0 0
    %1788 = vmatpush1.bf16.msra.mxu0 0
    %1789 = vmatprep.subr.bf16.mxu0 0
    %1790 = vmatpush1.bf16.msra.mxu0 0
    %1791 = vmatprep.subr.bf16.mxu0 0
    %1792 = vmatpush1.bf16.msra.mxu0 0
    %1793 = vmatprep.subr.bf16.mxu0 0
    %1794 = vmatpush1.bf16.msra.mxu0 0
    %1795 = vmatprep.subr.bf16.mxu0 0
    %1796 = vmatpush1.bf16.msra.mxu0 0
    %1797 = vmatprep.subr.bf16.mxu0 0
    %1798 = vmatpush1.bf16.msra.mxu0 0
    %1799 = vmatprep.subr.bf16.mxu0 0
    %1800 = vmatpush1.bf16.msra.mxu0 0
    %1801 = vmatprep.subr.bf16.mxu0 0
    %1802 = vmatpush1.bf16.msra.mxu0 0
    %1803 = vmatprep.subr.bf16.mxu0 0
    %1804 = vmatpush1.bf16.msra.mxu0 0
    %1805 = vmatprep.subr.bf16.mxu0 0
    %1806 = vmatpush1.bf16.msra.mxu0 0
    %1807 = vmatprep.subr.bf16.mxu0 0
    %1808 = vmatpush1.bf16.msra.mxu0 0
    %1809 = vmatprep.mubr.bf16.mxu0 0
    %1810 = vmatmul.mubr.bf16.gmra.mrb[0].mxu0 %v1772
    %v1811 = vpop.f32.mrb[0].mxu0
    %v1812 = vadd.f32 0.0, %v1811
    %v1813 = vpop.f32.mrb[0].mxu0
    %v1814 = vpop.f32.mrb[0].mxu0
    %v1815 = vpop.f32.mrb[0].mxu0
    %1816 = vdwg.mxu0
    %1817 = vrot.lane.b32.xlu0 %v1282, 64
    %v1818 = vpop.permute.xlu0 %1817
    %v1820 = vsel %vm167, %v1762, 0
    %v1823 = vsel %vm664, %v1818, 0
    %1825 = vmatprep.subr.bf16.mxu0 0
    %1826 = vmatpush1.bf16.msra.mxu0 %v1823
    %1827 = vmatprep.subr.bf16.mxu0 0
    %1828 = vmatpush1.bf16.msra.mxu0 0
    %1829 = vmatprep.subr.bf16.mxu0 0
    %1830 = vmatpush1.bf16.msra.mxu0 0
    %1831 = vmatprep.subr.bf16.mxu0 0
    %1832 = vmatpush1.bf16.msra.mxu0 0
    %1833 = vmatprep.subr.bf16.mxu0 0
    %1834 = vmatpush1.bf16.msra.mxu0 0
    %1835 = vmatprep.subr.bf16.mxu0 0
    %1836 = vmatpush1.bf16.msra.mxu0 0
    %1837 = vmatprep.subr.bf16.mxu0 0
    %1838 = vmatpush1.bf16.msra.mxu0 0
    %1839 = vmatprep.subr.bf16.mxu0 0
    %1840 = vmatpush1.bf16.msra.mxu0 0
    %1841 = vmatprep.subr.bf16.mxu0 0
    %1842 = vmatpush1.bf16.msra.mxu0 0
    %1843 = vmatprep.subr.bf16.mxu0 0
    %1844 = vmatpush1.bf16.msra.mxu0 0
    %1845 = vmatprep.subr.bf16.mxu0 0
    %1846 = vmatpush1.bf16.msra.mxu0 0
    %1847 = vmatprep.subr.bf16.mxu0 0
    %1848 = vmatpush1.bf16.msra.mxu0 0
    %1849 = vmatprep.subr.bf16.mxu0 0
    %1850 = vmatpush1.bf16.msra.mxu0 0
    %1851 = vmatprep.subr.bf16.mxu0 0
    %1852 = vmatpush1.bf16.msra.mxu0 0
    %1853 = vmatprep.subr.bf16.mxu0 0
    %1854 = vmatpush1.bf16.msra.mxu0 0
    %1855 = vmatprep.subr.bf16.mxu0 0
    %1856 = vmatpush1.bf16.msra.mxu0 0
    %1857 = vmatprep.mubr.bf16.mxu0 0
    %1858 = vmatmul.mubr.bf16.gmra.mrb[0].mxu0 %v1820
    %v1859 = vpop.f32.mrb[0].mxu0
    %v1860 = vadd.f32 0.0, %v1859
    %v1861 = vpop.f32.mrb[0].mxu0
    %v1862 = vpop.f32.mrb[0].mxu0
    %v1863 = vpop.f32.mrb[0].mxu0
    %1864 = vdwg.mxu0
    %1865 = vrot.lane.b32.xlu0 %v1283, 64
    %v1866 = vpop.permute.xlu0 %1865
    %v1868 = vsel %vm167, %v1763, 0
    %v1871 = vsel %vm664, %v1866, 0
    %1873 = vmatprep.subr.bf16.mxu0 0
    %1874 = vmatpush1.bf16.msra.mxu0 %v1871
    %1875 = vmatprep.subr.bf16.mxu0 0
    %1876 = vmatpush1.bf16.msra.mxu0 0
    %1877 = vmatprep.subr.bf16.mxu0 0
    %1878 = vmatpush1.bf16.msra.mxu0 0
    %1879 = vmatprep.subr.bf16.mxu0 0
    %1880 = vmatpush1.bf16.msra.mxu0 0
    %1881 = vmatprep.subr.bf16.mxu0 0
    %1882 = vmatpush1.bf16.msra.mxu0 0
    %1883 = vmatprep.subr.bf16.mxu0 0
    %1884 = vmatpush1.bf16.msra.mxu0 0
    %1885 = vmatprep.subr.bf16.mxu0 0
    %1886 = vmatpush1.bf16.msra.mxu0 0
    %1887 = vmatprep.subr.bf16.mxu0 0
    %1888 = vmatpush1.bf16.msra.mxu0 0
    %1889 = vmatprep.subr.bf16.mxu0 0
    %1890 = vmatpush1.bf16.msra.mxu0 0
    %1891 = vmatprep.subr.bf16.mxu0 0
    %1892 = vmatpush1.bf16.msra.mxu0 0
    %1893 = vmatprep.subr.bf16.mxu0 0
    %1894 = vmatpush1.bf16.msra.mxu0 0
    %1895 = vmatprep.subr.bf16.mxu0 0
    %1896 = vmatpush1.bf16.msra.mxu0 0
    %1897 = vmatprep.subr.bf16.mxu0 0
    %1898 = vmatpush1.bf16.msra.mxu0 0
    %1899 = vmatprep.subr.bf16.mxu0 0
    %1900 = vmatpush1.bf16.msra.mxu0 0
    %1901 = vmatprep.subr.bf16.mxu0 0
    %1902 = vmatpush1.bf16.msra.mxu0 0
    %1903 = vmatprep.subr.bf16.mxu0 0
    %1904 = vmatpush1.bf16.msra.mxu0 0
    %1905 = vmatprep.mubr.bf16.mxu0 0
    %1906 = vmatmul.mubr.bf16.gmra.mrb[0].mxu0 %v1868
    %v1907 = vpop.f32.mrb[0].mxu0
    %v1908 = vadd.f32 0.0, %v1907
    %v1909 = vpop.f32.mrb[0].mxu0
    %v1910 = vpop.f32.mrb[0].mxu0
    %v1911 = vpop.f32.mrb[0].mxu0
    %1912 = vdwg.mxu0
    %1913 = vrot.lane.b32.xlu0 %v1284, 64
    %v1914 = vpop.permute.xlu0 %1913
    %v1916 = vsel %vm167, %v1764, 0
    %v1919 = vsel %vm664, %v1914, 0
    %1921 = vmatprep.subr.bf16.mxu0 0
    %1922 = vmatpush1.bf16.msra.mxu0 %v1919
    %1923 = vmatprep.subr.bf16.mxu0 0
    %1924 = vmatpush1.bf16.msra.mxu0 0
    %1925 = vmatprep.subr.bf16.mxu0 0
    %1926 = vmatpush1.bf16.msra.mxu0 0
    %1927 = vmatprep.subr.bf16.mxu0 0
    %1928 = vmatpush1.bf16.msra.mxu0 0
    %1929 = vmatprep.subr.bf16.mxu0 0
    %1930 = vmatpush1.bf16.msra.mxu0 0
    %1931 = vmatprep.subr.bf16.mxu0 0
    %1932 = vmatpush1.bf16.msra.mxu0 0
    %1933 = vmatprep.subr.bf16.mxu0 0
    %1934 = vmatpush1.bf16.msra.mxu0 0
    %1935 = vmatprep.subr.bf16.mxu0 0
    %1936 = vmatpush1.bf16.msra.mxu0 0
    %1937 = vmatprep.subr.bf16.mxu0 0
    %1938 = vmatpush1.bf16.msra.mxu0 0
    %1939 = vmatprep.subr.bf16.mxu0 0
    %1940 = vmatpush1.bf16.msra.mxu0 0
    %1941 = vmatprep.subr.bf16.mxu0 0
    %1942 = vmatpush1.bf16.msra.mxu0 0
    %1943 = vmatprep.subr.bf16.mxu0 0
    %1944 = vmatpush1.bf16.msra.mxu0 0
    %1945 = vmatprep.subr.bf16.mxu0 0
    %1946 = vmatpush1.bf16.msra.mxu0 0
    %1947 = vmatprep.subr.bf16.mxu0 0
    %1948 = vmatpush1.bf16.msra.mxu0 0
    %1949 = vmatprep.subr.bf16.mxu0 0
    %1950 = vmatpush1.bf16.msra.mxu0 0
    %1951 = vmatprep.subr.bf16.mxu0 0
    %1952 = vmatpush1.bf16.msra.mxu0 0
    %1953 = vmatprep.mubr.bf16.mxu0 0
    %1954 = vmatmul.mubr.bf16.gmra.mrb[0].mxu0 %v1916
    %v1955 = vpop.f32.mrb[0].mxu0
    %v1956 = vadd.f32 0.0, %v1955
    %v1957 = vpop.f32.mrb[0].mxu0
    %v1958 = vpop.f32.mrb[0].mxu0
    %v1959 = vpop.f32.mrb[0].mxu0
    %1960 = vdwg.mxu0
    %1961 = vrot.lane.b32.xlu0 %v1285, 64
    %v1962 = vpop.permute.xlu0 %1961
    %v1964 = vsel %vm167, %v1765, 0
    %v1967 = vsel %vm664, %v1962, 0
    %1969 = vmatprep.subr.bf16.mxu0 0
    %1970 = vmatpush1.bf16.msra.mxu0 %v1967
    %1971 = vmatprep.subr.bf16.mxu0 0
    %1972 = vmatpush1.bf16.msra.mxu0 0
    %1973 = vmatprep.subr.bf16.mxu0 0
    %1974 = vmatpush1.bf16.msra.mxu0 0
    %1975 = vmatprep.subr.bf16.mxu0 0
    %1976 = vmatpush1.bf16.msra.mxu0 0
    %1977 = vmatprep.subr.bf16.mxu0 0
    %1978 = vmatpush1.bf16.msra.mxu0 0
    %1979 = vmatprep.subr.bf16.mxu0 0
    %1980 = vmatpush1.bf16.msra.mxu0 0
    %1981 = vmatprep.subr.bf16.mxu0 0
    %1982 = vmatpush1.bf16.msra.mxu0 0
    %1983 = vmatprep.subr.bf16.mxu0 0
    %1984 = vmatpush1.bf16.msra.mxu0 0
    %1985 = vmatprep.subr.bf16.mxu0 0
    %1986 = vmatpush1.bf16.msra.mxu0 0
    %1987 = vmatprep.subr.bf16.mxu0 0
    %1988 = vmatpush1.bf16.msra.mxu0 0
    %1989 = vmatprep.subr.bf16.mxu0 0
    %1990 = vmatpush1.bf16.msra.mxu0 0
    %1991 = vmatprep.subr.bf16.mxu0 0
    %1992 = vmatpush1.bf16.msra.mxu0 0
    %1993 = vmatprep.subr.bf16.mxu0 0
    %1994 = vmatpush1.bf16.msra.mxu0 0
    %1995 = vmatprep.subr.bf16.mxu0 0
    %1996 = vmatpush1.bf16.msra.mxu0 0
    %1997 = vmatprep.subr.bf16.mxu0 0
    %1998 = vmatpush1.bf16.msra.mxu0 0
    %1999 = vmatprep.subr.bf16.mxu0 0
    %2000 = vmatpush1.bf16.msra.mxu0 0
    %2001 = vmatprep.mubr.bf16.mxu0 0
    %2002 = vmatmul.mubr.bf16.gmra.mrb[0].mxu0 %v1964
    %v2003 = vpop.f32.mrb[0].mxu0
    %v2004 = vadd.f32 0.0, %v2003
    %v2005 = vpop.f32.mrb[0].mxu0
    %v2006 = vpop.f32.mrb[0].mxu0
    %v2007 = vpop.f32.mrb[0].mxu0
    %2008 = vdwg.mxu0
    %2009 = vrot.lane.b32.xlu0 %v1286, 64
    %v2010 = vpop.permute.xlu0 %2009
    %v2012 = vsel %vm167, %v1766, 0
    %v2015 = vsel %vm664, %v2010, 0
    %2017 = vmatprep.subr.bf16.mxu0 0
    %2018 = vmatpush1.bf16.msra.mxu0 %v2015
    %2019 = vmatprep.subr.bf16.mxu0 0
    %2020 = vmatpush1.bf16.msra.mxu0 0
    %2021 = vmatprep.subr.bf16.mxu0 0
    %2022 = vmatpush1.bf16.msra.mxu0 0
    %2023 = vmatprep.subr.bf16.mxu0 0
    %2024 = vmatpush1.bf16.msra.mxu0 0
    %2025 = vmatprep.subr.bf16.mxu0 0
    %2026 = vmatpush1.bf16.msra.mxu0 0
    %2027 = vmatprep.subr.bf16.mxu0 0
    %2028 = vmatpush1.bf16.msra.mxu0 0
    %2029 = vmatprep.subr.bf16.mxu0 0
    %2030 = vmatpush1.bf16.msra.mxu0 0
    %2031 = vmatprep.subr.bf16.mxu0 0
    %2032 = vmatpush1.bf16.msra.mxu0 0
    %2033 = vmatprep.subr.bf16.mxu0 0
    %2034 = vmatpush1.bf16.msra.mxu0 0
    %2035 = vmatprep.subr.bf16.mxu0 0
    %2036 = vmatpush1.bf16.msra.mxu0 0
    %2037 = vmatprep.subr.bf16.mxu0 0
    %2038 = vmatpush1.bf16.msra.mxu0 0
    %2039 = vmatprep.subr.bf16.mxu0 0
    %2040 = vmatpush1.bf16.msra.mxu0 0
    %2041 = vmatprep.subr.bf16.mxu0 0
    %2042 = vmatpush1.bf16.msra.mxu0 0
    %2043 = vmatprep.subr.bf16.mxu0 0
    %2044 = vmatpush1.bf16.msra.mxu0 0
    %2045 = vmatprep.subr.bf16.mxu0 0
    %2046 = vmatpush1.bf16.msra.mxu0 0
    %2047 = vmatprep.subr.bf16.mxu0 0
    %2048 = vmatpush1.bf16.msra.mxu0 0
    %2049 = vmatprep.mubr.bf16.mxu0 0
    %2050 = vmatmul.mubr.bf16.gmra.mrb[0].mxu0 %v2012
    %v2051 = vpop.f32.mrb[0].mxu0
    %v2052 = vadd.f32 0.0, %v2051
    %v2053 = vpop.f32.mrb[0].mxu0
    %v2054 = vpop.f32.mrb[0].mxu0
    %v2055 = vpop.f32.mrb[0].mxu0
    %2056 = vdwg.mxu0
    %2057 = vrot.lane.b32.xlu0 %v1287, 64
    %v2058 = vpop.permute.xlu0 %2057
    %v2060 = vsel %vm167, %v1767, 0
    %v2063 = vsel %vm664, %v2058, 0
    %2065 = vmatprep.subr.bf16.mxu0 0
    %2066 = vmatpush1.bf16.msra.mxu0 %v2063
    %2067 = vmatprep.subr.bf16.mxu0 0
    %2068 = vmatpush1.bf16.msra.mxu0 0
    %2069 = vmatprep.subr.bf16.mxu0 0
    %2070 = vmatpush1.bf16.msra.mxu0 0
    %2071 = vmatprep.subr.bf16.mxu0 0
    %2072 = vmatpush1.bf16.msra.mxu0 0
    %2073 = vmatprep.subr.bf16.mxu0 0
    %2074 = vmatpush1.bf16.msra.mxu0 0
    %2075 = vmatprep.subr.bf16.mxu0 0
    %2076 = vmatpush1.bf16.msra.mxu0 0
    %2077 = vmatprep.subr.bf16.mxu0 0
    %2078 = vmatpush1.bf16.msra.mxu0 0
    %2079 = vmatprep.subr.bf16.mxu0 0
    %2080 = vmatpush1.bf16.msra.mxu0 0
    %2081 = vmatprep.subr.bf16.mxu0 0
    %2082 = vmatpush1.bf16.msra.mxu0 0
    %2083 = vmatprep.subr.bf16.mxu0 0
    %2084 = vmatpush1.bf16.msra.mxu0 0
    %2085 = vmatprep.subr.bf16.mxu0 0
    %2086 = vmatpush1.bf16.msra.mxu0 0
    %2087 = vmatprep.subr.bf16.mxu0 0
    %2088 = vmatpush1.bf16.msra.mxu0 0
    %2089 = vmatprep.subr.bf16.mxu0 0
    %2090 = vmatpush1.bf16.msra.mxu0 0
    %2091 = vmatprep.subr.bf16.mxu0 0
    %2092 = vmatpush1.bf16.msra.mxu0 0
    %2093 = vmatprep.subr.bf16.mxu0 0
    %2094 = vmatpush1.bf16.msra.mxu0 0
    %2095 = vmatprep.subr.bf16.mxu0 0
    %2096 = vmatpush1.bf16.msra.mxu0 0
    %2097 = vmatprep.mubr.bf16.mxu0 0
    %2098 = vmatmul.mubr.bf16.gmra.mrb[0].mxu0 %v2060
    %v2099 = vpop.f32.mrb[0].mxu0
    %v2100 = vadd.f32 0.0, %v2099
    %v2101 = vpop.f32.mrb[0].mxu0
    %v2102 = vpop.f32.mrb[0].mxu0
    %v2103 = vpop.f32.mrb[0].mxu0
    %2104 = vdwg.mxu0
    %2105 = vrot.lane.b32.xlu0 %v1288, 64
    %v2106 = vpop.permute.xlu0 %2105
    %v2108 = vsel %vm167, %v1768, 0
    %v2111 = vsel %vm664, %v2106, 0
    %2113 = vmatprep.subr.bf16.mxu0 0
    %2114 = vmatpush1.bf16.msra.mxu0 %v2111
    %2115 = vmatprep.subr.bf16.mxu0 0
    %2116 = vmatpush1.bf16.msra.mxu0 0
    %2117 = vmatprep.subr.bf16.mxu0 0
    %2118 = vmatpush1.bf16.msra.mxu0 0
    %2119 = vmatprep.subr.bf16.mxu0 0
    %2120 = vmatpush1.bf16.msra.mxu0 0
    %2121 = vmatprep.subr.bf16.mxu0 0
    %2122 = vmatpush1.bf16.msra.mxu0 0
    %2123 = vmatprep.subr.bf16.mxu0 0
    %2124 = vmatpush1.bf16.msra.mxu0 0
    %2125 = vmatprep.subr.bf16.mxu0 0
    %2126 = vmatpush1.bf16.msra.mxu0 0
    %2127 = vmatprep.subr.bf16.mxu0 0
    %2128 = vmatpush1.bf16.msra.mxu0 0
    %2129 = vmatprep.subr.bf16.mxu0 0
    %2130 = vmatpush1.bf16.msra.mxu0 0
    %2131 = vmatprep.subr.bf16.mxu0 0
    %2132 = vmatpush1.bf16.msra.mxu0 0
    %2133 = vmatprep.subr.bf16.mxu0 0
    %2134 = vmatpush1.bf16.msra.mxu0 0
    %2135 = vmatprep.subr.bf16.mxu0 0
    %2136 = vmatpush1.bf16.msra.mxu0 0
    %2137 = vmatprep.subr.bf16.mxu0 0
    %2138 = vmatpush1.bf16.msra.mxu0 0
    %2139 = vmatprep.subr.bf16.mxu0 0
    %2140 = vmatpush1.bf16.msra.mxu0 0
    %2141 = vmatprep.subr.bf16.mxu0 0
    %2142 = vmatpush1.bf16.msra.mxu0 0
    %2143 = vmatprep.subr.bf16.mxu0 0
    %2144 = vmatpush1.bf16.msra.mxu0 0
    %2145 = vmatprep.mubr.bf16.mxu0 0
    %2146 = vmatmul.mubr.bf16.gmra.mrb[0].mxu0 %v2108
    %v2147 = vpop.f32.mrb[0].mxu0
    %v2148 = vadd.f32 0.0, %v2147
    %v2149 = vpop.f32.mrb[0].mxu0
    %v2150 = vpop.f32.mrb[0].mxu0
    %v2151 = vpop.f32.mrb[0].mxu0
    %2152 = vdwg.mxu0
    %v2153 = vadd.f32 %v1739, 1e-16
    %v2154 = vadd.f32 %v1742, 1e-16
    %v2155 = vadd.f32 %v1745, 1e-16
    %v2156 = vadd.f32 %v1748, 1e-16
    %v2157 = vadd.f32 %v1751, 1e-16
    %v2158 = vadd.f32 %v1754, 1e-16
    %v2159 = vadd.f32 %v1757, 1e-16
    %v2160 = vadd.f32 %v1760, 1e-16
    %v2161 = vrcp.pop %v2153
    %v2162 = vrcp.pop %v2154
    %v2163 = vrcp.pop %v2155
    %v2164 = vrcp.pop %v2156
    %v2165 = vrcp.pop %v2157
    %v2166 = vrcp.pop %v2158
    %v2167 = vrcp.pop %v2159
    %v2168 = vrcp.pop %v2160
    %v2169 = vmul.f32 %v1812, %v2161
    %v2170 = vmul.f32 %v1860, %v2162
    %v2171 = vmul.f32 %v1908, %v2163
    %v2172 = vmul.f32 %v1956, %v2164
    %v2173 = vmul.f32 %v2004, %v2165
    %v2174 = vmul.f32 %v2052, %v2166
    %v2175 = vmul.f32 %v2100, %v2167
    %v2176 = vmul.f32 %v2148, %v2168
    %v2177 = vadd.f32 %v1255, %v2169
    %v2178 = vadd.f32 %v1258, %v2170
    %v2179 = vadd.f32 %v1264, %v2171
    %v2180 = vadd.f32 %v1266, %v2172
    %v2181 = vadd.f32 %v1270, %v2173
    %v2182 = vadd.f32 %v1272, %v2174
    %v2183 = vadd.f32 %v1276, %v2175
    %v2184 = vadd.f32 %v1278, %v2176
    %2187 = vrot.lane.b32.xlu0 %v2179, 8
    %v2188 = vpop.permute.xlu0 %2187
    %2189 = vrot.lane.b32.xlu0 %v2180, 8
    %v2190 = vpop.permute.xlu0 %2189
    %2195 = vrot.lane.b32.xlu0 %v2181, 16
    %v2196 = vpop.permute.xlu0 %2195
    %2197 = vrot.lane.b32.xlu0 %v2182, 16
    %v2198 = vpop.permute.xlu0 %2197
    %2203 = vrot.lane.b32.xlu0 %v2183, 24
    %v2204 = vpop.permute.xlu0 %2203
    %2205 = vrot.lane.b32.xlu0 %v2184, 24
    %v2206 = vpop.permute.xlu0 %2205
    %v2209 = vsel %vm167, %v2177, %v2188
    %v2210 = vsel %vm167, %v2178, %v2190
    %v2211 = vsel %vm1102, %v2209, %v2196
    %v2212 = vsel %vm1102, %v2210, %v2198
    %v2213 = vsel %vm1105, %v2211, %v2204
    %v2214 = vsel %vm1105, %v2212, %v2206
    %v2215 = vpack.c.bf16 %v2214, %v2213
    %v2217 = vlaneseq
    %v2218 = vshrl.u32 %v2217, 7
    %v2219 = vsub.s32 0, %v2218
    %v2220 = vrot.slane %v1197, %v2219
    %v2226 = vunpack.c.l.b16 %v1193
    %v2227 = vunpack.c.l.b16 %v1194
    %v2228 = vunpack.c.l.b16 %v1195
    %v2229 = vunpack.c.l.b16 %v1196
    %v2230 = vpack.c.b16 %v2227, %v2226
    %v2231 = vpack.c.b16 %v2229, %v2228
    %v2235 = vsel %vm1127, %v2215, 0
    %2237 = vmatprep.subr.bf16.mxu0 0
    %2238 = vmatpush1.bf16.msra.mxu0 %v2230
    %2239 = vmatprep.subr.bf16.mxu0 0
    %2240 = vmatpush1.bf16.msra.mxu0 %v2231
    %2241 = vmatprep.subr.bf16.mxu0 0
    %2242 = vmatpush1.bf16.msra.mxu0 0
    %2243 = vmatprep.subr.bf16.mxu0 0
    %2244 = vmatpush1.bf16.msra.mxu0 0
    %2245 = vmatprep.subr.bf16.mxu0 0
    %2246 = vmatpush1.bf16.msra.mxu0 0
    %2247 = vmatprep.subr.bf16.mxu0 0
    %2248 = vmatpush1.bf16.msra.mxu0 0
    %2249 = vmatprep.subr.bf16.mxu0 0
    %2250 = vmatpush1.bf16.msra.mxu0 0
    %2251 = vmatprep.subr.bf16.mxu0 0
    %2252 = vmatpush1.bf16.msra.mxu0 0
    %2253 = vmatprep.subr.bf16.mxu0 0
    %2254 = vmatpush1.bf16.msra.mxu0 0
    %2255 = vmatprep.subr.bf16.mxu0 0
    %2256 = vmatpush1.bf16.msra.mxu0 0
    %2257 = vmatprep.subr.bf16.mxu0 0
    %2258 = vmatpush1.bf16.msra.mxu0 0
    %2259 = vmatprep.subr.bf16.mxu0 0
    %2260 = vmatpush1.bf16.msra.mxu0 0
    %2261 = vmatprep.subr.bf16.mxu0 0
    %2262 = vmatpush1.bf16.msra.mxu0 0
    %2263 = vmatprep.subr.bf16.mxu0 0
    %2264 = vmatpush1.bf16.msra.mxu0 0
    %2265 = vmatprep.subr.bf16.mxu0 0
    %2266 = vmatpush1.bf16.msra.mxu0 0
    %2267 = vmatprep.subr.bf16.mxu0 0
    %2268 = vmatpush1.bf16.msra.mxu0 0
    %2269 = vmatprep.mubr.bf16.mxu0 0
    %2270 = vmatmul.mubr.bf16.gmra.mrb[0].mxu0 %v2235
    %v2271 = vpop.f32.mrb[0].mxu0
    %v2272 = vadd.f32 %v2220, %v2271
    %v2273 = vpop.f32.mrb[0].mxu0
    %v2274 = vpop.f32.mrb[0].mxu0
    %v2275 = vadd.f32 %v2220, %v2274
    %v2276 = vpop.f32.mrb[0].mxu0
    %2277 = vdwg.mxu0
    %v2278 = vmax.f32 %v2272, 0.0
    %v2279 = vmax.f32 %v2275, 0.0
    %v2280 = vadd.f32 %v2213, %v2278
    %v2281 = vadd.f32 %v2214, %v2279
    %v2282 = vmul.f32 %v2280, %v1179
    %v2283 = vmul.f32 %v2281, %v1184
    %v2284 = vpack.c.bf16 %v2283, %v2282
    %v2285 = vld [vmem:[%s11] sm:$0xf]
    %v2286 = vld [vmem:[%s11 + $0x4] sm:$0xf]
    %v2287 = vld [vmem:[%s11 + $0x8] sm:$0xf]
    %v2288 = vld [vmem:[%s11 + $0xc] sm:$0xf]
    %v2289 = vld [vmem:[%s12] sm:$0x1]
    %v2291 = vlaneseq
    %v2292 = vshrl.u32 %v2291, 7
    %v2293 = vsub.s32 0, %v2292
    %v2294 = vrot.slane %v2289, %v2293
    %v2300 = vunpack.c.l.b16 %v2285
    %v2301 = vunpack.c.l.b16 %v2286
    %v2302 = vunpack.c.l.b16 %v2287
    %v2303 = vunpack.c.l.b16 %v2288
    %v2304 = vpack.c.b16 %v2301, %v2300
    %v2305 = vpack.c.b16 %v2303, %v2302
    %v2309 = vsel %vm1127, %v2284, 0
    %2311 = vmatprep.subr.bf16.mxu0 0
    %2312 = vmatpush1.bf16.msra.mxu0 %v2304
    %2313 = vmatprep.subr.bf16.mxu0 0
    %2314 = vmatpush1.bf16.msra.mxu0 %v2305
    %2315 = vmatprep.subr.bf16.mxu0 0
    %2316 = vmatpush1.bf16.msra.mxu0 0
    %2317 = vmatprep.subr.bf16.mxu0 0
    %2318 = vmatpush1.bf16.msra.mxu0 0
    %2319 = vmatprep.subr.bf16.mxu0 0
    %2320 = vmatpush1.bf16.msra.mxu0 0
    %2321 = vmatprep.subr.bf16.mxu0 0
    %2322 = vmatpush1.bf16.msra.mxu0 0
    %2323 = vmatprep.subr.bf16.mxu0 0
    %2324 = vmatpush1.bf16.msra.mxu0 0
    %2325 = vmatprep.subr.bf16.mxu0 0
    %2326 = vmatpush1.bf16.msra.mxu0 0
    %2327 = vmatprep.subr.bf16.mxu0 0
    %2328 = vmatpush1.bf16.msra.mxu0 0
    %2329 = vmatprep.subr.bf16.mxu0 0
    %2330 = vmatpush1.bf16.msra.mxu0 0
    %2331 = vmatprep.subr.bf16.mxu0 0
    %2332 = vmatpush1.bf16.msra.mxu0 0
    %2333 = vmatprep.subr.bf16.mxu0 0
    %2334 = vmatpush1.bf16.msra.mxu0 0
    %2335 = vmatprep.subr.bf16.mxu0 0
    %2336 = vmatpush1.bf16.msra.mxu0 0
    %2337 = vmatprep.subr.bf16.mxu0 0
    %2338 = vmatpush1.bf16.msra.mxu0 0
    %2339 = vmatprep.subr.bf16.mxu0 0
    %2340 = vmatpush1.bf16.msra.mxu0 0
    %2341 = vmatprep.subr.bf16.mxu0 0
    %2342 = vmatpush1.bf16.msra.mxu0 0
    %2343 = vmatprep.mubr.bf16.mxu0 0
    %2344 = vmatmul.mubr.bf16.gmra.mrb[0].mxu0 %v2309
    %v2345 = vpop.f32.mrb[0].mxu0
    %v2346 = vadd.f32 %v2294, %v2345
    %v2347 = vpop.f32.mrb[0].mxu0
    %v2348 = vpop.f32.mrb[0].mxu0
    %v2349 = vadd.f32 %v2294, %v2348
    %v2350 = vpop.f32.mrb[0].mxu0
    %2351 = vdwg.mxu0
    %v2352 = vmul.f32 %v2346, %v1179
    %v2353 = vmul.f32 %v2349, %v1184
    %v2354 = vpack.c.bf16 %v2353, %v2352
    %v2355 = vld [vmem:[%s13] sm:$0xf]
    %v2356 = vld [vmem:[%s13 + $0x4] sm:$0xf]
    %v2357 = vld [vmem:[%s13 + $0x8] sm:$0xf]
    %v2358 = vld [vmem:[%s13 + $0xc] sm:$0xf]
    %v2359 = vld [vmem:[%s14] sm:$0x1]
    %v2361 = vlaneseq
    %v2362 = vshrl.u32 %v2361, 7
    %v2363 = vsub.s32 0, %v2362
    %v2364 = vrot.slane %v2359, %v2363
    %v2370 = vunpack.c.l.b16 %v2355
    %v2371 = vunpack.c.l.b16 %v2356
    %v2372 = vunpack.c.l.b16 %v2357
    %v2373 = vunpack.c.l.b16 %v2358
    %v2374 = vpack.c.b16 %v2371, %v2370
    %v2375 = vpack.c.b16 %v2373, %v2372
    %v2379 = vsel %vm1127, %v2354, 0
    %2381 = vmatprep.subr.bf16.mxu0 0
    %2382 = vmatpush1.bf16.msra.mxu0 %v2374
    %2383 = vmatprep.subr.bf16.mxu0 0
    %2384 = vmatpush1.bf16.msra.mxu0 %v2375
    %2385 = vmatprep.subr.bf16.mxu0 0
    %2386 = vmatpush1.bf16.msra.mxu0 0
    %2387 = vmatprep.subr.bf16.mxu0 0
    %2388 = vmatpush1.bf16.msra.mxu0 0
    %2389 = vmatprep.subr.bf16.mxu0 0
    %2390 = vmatpush1.bf16.msra.mxu0 0
    %2391 = vmatprep.subr.bf16.mxu0 0
    %2392 = vmatpush1.bf16.msra.mxu0 0
    %2393 = vmatprep.subr.bf16.mxu0 0
    %2394 = vmatpush1.bf16.msra.mxu0 0
    %2395 = vmatprep.subr.bf16.mxu0 0
    %2396 = vmatpush1.bf16.msra.mxu0 0
    %2397 = vmatprep.subr.bf16.mxu0 0
    %2398 = vmatpush1.bf16.msra.mxu0 0
    %2399 = vmatprep.subr.bf16.mxu0 0
    %2400 = vmatpush1.bf16.msra.mxu0 0
    %2401 = vmatprep.subr.bf16.mxu0 0
    %2402 = vmatpush1.bf16.msra.mxu0 0
    %2403 = vmatprep.subr.bf16.mxu0 0
    %2404 = vmatpush1.bf16.msra.mxu0 0
    %2405 = vmatprep.subr.bf16.mxu0 0
    %2406 = vmatpush1.bf16.msra.mxu0 0
    %2407 = vmatprep.subr.bf16.mxu0 0
    %2408 = vmatpush1.bf16.msra.mxu0 0
    %2409 = vmatprep.subr.bf16.mxu0 0
    %2410 = vmatpush1.bf16.msra.mxu0 0
    %2411 = vmatprep.subr.bf16.mxu0 0
    %2412 = vmatpush1.bf16.msra.mxu0 0
    %2413 = vmatprep.mubr.bf16.mxu0 0
    %2414 = vmatmul.mubr.bf16.gmra.mrb[0].mxu0 %v2379
    %v2415 = vpop.f32.mrb[0].mxu0
    %v2416 = vadd.f32 %v2364, %v2415
    %v2417 = vpop.f32.mrb[0].mxu0
    %v2418 = vpop.f32.mrb[0].mxu0
    %v2419 = vadd.f32 %v2364, %v2418
    %v2420 = vpop.f32.mrb[0].mxu0
    %2421 = vdwg.mxu0
    %vm2422 = vcmp.gt.f32.partialorder %v71, 0.0
    %vm2423 = vcmp.gt.f32.partialorder %v72, 0.0
    %v2424 = vsel %vm2422, 1, 0
    %v2425 = vsel %vm2423, 1, 0
    %2426 = vset.pattern.permute.xlu0 0
    %2427 = vperm.xlu0 %2426, %v2424
    %v2428 = vpop.permute.xlu0 %2427
    %2429 = vset.pattern.permute.xlu0 0
    %2430 = vperm.xlu0 %2429, %v2425
    %v2431 = vpop.permute.xlu0 %2430
    %vm2432 = vcmp.eq.s32.totalorder %v2428, 1
    %vm2433 = vcmp.eq.s32.totalorder %v2431, 1
    %v2434 = vsel %vm2432, %v2416, -1e+30
    %v2435 = vsel %vm2433, %v2419, -1e+30
    %v2436 = vsel %vm87, %v2434, -inf
    %v2437 = vrot.slane %v2436, 4
    %v2438 = vmax.f32 %v2436, %v2437
    %v2439 = vrot.slane %v2438, 2
    %v2440 = vmax.f32 %v2438, %v2439
    %v2441 = vrot.slane %v2440, 1
    %v2442 = vmax.f32 %v2440, %v2441
    %v2443 = vsel %vm87, %v2435, -inf
    %v2444 = vrot.slane %v2443, 4
    %v2445 = vmax.f32 %v2443, %v2444
    %v2446 = vrot.slane %v2445, 2
    %v2447 = vmax.f32 %v2445, %v2446
    %v2448 = vrot.slane %v2447, 1
    %v2449 = vmax.f32 %v2447, %v2448
    %v2450 = vsub.f32 %v2434, %v2442
    %v2451 = vsub.f32 %v2435, %v2449
    %v2452 = vmul.f32 %v2450, 1.442695
    %v2453 = vpow.pop %v2452
    %v2454 = vmul.f32 %v2451, 1.442695
    %v2455 = vpow.pop %v2454
    %v2456 = vmul.f32 %v2453, %v1179
    %v2457 = vmul.f32 %v2455, %v1184
    %v2458 = vsel %vm87, %v2456, 0.0
    %v2459 = vrot.slane %v2458, 4
    %v2460 = vadd.f32 %v2458, %v2459
    %v2461 = vrot.slane %v2460, 2
    %v2462 = vadd.f32 %v2460, %v2461
    %v2463 = vrot.slane %v2462, 1
    %v2464 = vadd.f32 %v2462, %v2463
    %v2465 = vsel %vm87, %v2457, 0.0
    %v2466 = vrot.slane %v2465, 4
    %v2467 = vadd.f32 %v2465, %v2466
    %v2468 = vrot.slane %v2467, 2
    %v2469 = vadd.f32 %v2467, %v2468
    %v2470 = vrot.slane %v2469, 1
    %v2471 = vadd.f32 %v2469, %v2470
    %v2472 = vadd.f32 %v2464, 1e-16
    %v2473 = vadd.f32 %v2471, 1e-16
    %v2474 = vrcp.pop %v2472
    %v2475 = vmul.f32 %v2456, %v2474
    %v2476 = vrcp.pop %v2473
    %v2477 = vmul.f32 %v2457, %v2476
    %vm2478 = vcmask 7168
    %v2479 = vsel %vm2478, %v71, 0.0
    %v2480 = vrot.slane %v2479, 4
    %v2481 = vadd.f32 %v2479, %v2480
    %v2482 = vrot.slane %v2481, 2
    %v2483 = vadd.f32 %v2481, %v2482
    %v2484 = vrot.slane %v2483, 1
    %v2485 = vadd.f32 %v2483, %v2484
    %v2486 = vsel %vm2478, %v72, 0.0
    %v2487 = vrot.slane %v2486, 4
    %v2488 = vadd.f32 %v2486, %v2487
    %v2489 = vrot.slane %v2488, 2
    %v2490 = vadd.f32 %v2488, %v2489
    %v2491 = vrot.slane %v2490, 1
    %v2492 = vadd.f32 %v2490, %v2491
    %v2493 = vmax.f32 %v2485, 1.0
    %v2494 = vmax.f32 %v2492, 1.0
    %v2495 = vcombine.high %v71, %v71
    %v2497 = vunpack.c.l.s4 1966171168
    %v2498 = vunpack.c.0.s8 %v2497
    %v2499 = vlaneseq
    %v2500 = vshrl.u32 %v2499, 7
    %v2501 = vsub.s32 %v2498, %v2500
    %v2502 = vrot.slane %v71, %v2501
    %v2504 = vunpack.c.l.s4 1966171168
    %v2505 = vunpack.c.0.s8 %v2504
    %v2506 = vlaneseq
    %v2507 = vshrl.u32 %v2506, 7
    %v2508 = vsub.s32 %v2505, %v2507
    %v2509 = vrot.slane %v2495, %v2508
    %v2510 = vcombine.high %v2502, %v2502
    %v2511 = vcombine.high %v2509, %v2509
    %v2513 = vunpack.c.l.s4 1966171168
    %v2514 = vunpack.c.0.s8 %v2513
    %v2515 = vlaneseq
    %v2516 = vshrl.u32 %v2515, 7
    %v2517 = vsub.s32 %v2514, %v2516
    %v2518 = vrot.slane %v2502, %v2517
    %v2520 = vunpack.c.l.s4 1966171168
    %v2521 = vunpack.c.0.s8 %v2520
    %v2522 = vlaneseq
    %v2523 = vshrl.u32 %v2522, 7
    %v2524 = vsub.s32 %v2521, %v2523
    %v2525 = vrot.slane %v2509, %v2524
    %v2527 = vunpack.c.l.s4 1966171168
    %v2528 = vunpack.c.0.s8 %v2527
    %v2529 = vlaneseq
    %v2530 = vshrl.u32 %v2529, 7
    %v2531 = vsub.s32 %v2528, %v2530
    %v2532 = vrot.slane %v2510, %v2531
    %v2534 = vunpack.c.l.s4 1966171168
    %v2535 = vunpack.c.0.s8 %v2534
    %v2536 = vlaneseq
    %v2537 = vshrl.u32 %v2536, 7
    %v2538 = vsub.s32 %v2535, %v2537
    %v2539 = vrot.slane %v2511, %v2538
    %v2540 = vcombine.high %v2518, %v2518
    %v2541 = vcombine.high %v2525, %v2525
    %v2542 = vcombine.high %v2532, %v2532
    %v2543 = vcombine.high %v2539, %v2539
    %v2544 = vcombine.high %v72, %v72
    %v2546 = vunpack.c.l.s4 1966171168
    %v2547 = vunpack.c.0.s8 %v2546
    %v2548 = vlaneseq
    %v2549 = vshrl.u32 %v2548, 7
    %v2550 = vsub.s32 %v2547, %v2549
    %v2551 = vrot.slane %v72, %v2550
    %v2553 = vunpack.c.l.s4 1966171168
    %v2554 = vunpack.c.0.s8 %v2553
    %v2555 = vlaneseq
    %v2556 = vshrl.u32 %v2555, 7
    %v2557 = vsub.s32 %v2554, %v2556
    %v2558 = vrot.slane %v2544, %v2557
    %v2559 = vcombine.high %v2551, %v2551
    %v2560 = vcombine.high %v2558, %v2558
    %v2562 = vunpack.c.l.s4 1966171168
    %v2563 = vunpack.c.0.s8 %v2562
    %v2564 = vlaneseq
    %v2565 = vshrl.u32 %v2564, 7
    %v2566 = vsub.s32 %v2563, %v2565
    %v2567 = vrot.slane %v2551, %v2566
    %v2569 = vunpack.c.l.s4 1966171168
    %v2570 = vunpack.c.0.s8 %v2569
    %v2571 = vlaneseq
    %v2572 = vshrl.u32 %v2571, 7
    %v2573 = vsub.s32 %v2570, %v2572
    %v2574 = vrot.slane %v2558, %v2573
    %v2576 = vunpack.c.l.s4 1966171168
    %v2577 = vunpack.c.0.s8 %v2576
    %v2578 = vlaneseq
    %v2579 = vshrl.u32 %v2578, 7
    %v2580 = vsub.s32 %v2577, %v2579
    %v2581 = vrot.slane %v2559, %v2580
    %v2583 = vunpack.c.l.s4 1966171168
    %v2584 = vunpack.c.0.s8 %v2583
    %v2585 = vlaneseq
    %v2586 = vshrl.u32 %v2585, 7
    %v2587 = vsub.s32 %v2584, %v2586
    %v2588 = vrot.slane %v2560, %v2587
    %v2589 = vcombine.high %v2567, %v2567
    %v2590 = vcombine.high %v2574, %v2574
    %v2591 = vcombine.high %v2581, %v2581
    %v2592 = vcombine.high %v2588, %v2588
    %vm2609 = vcmp.gt.f32.partialorder %v2518, 0.0
    %vm2610 = vcmp.gt.f32.partialorder %v2532, 0.0
    %vm2611 = vcmp.gt.f32.partialorder %v2540, 0.0
    %vm2612 = vcmp.gt.f32.partialorder %v2542, 0.0
    %vm2613 = vcmp.gt.f32.partialorder %v2525, 0.0
    %vm2614 = vcmp.gt.f32.partialorder %v2539, 0.0
    %vm2615 = vcmp.gt.f32.partialorder %v2541, 0.0
    %vm2616 = vcmp.gt.f32.partialorder %v2543, 0.0
    %vm2617 = vcmp.gt.f32.partialorder %v2567, 0.0
    %vm2618 = vcmp.gt.f32.partialorder %v2581, 0.0
    %vm2619 = vcmp.gt.f32.partialorder %v2589, 0.0
    %vm2620 = vcmp.gt.f32.partialorder %v2591, 0.0
    %vm2621 = vcmp.gt.f32.partialorder %v2574, 0.0
    %vm2622 = vcmp.gt.f32.partialorder %v2588, 0.0
    %vm2623 = vcmp.gt.f32.partialorder %v2590, 0.0
    %vm2624 = vcmp.gt.f32.partialorder %v2592, 0.0
    %v2627 = vcombine.high %v2352, %v2352
    %v2629 = vunpack.c.l.s4 1966171168
    %v2630 = vunpack.c.0.s8 %v2629
    %v2631 = vlaneseq
    %v2632 = vshrl.u32 %v2631, 7
    %v2633 = vsub.s32 %v2630, %v2632
    %v2634 = vrot.slane %v2352, %v2633
    %v2636 = vunpack.c.l.s4 1966171168
    %v2637 = vunpack.c.0.s8 %v2636
    %v2638 = vlaneseq
    %v2639 = vshrl.u32 %v2638, 7
    %v2640 = vsub.s32 %v2637, %v2639
    %v2641 = vrot.slane %v2627, %v2640
    %v2642 = vcombine.high %v2634, %v2634
    %v2643 = vcombine.high %v2641, %v2641
    %v2645 = vunpack.c.l.s4 1966171168
    %v2646 = vunpack.c.0.s8 %v2645
    %v2647 = vlaneseq
    %v2648 = vshrl.u32 %v2647, 7
    %v2649 = vsub.s32 %v2646, %v2648
    %v2650 = vrot.slane %v2634, %v2649
    %v2652 = vunpack.c.l.s4 1966171168
    %v2653 = vunpack.c.0.s8 %v2652
    %v2654 = vlaneseq
    %v2655 = vshrl.u32 %v2654, 7
    %v2656 = vsub.s32 %v2653, %v2655
    %v2657 = vrot.slane %v2641, %v2656
    %v2659 = vunpack.c.l.s4 1966171168
    %v2660 = vunpack.c.0.s8 %v2659
    %v2661 = vlaneseq
    %v2662 = vshrl.u32 %v2661, 7
    %v2663 = vsub.s32 %v2660, %v2662
    %v2664 = vrot.slane %v2642, %v2663
    %v2666 = vunpack.c.l.s4 1966171168
    %v2667 = vunpack.c.0.s8 %v2666
    %v2668 = vlaneseq
    %v2669 = vshrl.u32 %v2668, 7
    %v2670 = vsub.s32 %v2667, %v2669
    %v2671 = vrot.slane %v2643, %v2670
    %v2672 = vcombine.high %v2650, %v2650
    %v2673 = vcombine.high %v2657, %v2657
    %v2674 = vcombine.high %v2664, %v2664
    %v2675 = vcombine.high %v2671, %v2671
    %v2676 = vcombine.high %v2353, %v2353
    %v2678 = vunpack.c.l.s4 1966171168
    %v2679 = vunpack.c.0.s8 %v2678
    %v2680 = vlaneseq
    %v2681 = vshrl.u32 %v2680, 7
    %v2682 = vsub.s32 %v2679, %v2681
    %v2683 = vrot.slane %v2353, %v2682
    %v2685 = vunpack.c.l.s4 1966171168
    %v2686 = vunpack.c.0.s8 %v2685
    %v2687 = vlaneseq
    %v2688 = vshrl.u32 %v2687, 7
    %v2689 = vsub.s32 %v2686, %v2688
    %v2690 = vrot.slane %v2676, %v2689
    %v2691 = vcombine.high %v2683, %v2683
    %v2692 = vcombine.high %v2690, %v2690
    %v2694 = vunpack.c.l.s4 1966171168
    %v2695 = vunpack.c.0.s8 %v2694
    %v2696 = vlaneseq
    %v2697 = vshrl.u32 %v2696, 7
    %v2698 = vsub.s32 %v2695, %v2697
    %v2699 = vrot.slane %v2683, %v2698
    %v2701 = vunpack.c.l.s4 1966171168
    %v2702 = vunpack.c.0.s8 %v2701
    %v2703 = vlaneseq
    %v2704 = vshrl.u32 %v2703, 7
    %v2705 = vsub.s32 %v2702, %v2704
    %v2706 = vrot.slane %v2690, %v2705
    %v2708 = vunpack.c.l.s4 1966171168
    %v2709 = vunpack.c.0.s8 %v2708
    %v2710 = vlaneseq
    %v2711 = vshrl.u32 %v2710, 7
    %v2712 = vsub.s32 %v2709, %v2711
    %v2713 = vrot.slane %v2691, %v2712
    %v2715 = vunpack.c.l.s4 1966171168
    %v2716 = vunpack.c.0.s8 %v2715
    %v2717 = vlaneseq
    %v2718 = vshrl.u32 %v2717, 7
    %v2719 = vsub.s32 %v2716, %v2718
    %v2720 = vrot.slane %v2692, %v2719
    %v2721 = vcombine.high %v2699, %v2699
    %v2722 = vcombine.high %v2706, %v2706
    %v2723 = vcombine.high %v2713, %v2713
    %v2724 = vcombine.high %v2720, %v2720
    %v2725 = vlaneseq
    %v2726 = vshrl.u32 %v2725, 7
    %v2727 = vsub.s32 0, %v2726
    %v2728 = vrot.slane %v2475, %v2727
    %2730 = vbcast.lane.b32.xlu0 %v2728, 256
    %v2731 = vpop.permute.xlu0 %2730
    %v2732 = vlaneseq
    %v2733 = vshrl.u32 %v2732, 7
    %v2734 = vsub.s32 1, %v2733
    %v2735 = vrot.slane %v2475, %v2734
    %2737 = vbcast.lane.b32.xlu0 %v2735, 256
    %v2738 = vpop.permute.xlu0 %2737
    %v2739 = vlaneseq
    %v2740 = vshrl.u32 %v2739, 7
    %v2741 = vsub.s32 2, %v2740
    %v2742 = vrot.slane %v2475, %v2741
    %2744 = vbcast.lane.b32.xlu0 %v2742, 256
    %v2745 = vpop.permute.xlu0 %2744
    %v2746 = vlaneseq
    %v2747 = vshrl.u32 %v2746, 7
    %v2748 = vsub.s32 3, %v2747
    %v2749 = vrot.slane %v2475, %v2748
    %2751 = vbcast.lane.b32.xlu0 %v2749, 256
    %v2752 = vpop.permute.xlu0 %2751
    %v2753 = vlaneseq
    %v2754 = vshrl.u32 %v2753, 7
    %v2755 = vsub.s32 4, %v2754
    %v2756 = vrot.slane %v2475, %v2755
    %2758 = vbcast.lane.b32.xlu0 %v2756, 256
    %v2759 = vpop.permute.xlu0 %2758
    %v2760 = vlaneseq
    %v2761 = vshrl.u32 %v2760, 7
    %v2762 = vsub.s32 5, %v2761
    %v2763 = vrot.slane %v2475, %v2762
    %2765 = vbcast.lane.b32.xlu0 %v2763, 256
    %v2766 = vpop.permute.xlu0 %2765
    %v2767 = vlaneseq
    %v2768 = vshrl.u32 %v2767, 7
    %v2769 = vsub.s32 6, %v2768
    %v2770 = vrot.slane %v2475, %v2769
    %2772 = vbcast.lane.b32.xlu0 %v2770, 256
    %v2773 = vpop.permute.xlu0 %2772
    %v2774 = vlaneseq
    %v2775 = vshrl.u32 %v2774, 7
    %v2776 = vsub.s32 7, %v2775
    %v2777 = vrot.slane %v2475, %v2776
    %2779 = vbcast.lane.b32.xlu0 %v2777, 256
    %v2780 = vpop.permute.xlu0 %2779
    %v2781 = vlaneseq
    %v2782 = vshrl.u32 %v2781, 7
    %v2783 = vsub.s32 0, %v2782
    %v2784 = vrot.slane %v2477, %v2783
    %2786 = vbcast.lane.b32.xlu0 %v2784, 256
    %v2787 = vpop.permute.xlu0 %2786
    %v2788 = vlaneseq
    %v2789 = vshrl.u32 %v2788, 7
    %v2790 = vsub.s32 1, %v2789
    %v2791 = vrot.slane %v2477, %v2790
    %2793 = vbcast.lane.b32.xlu0 %v2791, 256
    %v2794 = vpop.permute.xlu0 %2793
    %v2795 = vlaneseq
    %v2796 = vshrl.u32 %v2795, 7
    %v2797 = vsub.s32 2, %v2796
    %v2798 = vrot.slane %v2477, %v2797
    %2800 = vbcast.lane.b32.xlu0 %v2798, 256
    %v2801 = vpop.permute.xlu0 %2800
    %v2802 = vlaneseq
    %v2803 = vshrl.u32 %v2802, 7
    %v2804 = vsub.s32 3, %v2803
    %v2805 = vrot.slane %v2477, %v2804
    %2807 = vbcast.lane.b32.xlu0 %v2805, 256
    %v2808 = vpop.permute.xlu0 %2807
    %v2809 = vlaneseq
    %v2810 = vshrl.u32 %v2809, 7
    %v2811 = vsub.s32 4, %v2810
    %v2812 = vrot.slane %v2477, %v2811
    %2814 = vbcast.lane.b32.xlu0 %v2812, 256
    %v2815 = vpop.permute.xlu0 %2814
    %v2816 = vlaneseq
    %v2817 = vshrl.u32 %v2816, 7
    %v2818 = vsub.s32 5, %v2817
    %v2819 = vrot.slane %v2477, %v2818
    %2821 = vbcast.lane.b32.xlu0 %v2819, 256
    %v2822 = vpop.permute.xlu0 %2821
    %v2823 = vlaneseq
    %v2824 = vshrl.u32 %v2823, 7
    %v2825 = vsub.s32 6, %v2824
    %v2826 = vrot.slane %v2477, %v2825
    %2828 = vbcast.lane.b32.xlu0 %v2826, 256
    %v2829 = vpop.permute.xlu0 %2828
    %v2830 = vlaneseq
    %v2831 = vshrl.u32 %v2830, 7
    %v2832 = vsub.s32 7, %v2831
    %v2833 = vrot.slane %v2477, %v2832
    %2835 = vbcast.lane.b32.xlu0 %v2833, 256
    %v2836 = vpop.permute.xlu0 %2835
    %v2837 = vlaneseq
    %v2838 = vshrl.u32 %v2837, 7
    %v2839 = vsub.s32 0, %v2838
    %v2840 = vrot.slane %v2650, %v2839
    %v2841 = vlaneseq
    %v2842 = vshrl.u32 %v2841, 7
    %v2843 = vsub.s32 0, %v2842
    %v2844 = vrot.slane %v2664, %v2843
    %v2845 = vlaneseq
    %v2846 = vshrl.u32 %v2845, 7
    %v2847 = vsub.s32 0, %v2846
    %v2848 = vrot.slane %v2672, %v2847
    %v2849 = vlaneseq
    %v2850 = vshrl.u32 %v2849, 7
    %v2851 = vsub.s32 0, %v2850
    %v2852 = vrot.slane %v2674, %v2851
    %v2853 = vlaneseq
    %v2854 = vshrl.u32 %v2853, 7
    %v2855 = vsub.s32 0, %v2854
    %v2856 = vrot.slane %v2657, %v2855
    %v2857 = vlaneseq
    %v2858 = vshrl.u32 %v2857, 7
    %v2859 = vsub.s32 0, %v2858
    %v2860 = vrot.slane %v2671, %v2859
    %v2861 = vlaneseq
    %v2862 = vshrl.u32 %v2861, 7
    %v2863 = vsub.s32 0, %v2862
    %v2864 = vrot.slane %v2673, %v2863
    %v2865 = vlaneseq
    %v2866 = vshrl.u32 %v2865, 7
    %v2867 = vsub.s32 0, %v2866
    %v2868 = vrot.slane %v2675, %v2867
    %v2869 = vlaneseq
    %v2870 = vshrl.u32 %v2869, 7
    %v2871 = vsub.s32 0, %v2870
    %v2872 = vrot.slane %v2699, %v2871
    %v2873 = vlaneseq
    %v2874 = vshrl.u32 %v2873, 7
    %v2875 = vsub.s32 0, %v2874
    %v2876 = vrot.slane %v2713, %v2875
    %v2877 = vlaneseq
    %v2878 = vshrl.u32 %v2877, 7
    %v2879 = vsub.s32 0, %v2878
    %v2880 = vrot.slane %v2721, %v2879
    %v2881 = vlaneseq
    %v2882 = vshrl.u32 %v2881, 7
    %v2883 = vsub.s32 0, %v2882
    %v2884 = vrot.slane %v2723, %v2883
    %v2885 = vlaneseq
    %v2886 = vshrl.u32 %v2885, 7
    %v2887 = vsub.s32 0, %v2886
    %v2888 = vrot.slane %v2706, %v2887
    %v2889 = vlaneseq
    %v2890 = vshrl.u32 %v2889, 7
    %v2891 = vsub.s32 0, %v2890
    %v2892 = vrot.slane %v2720, %v2891
    %v2893 = vlaneseq
    %v2894 = vshrl.u32 %v2893, 7
    %v2895 = vsub.s32 0, %v2894
    %v2896 = vrot.slane %v2722, %v2895
    %v2897 = vlaneseq
    %v2898 = vshrl.u32 %v2897, 7
    %v2899 = vsub.s32 0, %v2898
    %v2900 = vrot.slane %v2724, %v2899
    %v2917 = vmul.f32 %v2840, %v2731
    %v2918 = vmul.f32 %v2844, %v2738
    %v2919 = vmul.f32 %v2848, %v2745
    %v2920 = vmul.f32 %v2852, %v2752
    %v2921 = vmul.f32 %v2856, %v2759
    %v2922 = vmul.f32 %v2860, %v2766
    %v2923 = vmul.f32 %v2864, %v2773
    %v2924 = vmul.f32 %v2868, %v2780
    %v2925 = vmul.f32 %v2872, %v2787
    %v2926 = vmul.f32 %v2876, %v2794
    %v2927 = vmul.f32 %v2880, %v2801
    %v2928 = vmul.f32 %v2884, %v2808
    %v2929 = vmul.f32 %v2888, %v2815
    %v2930 = vmul.f32 %v2892, %v2822
    %v2931 = vmul.f32 %v2896, %v2829
    %v2932 = vmul.f32 %v2900, %v2836
    %v2933 = vsel %vm2609, 1, 0
    %v2934 = vsel %vm2610, 1, 0
    %v2935 = vsel %vm2611, 1, 0
    %v2936 = vsel %vm2612, 1, 0
    %v2937 = vsel %vm2613, 1, 0
    %v2938 = vsel %vm2614, 1, 0
    %v2939 = vsel %vm2615, 1, 0
    %v2940 = vsel %vm2616, 1, 0
    %v2941 = vsel %vm2617, 1, 0
    %v2942 = vsel %vm2618, 1, 0
    %v2943 = vsel %vm2619, 1, 0
    %v2944 = vsel %vm2620, 1, 0
    %v2945 = vsel %vm2621, 1, 0
    %v2946 = vsel %vm2622, 1, 0
    %v2947 = vsel %vm2623, 1, 0
    %v2948 = vsel %vm2624, 1, 0
    %v2949 = vlaneseq
    %v2950 = vshrl.u32 %v2949, 7
    %v2951 = vsub.s32 0, %v2950
    %v2952 = vrot.slane %v2933, %v2951
    %v2953 = vlaneseq
    %v2954 = vshrl.u32 %v2953, 7
    %v2955 = vsub.s32 0, %v2954
    %v2956 = vrot.slane %v2934, %v2955
    %v2957 = vlaneseq
    %v2958 = vshrl.u32 %v2957, 7
    %v2959 = vsub.s32 0, %v2958
    %v2960 = vrot.slane %v2935, %v2959
    %v2961 = vlaneseq
    %v2962 = vshrl.u32 %v2961, 7
    %v2963 = vsub.s32 0, %v2962
    %v2964 = vrot.slane %v2936, %v2963
    %v2965 = vlaneseq
    %v2966 = vshrl.u32 %v2965, 7
    %v2967 = vsub.s32 0, %v2966
    %v2968 = vrot.slane %v2937, %v2967
    %v2969 = vlaneseq
    %v2970 = vshrl.u32 %v2969, 7
    %v2971 = vsub.s32 0, %v2970
    %v2972 = vrot.slane %v2938, %v2971
    %v2973 = vlaneseq
    %v2974 = vshrl.u32 %v2973, 7
    %v2975 = vsub.s32 0, %v2974
    %v2976 = vrot.slane %v2939, %v2975
    %v2977 = vlaneseq
    %v2978 = vshrl.u32 %v2977, 7
    %v2979 = vsub.s32 0, %v2978
    %v2980 = vrot.slane %v2940, %v2979
    %v2981 = vlaneseq
    %v2982 = vshrl.u32 %v2981, 7
    %v2983 = vsub.s32 0, %v2982
    %v2984 = vrot.slane %v2941, %v2983
    %v2985 = vlaneseq
    %v2986 = vshrl.u32 %v2985, 7
    %v2987 = vsub.s32 0, %v2986
    %v2988 = vrot.slane %v2942, %v2987
    %v2989 = vlaneseq
    %v2990 = vshrl.u32 %v2989, 7
    %v2991 = vsub.s32 0, %v2990
    %v2992 = vrot.slane %v2943, %v2991
    %v2993 = vlaneseq
    %v2994 = vshrl.u32 %v2993, 7
    %v2995 = vsub.s32 0, %v2994
    %v2996 = vrot.slane %v2944, %v2995
    %v2997 = vlaneseq
    %v2998 = vshrl.u32 %v2997, 7
    %v2999 = vsub.s32 0, %v2998
    %v3000 = vrot.slane %v2945, %v2999
    %v3001 = vlaneseq
    %v3002 = vshrl.u32 %v3001, 7
    %v3003 = vsub.s32 0, %v3002
    %v3004 = vrot.slane %v2946, %v3003
    %v3005 = vlaneseq
    %v3006 = vshrl.u32 %v3005, 7
    %v3007 = vsub.s32 0, %v3006
    %v3008 = vrot.slane %v2947, %v3007
    %v3009 = vlaneseq
    %v3010 = vshrl.u32 %v3009, 7
    %v3011 = vsub.s32 0, %v3010
    %v3012 = vrot.slane %v2948, %v3011
    %3013 = vset.pattern.permute.xlu0 0
    %3014 = vperm.xlu0 %3013, %v2952
    %v3015 = vpop.permute.xlu0 %3014
    %3016 = vset.pattern.permute.xlu0 0
    %3017 = vperm.xlu0 %3016, %v2956
    %v3018 = vpop.permute.xlu0 %3017
    %3019 = vset.pattern.permute.xlu0 0
    %3020 = vperm.xlu0 %3019, %v2960
    %v3021 = vpop.permute.xlu0 %3020
    %3022 = vset.pattern.permute.xlu0 0
    %3023 = vperm.xlu0 %3022, %v2964
    %v3024 = vpop.permute.xlu0 %3023
    %3025 = vset.pattern.permute.xlu0 0
    %3026 = vperm.xlu0 %3025, %v2968
    %v3027 = vpop.permute.xlu0 %3026
    %3028 = vset.pattern.permute.xlu0 0
    %3029 = vperm.xlu0 %3028, %v2972
    %v3030 = vpop.permute.xlu0 %3029
    %3031 = vset.pattern.permute.xlu0 0
    %3032 = vperm.xlu0 %3031, %v2976
    %v3033 = vpop.permute.xlu0 %3032
    %3034 = vset.pattern.permute.xlu0 0
    %3035 = vperm.xlu0 %3034, %v2980
    %v3036 = vpop.permute.xlu0 %3035
    %3037 = vset.pattern.permute.xlu0 0
    %3038 = vperm.xlu0 %3037, %v2984
    %v3039 = vpop.permute.xlu0 %3038
    %3040 = vset.pattern.permute.xlu0 0
    %3041 = vperm.xlu0 %3040, %v2988
    %v3042 = vpop.permute.xlu0 %3041
    %3043 = vset.pattern.permute.xlu0 0
    %3044 = vperm.xlu0 %3043, %v2992
    %v3045 = vpop.permute.xlu0 %3044
    %3046 = vset.pattern.permute.xlu0 0
    %3047 = vperm.xlu0 %3046, %v2996
    %v3048 = vpop.permute.xlu0 %3047
    %3049 = vset.pattern.permute.xlu0 0
    %3050 = vperm.xlu0 %3049, %v3000
    %v3051 = vpop.permute.xlu0 %3050
    %3052 = vset.pattern.permute.xlu0 0
    %3053 = vperm.xlu0 %3052, %v3004
    %v3054 = vpop.permute.xlu0 %3053
    %3055 = vset.pattern.permute.xlu0 0
    %3056 = vperm.xlu0 %3055, %v3008
    %v3057 = vpop.permute.xlu0 %3056
    %3058 = vset.pattern.permute.xlu0 0
    %3059 = vperm.xlu0 %3058, %v3012
    %v3060 = vpop.permute.xlu0 %3059
    %vm3061 = vcmp.eq.s32.totalorder %v3015, 1
    %vm3062 = vcmp.eq.s32.totalorder %v3018, 1
    %vm3063 = vcmp.eq.s32.totalorder %v3021, 1
    %vm3064 = vcmp.eq.s32.totalorder %v3024, 1
    %vm3065 = vcmp.eq.s32.totalorder %v3027, 1
    %vm3066 = vcmp.eq.s32.totalorder %v3030, 1
    %vm3067 = vcmp.eq.s32.totalorder %v3033, 1
    %vm3068 = vcmp.eq.s32.totalorder %v3036, 1
    %vm3069 = vcmp.eq.s32.totalorder %v3039, 1
    %vm3070 = vcmp.eq.s32.totalorder %v3042, 1
    %vm3071 = vcmp.eq.s32.totalorder %v3045, 1
    %vm3072 = vcmp.eq.s32.totalorder %v3048, 1
    %vm3073 = vcmp.eq.s32.totalorder %v3051, 1
    %vm3074 = vcmp.eq.s32.totalorder %v3054, 1
    %vm3075 = vcmp.eq.s32.totalorder %v3057, 1
    %vm3076 = vcmp.eq.s32.totalorder %v3060, 1
    %v3077 = vsel %vm3061, %v2917, -1e+30
    %v3078 = vsel %vm3062, %v2918, -1e+30
    %v3079 = vsel %vm3063, %v2919, -1e+30
    %v3080 = vsel %vm3064, %v2920, -1e+30
    %v3081 = vsel %vm3065, %v2921, -1e+30
    %v3082 = vsel %vm3066, %v2922, -1e+30
    %v3083 = vsel %vm3067, %v2923, -1e+30
    %v3084 = vsel %vm3068, %v2924, -1e+30
    %v3085 = vsel %vm3069, %v2925, -1e+30
    %v3086 = vsel %vm3070, %v2926, -1e+30
    %v3087 = vsel %vm3071, %v2927, -1e+30
    %v3088 = vsel %vm3072, %v2928, -1e+30
    %v3089 = vsel %vm3073, %v2929, -1e+30
    %v3090 = vsel %vm3074, %v2930, -1e+30
    %v3091 = vsel %vm3075, %v2931, -1e+30
    %v3092 = vsel %vm3076, %v2932, -1e+30
    %vm3093 = vcmask 257024
    %v3094 = vsel %vm3093, %v3077, -inf
    %v3095 = vsel %vm3093, %v3078, -inf
    %v3096 = vsel %vm3093, %v3079, -inf
    %v3097 = vmax.f32 %v3094, %v3096
    %v3098 = vsel %vm3093, %v3080, -inf
    %v3099 = vmax.f32 %v3095, %v3098
    %v3100 = vsel %vm3093, %v3081, -inf
    %v3101 = vmax.f32 %v3097, %v3100
    %v3102 = vsel %vm3093, %v3082, -inf
    %v3103 = vmax.f32 %v3099, %v3102
    %v3104 = vsel %vm3093, %v3083, -inf
    %v3105 = vmax.f32 %v3101, %v3104
    %v3106 = vsel %vm3093, %v3084, -inf
    %v3107 = vmax.f32 %v3103, %v3106
    %v3108 = vmax.f32 %v3105, %v3107
    %v3109 = vsel %vm3093, %v3085, -inf
    %v3110 = vsel %vm3093, %v3086, -inf
    %v3111 = vsel %vm3093, %v3087, -inf
    %v3112 = vmax.f32 %v3109, %v3111
    %v3113 = vsel %vm3093, %v3088, -inf
    %v3114 = vmax.f32 %v3110, %v3113
    %v3115 = vsel %vm3093, %v3089, -inf
    %v3116 = vmax.f32 %v3112, %v3115
    %v3117 = vsel %vm3093, %v3090, -inf
    %v3118 = vmax.f32 %v3114, %v3117
    %v3119 = vsel %vm3093, %v3091, -inf
    %v3120 = vmax.f32 %v3116, %v3119
    %v3121 = vsel %vm3093, %v3092, -inf
    %v3122 = vmax.f32 %v3118, %v3121
    %v3123 = vmax.f32 %v3120, %v3122
    %3124 = vxpose.xlu0.b32.start [1/16] %v2475, 128
    %3125 = vxpose.xlu0.b32.cont [2/16] 0.0, 128
    %3126 = vxpose.xlu0.b32.cont [3/16] 0.0, 128
    %3127 = vxpose.xlu0.b32.cont [4/16] 0.0, 128
    %3128 = vxpose.xlu0.b32.cont [5/16] 0.0, 128
    %3129 = vxpose.xlu0.b32.cont [6/16] 0.0, 128
    %3130 = vxpose.xlu0.b32.cont [7/16] 0.0, 128
    %3131 = vxpose.xlu0.b32.cont [8/16] 0.0, 128
    %3132 = vxpose.xlu0.b32.cont [9/16] 0.0, 128
    %3133 = vxpose.xlu0.b32.cont [10/16] 0.0, 128
    %3134 = vxpose.xlu0.b32.cont [11/16] 0.0, 128
    %3135 = vxpose.xlu0.b32.cont [12/16] 0.0, 128
    %3136 = vxpose.xlu0.b32.cont [13/16] 0.0, 128
    %3137 = vxpose.xlu0.b32.cont [14/16] 0.0, 128
    %3138 = vxpose.xlu0.b32.cont [15/16] 0.0, 128
    %3139 = vxpose.xlu0.b32.end [16/16] 0.0, 128
    %v3140 = vpop.trf.xlu0
    %v3141 = vpop.trf.xlu0
    %v3142 = vpop.trf.xlu0
    %v3143 = vpop.trf.xlu0
    %v3144 = vpop.trf.xlu0
    %v3145 = vpop.trf.xlu0
    %v3146 = vpop.trf.xlu0
    %v3147 = vpop.trf.xlu0
    %v3148 = vpop.trf.xlu0
    %v3149 = vpop.trf.xlu0
    %v3150 = vpop.trf.xlu0
    %v3151 = vpop.trf.xlu0
    %v3152 = vpop.trf.xlu0
    %v3153 = vpop.trf.xlu0
    %v3154 = vpop.trf.xlu0
    %v3155 = vpop.trf.xlu0
    %3156 = vxpose.xlu0.b32.start [1/16] %v2477, 128
    %3157 = vxpose.xlu0.b32.cont [2/16] 0.0, 128
    %3158 = vxpose.xlu0.b32.cont [3/16] 0.0, 128
    %3159 = vxpose.xlu0.b32.cont [4/16] 0.0, 128
    %3160 = vxpose.xlu0.b32.cont [5/16] 0.0, 128
    %3161 = vxpose.xlu0.b32.cont [6/16] 0.0, 128
    %3162 = vxpose.xlu0.b32.cont [7/16] 0.0, 128
    %3163 = vxpose.xlu0.b32.cont [8/16] 0.0, 128
    %3164 = vxpose.xlu0.b32.cont [9/16] 0.0, 128
    %3165 = vxpose.xlu0.b32.cont [10/16] 0.0, 128
    %3166 = vxpose.xlu0.b32.cont [11/16] 0.0, 128
    %3167 = vxpose.xlu0.b32.cont [12/16] 0.0, 128
    %3168 = vxpose.xlu0.b32.cont [13/16] 0.0, 128
    %3169 = vxpose.xlu0.b32.cont [14/16] 0.0, 128
    %3170 = vxpose.xlu0.b32.cont [15/16] 0.0, 128
    %3171 = vxpose.xlu0.b32.end [16/16] 0.0, 128
    %v3172 = vpop.trf.xlu0
    %v3173 = vpop.trf.xlu0
    %v3174 = vpop.trf.xlu0
    %v3175 = vpop.trf.xlu0
    %v3176 = vpop.trf.xlu0
    %v3177 = vpop.trf.xlu0
    %v3178 = vpop.trf.xlu0
    %v3179 = vpop.trf.xlu0
    %v3180 = vpop.trf.xlu0
    %v3181 = vpop.trf.xlu0
    %v3182 = vpop.trf.xlu0
    %v3183 = vpop.trf.xlu0
    %v3184 = vpop.trf.xlu0
    %v3185 = vpop.trf.xlu0
    %v3186 = vpop.trf.xlu0
    %v3187 = vpop.trf.xlu0
    %v3188 = vpack.c.bf16 %v3140, %v3140
    %v3189 = vpack.c.bf16 %v3172, %v3172
    %v3190 = vpack.c.bf16 %v2352, %v2352
    %v3191 = vpack.c.bf16 %v2353, %v2353
    %v3193 = vsel %vm167, %v3188, 0
    %v3196 = vsel %vm664, %v3190, 0
    %3198 = vmatprep.subr.bf16.mxu0 0
    %3199 = vmatpush1.bf16.msra.mxu0 %v3196
    %3200 = vmatprep.subr.bf16.mxu0 0
    %3201 = vmatpush1.bf16.msra.mxu0 0
    %3202 = vmatprep.subr.bf16.mxu0 0
    %3203 = vmatpush1.bf16.msra.mxu0 0
    %3204 = vmatprep.subr.bf16.mxu0 0
    %3205 = vmatpush1.bf16.msra.mxu0 0
    %3206 = vmatprep.subr.bf16.mxu0 0
    %3207 = vmatpush1.bf16.msra.mxu0 0
    %3208 = vmatprep.subr.bf16.mxu0 0
    %3209 = vmatpush1.bf16.msra.mxu0 0
    %3210 = vmatprep.subr.bf16.mxu0 0
    %3211 = vmatpush1.bf16.msra.mxu0 0
    %3212 = vmatprep.subr.bf16.mxu0 0
    %3213 = vmatpush1.bf16.msra.mxu0 0
    %3214 = vmatprep.subr.bf16.mxu0 0
    %3215 = vmatpush1.bf16.msra.mxu0 0
    %3216 = vmatprep.subr.bf16.mxu0 0
    %3217 = vmatpush1.bf16.msra.mxu0 0
    %3218 = vmatprep.subr.bf16.mxu0 0
    %3219 = vmatpush1.bf16.msra.mxu0 0
    %3220 = vmatprep.subr.bf16.mxu0 0
    %3221 = vmatpush1.bf16.msra.mxu0 0
    %3222 = vmatprep.subr.bf16.mxu0 0
    %3223 = vmatpush1.bf16.msra.mxu0 0
    %3224 = vmatprep.subr.bf16.mxu0 0
    %3225 = vmatpush1.bf16.msra.mxu0 0
    %3226 = vmatprep.subr.bf16.mxu0 0
    %3227 = vmatpush1.bf16.msra.mxu0 0
    %3228 = vmatprep.subr.bf16.mxu0 0
    %3229 = vmatpush1.bf16.msra.mxu0 0
    %3230 = vmatprep.mubr.bf16.mxu0 0
    %3231 = vmatmul.mubr.bf16.gmra.mrb[0].mxu0 %v3193
    %v3232 = vpop.f32.mrb[0].mxu0
    %v3233 = vadd.f32 0.0, %v3232
    %v3234 = vpop.f32.mrb[0].mxu0
    %v3235 = vpop.f32.mrb[0].mxu0
    %v3236 = vpop.f32.mrb[0].mxu0
    %3237 = vdwg.mxu0
    %v3239 = vsel %vm167, %v3189, 0
    %v3242 = vsel %vm664, %v3191, 0
    %3244 = vmatprep.subr.bf16.mxu0 0
    %3245 = vmatpush1.bf16.msra.mxu0 %v3242
    %3246 = vmatprep.subr.bf16.mxu0 0
    %3247 = vmatpush1.bf16.msra.mxu0 0
    %3248 = vmatprep.subr.bf16.mxu0 0
    %3249 = vmatpush1.bf16.msra.mxu0 0
    %3250 = vmatprep.subr.bf16.mxu0 0
    %3251 = vmatpush1.bf16.msra.mxu0 0
    %3252 = vmatprep.subr.bf16.mxu0 0
    %3253 = vmatpush1.bf16.msra.mxu0 0
    %3254 = vmatprep.subr.bf16.mxu0 0
    %3255 = vmatpush1.bf16.msra.mxu0 0
    %3256 = vmatprep.subr.bf16.mxu0 0
    %3257 = vmatpush1.bf16.msra.mxu0 0
    %3258 = vmatprep.subr.bf16.mxu0 0
    %3259 = vmatpush1.bf16.msra.mxu0 0
    %3260 = vmatprep.subr.bf16.mxu0 0
    %3261 = vmatpush1.bf16.msra.mxu0 0
    %3262 = vmatprep.subr.bf16.mxu0 0
    %3263 = vmatpush1.bf16.msra.mxu0 0
    %3264 = vmatprep.subr.bf16.mxu0 0
    %3265 = vmatpush1.bf16.msra.mxu0 0
    %3266 = vmatprep.subr.bf16.mxu0 0
    %3267 = vmatpush1.bf16.msra.mxu0 0
    %3268 = vmatprep.subr.bf16.mxu0 0
    %3269 = vmatpush1.bf16.msra.mxu0 0
    %3270 = vmatprep.subr.bf16.mxu0 0
    %3271 = vmatpush1.bf16.msra.mxu0 0
    %3272 = vmatprep.subr.bf16.mxu0 0
    %3273 = vmatpush1.bf16.msra.mxu0 0
    %3274 = vmatprep.subr.bf16.mxu0 0
    %3275 = vmatpush1.bf16.msra.mxu0 0
    %3276 = vmatprep.mubr.bf16.mxu0 0
    %3277 = vmatmul.mubr.bf16.gmra.mrb[0].mxu0 %v3239
    %v3278 = vpop.f32.mrb[0].mxu0
    %v3279 = vadd.f32 0.0, %v3278
    %v3280 = vpop.f32.mrb[0].mxu0
    %v3281 = vpop.f32.mrb[0].mxu0
    %v3282 = vpop.f32.mrb[0].mxu0
    %3283 = vdwg.mxu0
    %3285 = vset.pattern.permute.xlu0 0
    %3286 = vperm.xlu0 %3285, %v2493
    %v3287 = vpop.permute.xlu0 %3286
    %3290 = vset.pattern.permute.xlu0 0
    %3291 = vperm.xlu0 %3290, %v2494
    %v3292 = vpop.permute.xlu0 %3291
    %v3294 = vrcp.pop %v3287
    %v3295 = vmul.f32 %v3233, %v3294
    %v3296 = vrcp.pop %v3292
    %v3297 = vmul.f32 %v3279, %v3296
    %3300 = vrot.lane.b32.xlu0 %v3295, 32
    %v3301 = vpop.permute.xlu0 %3300
    %3302 = vrot.lane.b32.xlu0 %v3297, 32
    %v3303 = vpop.permute.xlu0 %3302
    %v3306 = vsel %vm1127, %v3108, %v3301
    %v3308 = vunpack.c.l.s4 1983009808
    %v3309 = vunpack.c.0.s8 %v3308
    %v3310 = vlaneseq
    %v3311 = vshrl.u32 %v3310, 7
    %v3312 = vsub.s32 %v3309, %v3311
    %v3313 = vrot.slane %v3306, %v3312
    %v3314 = vsel %vm1127, %v3123, %v3303
    %v3316 = vunpack.c.l.s4 1983009808
    %v3317 = vunpack.c.0.s8 %v3316
    %v3318 = vlaneseq
    %v3319 = vshrl.u32 %v3318, 7
    %v3320 = vsub.s32 %v3317, %v3319
    %v3321 = vrot.slane %v3314, %v3320
    %v3322 = vcombine.low %v3313, %v3321
    %v3323 = vcombine.high %v3313, %v3321
    %v3325 = vunpack.c.l.s4 1934713408
    %v3326 = vunpack.c.0.s8 %v3325
    %v3327 = vlaneseq
    %v3328 = vshrl.u32 %v3327, 7
    %v3329 = vsub.s32 %v3326, %v3328
    %v3330 = vrot.slane %v3322, %v3329
    %v3332 = vunpack.c.l.s4 1934713408
    %v3333 = vunpack.c.0.s8 %v3332
    %v3334 = vlaneseq
    %v3335 = vshrl.u32 %v3334, 7
    %v3336 = vsub.s32 %v3333, %v3335
    %v3337 = vrot.slane %v3323, %v3336
    %v3338 = vcombine.high %v3330, 0.0
    %v3339 = vcombine.high %v3337, 0.0
    %3341 = vrot.lane.b32.xlu0 %v3338, 64
    %v3342 = vpop.permute.xlu0 %3341
    %3345 = vrot.lane.b32.xlu0 %v3339, 64
    %v3346 = vpop.permute.xlu0 %3345
    %vm3348 = vcmask 523264
    %v3349 = vsel %vm3348, %v3330, %v3342
    %v3350 = vsel %vm3348, %v3337, %v3346
    %v3353 = vcombine.low %v3349, %v3350
    %v3355 = vunpack.c.l.s4 1983009808
    %v3356 = vunpack.c.0.s8 %v3355
    %v3357 = vlaneseq
    %v3358 = vshrl.u32 %v3357, 7
    %v3359 = vsub.s32 %v3356, %v3358
    %v3360 = vrot.slane %v3353, %v3359
    %3362 = vst [vmem:[#allocation4] sm:$0xf] %v3360
    %v3363 = vld [vmem:[%s15] sm:$0x3]
    %v3364 = vld [vmem:[%s16] sm:$0xf]
    %v3365 = vld [vmem:[%s16 + $0x4] sm:$0xf]
    %v3366 = vld [vmem:[%s16 + $0x8] sm:$0xf]
    %v3367 = vld [vmem:[%s16 + $0xc] sm:$0xf]
    %v3372 = vunpack.c.l.b16 %v3364
    %v3373 = vunpack.c.l.b16 %v3365
    %v3374 = vunpack.c.l.b16 %v3366
    %v3375 = vunpack.c.l.b16 %v3367
    %v3376 = vpack.c.b16 %v3373, %v3372
    %v3377 = vpack.c.b16 %v3375, %v3374
    %3380 = vmatprep.subr.bf16.mxu0 0
    %3381 = vmatpush1.bf16.msra.mxu0 %v3376
    %3382 = vmatprep.subr.bf16.mxu0 0
    %3383 = vmatpush1.bf16.msra.mxu0 %v3377
    %3384 = vmatprep.subr.bf16.mxu0 0
    %3385 = vmatpush1.bf16.msra.mxu0 0
    %3386 = vmatprep.subr.bf16.mxu0 0
    %3387 = vmatpush1.bf16.msra.mxu0 0
    %3388 = vmatprep.subr.bf16.mxu0 0
    %3389 = vmatpush1.bf16.msra.mxu0 0
    %3390 = vmatprep.subr.bf16.mxu0 0
    %3391 = vmatpush1.bf16.msra.mxu0 0
    %3392 = vmatprep.subr.bf16.mxu0 0
    %3393 = vmatpush1.bf16.msra.mxu0 0
    %3394 = vmatprep.subr.bf16.mxu0 0
    %3395 = vmatpush1.bf16.msra.mxu0 0
    %3396 = vmatprep.subr.bf16.mxu0 0
    %3397 = vmatpush1.bf16.msra.mxu0 0
    %3398 = vmatprep.subr.bf16.mxu0 0
    %3399 = vmatpush1.bf16.msra.mxu0 0
    %3400 = vmatprep.subr.bf16.mxu0 0
    %3401 = vmatpush1.bf16.msra.mxu0 0
    %3402 = vmatprep.subr.bf16.mxu0 0
    %3403 = vmatpush1.bf16.msra.mxu0 0
    %3404 = vmatprep.subr.bf16.mxu0 0
    %3405 = vmatpush1.bf16.msra.mxu0 0
    %3406 = vmatprep.subr.bf16.mxu0 0
    %3407 = vmatpush1.bf16.msra.mxu0 0
    %3408 = vmatprep.subr.bf16.mxu0 0
    %3409 = vmatpush1.bf16.msra.mxu0 0
    %3410 = vmatprep.subr.bf16.mxu0 0
    %3411 = vmatpush1.bf16.msra.mxu0 0
    %3412 = vmatprep.mubr.bf16.mxu0 0
    %3413 = vmatmul.mubr.bf16.gmra.mrb[0].mxu0 %v2379
    %v3414 = vpop.f32.mrb[0].mxu0
    %v3415 = vadd.f32 0.0, %v3414
    %v3416 = vpop.f32.mrb[0].mxu0
    %v3417 = vpop.f32.mrb[0].mxu0
    %v3418 = vadd.f32 0.0, %v3417
    %v3419 = vpop.f32.mrb[0].mxu0
    %3420 = vdwg.mxu0
    %v3422 = vsel %vm91, %v3363, 0
    %3424 = vmatprep.subr.bf16.mxu0 0
    %3425 = vmatpush1.bf16.msra.mxu0 %v3422
    %3426 = vmatprep.subr.bf16.mxu0 0
    %3427 = vmatpush1.bf16.msra.mxu0 0
    %3428 = vmatprep.subr.bf16.mxu0 0
    %3429 = vmatpush1.bf16.msra.mxu0 0
    %3430 = vmatprep.subr.bf16.mxu0 0
    %3431 = vmatpush1.bf16.msra.mxu0 0
    %3432 = vmatprep.subr.bf16.mxu0 0
    %3433 = vmatpush1.bf16.msra.mxu0 0
    %3434 = vmatprep.subr.bf16.mxu0 0
    %3435 = vmatpush1.bf16.msra.mxu0 0
    %3436 = vmatprep.subr.bf16.mxu0 0
    %3437 = vmatpush1.bf16.msra.mxu0 0
    %3438 = vmatprep.subr.bf16.mxu0 0
    %3439 = vmatpush1.bf16.msra.mxu0 0
    %3440 = vmatprep.subr.bf16.mxu0 0
    %3441 = vmatpush1.bf16.msra.mxu0 0
    %3442 = vmatprep.subr.bf16.mxu0 0
    %3443 = vmatpush1.bf16.msra.mxu0 0
    %3444 = vmatprep.subr.bf16.mxu0 0
    %3445 = vmatpush1.bf16.msra.mxu0 0
    %3446 = vmatprep.subr.bf16.mxu0 0
    %3447 = vmatpush1.bf16.msra.mxu0 0
    %3448 = vmatprep.subr.bf16.mxu0 0
    %3449 = vmatpush1.bf16.msra.mxu0 0
    %3450 = vmatprep.subr.bf16.mxu0 0
    %3451 = vmatpush1.bf16.msra.mxu0 0
    %3452 = vmatprep.subr.bf16.mxu0 0
    %3453 = vmatpush1.bf16.msra.mxu0 0
    %3454 = vmatprep.subr.bf16.mxu0 0
    %3455 = vmatpush1.bf16.msra.mxu0 0
    %3456 = vmatprep.mubr.bf16.mxu0 0
    %3457 = vmatmul.mubr.bf16.gmra.mrb[0].mxu0 %v89
    %v3458 = vpop.f32.mrb[0].mxu0
    %v3459 = vadd.f32 %v3415, %v3458
    %v3460 = vpop.f32.mrb[0].mxu0
    %v3461 = vpop.f32.mrb[0].mxu0
    %v3462 = vadd.f32 %v3418, %v3461
    %v3463 = vpop.f32.mrb[0].mxu0
    %3464 = vdwg.mxu0
    %v3465 = vld [vmem:[%s18] sm:$0x1]
    %v3467 = vlaneseq
    %v3468 = vshrl.u32 %v3467, 7
    %v3469 = vsub.s32 0, %v3468
    %v3470 = vrot.slane %v3465, %v3469
    %v3472 = vadd.f32 %v3459, %v3470
    %v3473 = vadd.f32 %v3462, %v3470
    %v3474 = vpack.c.bf16 %v3349, %v3349
    %v3475 = vpack.c.bf16 %v3350, %v3350
    %v3476 = vld [vmem:[%s17] sm:$0xf]
    %v3477 = vld [vmem:[%s17 + $0x4] sm:$0xf]
    %v3478 = vld [vmem:[%s17 + $0x8] sm:$0xf]
    %v3479 = vld [vmem:[%s17 + $0xc] sm:$0xf]
    %v3480 = vld [vmem:[%s17 + $0x10] sm:$0xf]
    %v3481 = vld [vmem:[%s17 + $0x14] sm:$0xf]
    %v3482 = vld [vmem:[%s17 + $0x18] sm:$0xf]
    %v3483 = vld [vmem:[%s17 + $0x1c] sm:$0xf]
    %v3484 = vld [vmem:[%s17 + $0x20] sm:$0xf]
    %v3485 = vld [vmem:[%s17 + $0x24] sm:$0xf]
    %v3486 = vld [vmem:[%s17 + $0x28] sm:$0xf]
    %v3487 = vld [vmem:[%s17 + $0x2c] sm:$0xf]
    %v3488 = vld [vmem:[%s17 + $0x30] sm:$0xf]
    %v3489 = vld [vmem:[%s17 + $0x34] sm:$0xf]
    %v3490 = vld [vmem:[%s17 + $0x38] sm:$0xf]
    %v3491 = vld [vmem:[%s17 + $0x3c] sm:$0xf]
    %v3492 = vld [vmem:[%s17 + $0x40] sm:$0xf]
    %v3493 = vld [vmem:[%s17 + $0x44] sm:$0xf]
    %v3494 = vld [vmem:[%s17 + $0x48] sm:$0xf]
    %v3495 = vld [vmem:[%s17 + $0x4c] sm:$0xf]
    %v3496 = vld [vmem:[%s17 + $0x50] sm:$0xf]
    %v3497 = vld [vmem:[%s17 + $0x54] sm:$0xf]
    %v3498 = vld [vmem:[%s17 + $0x58] sm:$0xf]
    %v3499 = vld [vmem:[%s17 + $0x5c] sm:$0xf]
    %v3500 = vld [vmem:[%s17 + $0x60] sm:$0xf]
    %v3501 = vld [vmem:[%s17 + $0x64] sm:$0xf]
    %v3502 = vld [vmem:[%s17 + $0x68] sm:$0xf]
    %v3503 = vld [vmem:[%s17 + $0x6c] sm:$0xf]
    %v3504 = vld [vmem:[%s17 + $0x70] sm:$0xf]
    %v3505 = vld [vmem:[%s17 + $0x74] sm:$0xf]
    %v3506 = vld [vmem:[%s17 + $0x78] sm:$0xf]
    %v3507 = vld [vmem:[%s17 + $0x7c] sm:$0xf]
    %v3540 = vunpack.c.l.b16 %v3476
    %v3541 = vunpack.c.l.b16 %v3477
    %v3542 = vunpack.c.l.b16 %v3478
    %v3543 = vunpack.c.l.b16 %v3479
    %v3544 = vunpack.c.l.b16 %v3480
    %v3545 = vunpack.c.l.b16 %v3481
    %v3546 = vunpack.c.l.b16 %v3482
    %v3547 = vunpack.c.l.b16 %v3483
    %v3548 = vunpack.c.l.b16 %v3484
    %v3549 = vunpack.c.l.b16 %v3485
    %v3550 = vunpack.c.l.b16 %v3486
    %v3551 = vunpack.c.l.b16 %v3487
    %v3552 = vunpack.c.l.b16 %v3488
    %v3553 = vunpack.c.l.b16 %v3489
    %v3554 = vunpack.c.l.b16 %v3490
    %v3555 = vunpack.c.l.b16 %v3491
    %v3556 = vunpack.c.l.b16 %v3492
    %v3557 = vunpack.c.l.b16 %v3493
    %v3558 = vunpack.c.l.b16 %v3494
    %v3559 = vunpack.c.l.b16 %v3495
    %v3560 = vunpack.c.l.b16 %v3496
    %v3561 = vunpack.c.l.b16 %v3497
    %v3562 = vunpack.c.l.b16 %v3498
    %v3563 = vunpack.c.l.b16 %v3499
    %v3564 = vunpack.c.l.b16 %v3500
    %v3565 = vunpack.c.l.b16 %v3501
    %v3566 = vunpack.c.l.b16 %v3502
    %v3567 = vunpack.c.l.b16 %v3503
    %v3568 = vunpack.c.l.b16 %v3504
    %v3569 = vunpack.c.l.b16 %v3505
    %v3570 = vunpack.c.l.b16 %v3506
    %v3571 = vunpack.c.l.b16 %v3507
    %v3572 = vpack.c.b16 %v3541, %v3540
    %v3573 = vpack.c.b16 %v3543, %v3542
    %v3574 = vpack.c.b16 %v3545, %v3544
    %v3575 = vpack.c.b16 %v3547, %v3546
    %v3576 = vpack.c.b16 %v3549, %v3548
    %v3577 = vpack.c.b16 %v3551, %v3550
    %v3578 = vpack.c.b16 %v3553, %v3552
    %v3579 = vpack.c.b16 %v3555, %v3554
    %v3580 = vpack.c.b16 %v3557, %v3556
    %v3581 = vpack.c.b16 %v3559, %v3558
    %v3582 = vpack.c.b16 %v3561, %v3560
    %v3583 = vpack.c.b16 %v3563, %v3562
    %v3584 = vpack.c.b16 %v3565, %v3564
    %v3585 = vpack.c.b16 %v3567, %v3566
    %v3586 = vpack.c.b16 %v3569, %v3568
    %v3587 = vpack.c.b16 %v3571, %v3570
    %3604 = vmatprep.subr.bf16.mxu0 0
    %3605 = vmatpush1.bf16.msra.mxu0 %v3572
    %3606 = vmatprep.subr.bf16.mxu0 0
    %3607 = vmatpush1.bf16.msra.mxu0 %v3573
    %3608 = vmatprep.subr.bf16.mxu0 0
    %3609 = vmatpush1.bf16.msra.mxu0 %v3574
    %3610 = vmatprep.subr.bf16.mxu0 0
    %3611 = vmatpush1.bf16.msra.mxu0 %v3575
    %3612 = vmatprep.subr.bf16.mxu0 0
    %3613 = vmatpush1.bf16.msra.mxu0 %v3576
    %3614 = vmatprep.subr.bf16.mxu0 0
    %3615 = vmatpush1.bf16.msra.mxu0 %v3577
    %3616 = vmatprep.subr.bf16.mxu0 0
    %3617 = vmatpush1.bf16.msra.mxu0 %v3578
    %3618 = vmatprep.subr.bf16.mxu0 0
    %3619 = vmatpush1.bf16.msra.mxu0 %v3579
    %3620 = vmatprep.subr.bf16.mxu0 0
    %3621 = vmatpush1.bf16.msra.mxu0 %v3580
    %3622 = vmatprep.subr.bf16.mxu0 0
    %3623 = vmatpush1.bf16.msra.mxu0 %v3581
    %3624 = vmatprep.subr.bf16.mxu0 0
    %3625 = vmatpush1.bf16.msra.mxu0 %v3582
    %3626 = vmatprep.subr.bf16.mxu0 0
    %3627 = vmatpush1.bf16.msra.mxu0 %v3583
    %3628 = vmatprep.subr.bf16.mxu0 0
    %3629 = vmatpush1.bf16.msra.mxu0 %v3584
    %3630 = vmatprep.subr.bf16.mxu0 0
    %3631 = vmatpush1.bf16.msra.mxu0 %v3585
    %3632 = vmatprep.subr.bf16.mxu0 0
    %3633 = vmatpush1.bf16.msra.mxu0 %v3586
    %3634 = vmatprep.subr.bf16.mxu0 0
    %3635 = vmatpush1.bf16.msra.mxu0 %v3587
    %3636 = vmatprep.mubr.bf16.mxu0 %v3475
    %3637 = vmatmul.mubr.bf16.gmra.mrb[0].mxu0 %v3474
    %v3638 = vpop.f32.mrb[0].mxu0
    %v3639 = vadd.f32 0.0, %v3638
    %v3640 = vpop.f32.mrb[0].mxu0
    %v3641 = vpop.f32.mrb[0].mxu0
    %v3642 = vpop.f32.mrb[0].mxu0
    %3643 = vdwg.mxu0
    %v3646 = vunpack.c.l.s4 1966171168
    %v3647 = vunpack.c.0.s8 %v3646
    %v3648 = vlaneseq
    %v3649 = vshrl.u32 %v3648, 7
    %v3650 = vsub.s32 %v3647, %v3649
    %v3651 = vrot.slane %v3639, %v3650
    %v3652 = vcombine.high %v3651, %v3651
    %v3654 = vunpack.c.l.s4 1966171168
    %v3655 = vunpack.c.0.s8 %v3654
    %v3656 = vlaneseq
    %v3657 = vshrl.u32 %v3656, 7
    %v3658 = vsub.s32 %v3655, %v3657
    %v3659 = vrot.slane %v3651, %v3658
    %v3661 = vunpack.c.l.s4 1966171168
    %v3662 = vunpack.c.0.s8 %v3661
    %v3663 = vlaneseq
    %v3664 = vshrl.u32 %v3663, 7
    %v3665 = vsub.s32 %v3662, %v3664
    %v3666 = vrot.slane %v3652, %v3665
    %v3667 = vlaneseq
    %v3668 = vshrl.u32 %v3667, 7
    %v3669 = vsub.s32 0, %v3668
    %v3670 = vrot.slane %v3659, %v3669
    %v3671 = vlaneseq
    %v3672 = vshrl.u32 %v3671, 7
    %v3673 = vsub.s32 0, %v3672
    %v3674 = vrot.slane %v3666, %v3673
    %v3677 = vadd.f32 %v3472, %v3670
    %v3678 = vadd.f32 %v3473, %v3674
    %v3679 = vmax.f32 %v3677, 0.0
    %v3680 = vmax.f32 %v3678, 0.0
    %v3681 = vmul.f32 %v3679, %v1179
    %v3682 = vmul.f32 %v3680, %v1184
    %v3683 = vcombine.high %v3681, 0.0
    %v3685 = vunpack.c.l.s4 1983009808
    %v3686 = vunpack.c.0.s8 %v3685
    %v3687 = vlaneseq
    %v3688 = vshrl.u32 %v3687, 7
    %v3689 = vsub.s32 %v3686, %v3688
    %v3690 = vrot.slane %v3681, %v3689
    %v3692 = vunpack.c.l.s4 1983009808
    %v3693 = vunpack.c.0.s8 %v3692
    %v3694 = vlaneseq
    %v3695 = vshrl.u32 %v3694, 7
    %v3696 = vsub.s32 %v3693, %v3695
    %v3697 = vrot.slane %v3683, %v3696
    %v3698 = vcombine.high %v3682, 0.0
    %v3700 = vunpack.c.l.s4 1983009808
    %v3701 = vunpack.c.0.s8 %v3700
    %v3702 = vlaneseq
    %v3703 = vshrl.u32 %v3702, 7
    %v3704 = vsub.s32 %v3701, %v3703
    %v3705 = vrot.slane %v3682, %v3704
    %v3707 = vunpack.c.l.s4 1983009808
    %v3708 = vunpack.c.0.s8 %v3707
    %v3709 = vlaneseq
    %v3710 = vshrl.u32 %v3709, 7
    %v3711 = vsub.s32 %v3708, %v3710
    %v3712 = vrot.slane %v3698, %v3711
    %v3713 = vcombine.low %v3690, %v3705
    %v3714 = vcombine.high %v3690, %v3705
    %v3716 = vunpack.c.l.s4 1934713408
    %v3717 = vunpack.c.0.s8 %v3716
    %v3718 = vlaneseq
    %v3719 = vshrl.u32 %v3718, 7
    %v3720 = vsub.s32 %v3717, %v3719
    %v3721 = vrot.slane %v3713, %v3720
    %v3723 = vunpack.c.l.s4 1934713408
    %v3724 = vunpack.c.0.s8 %v3723
    %v3725 = vlaneseq
    %v3726 = vshrl.u32 %v3725, 7
    %v3727 = vsub.s32 %v3724, %v3726
    %v3728 = vrot.slane %v3714, %v3727
    %v3729 = vcombine.low %v3697, %v3712
    %v3730 = vcombine.high %v3697, %v3712
    %v3732 = vunpack.c.l.s4 1934713408
    %v3733 = vunpack.c.0.s8 %v3732
    %v3734 = vlaneseq
    %v3735 = vshrl.u32 %v3734, 7
    %v3736 = vsub.s32 %v3733, %v3735
    %v3737 = vrot.slane %v3729, %v3736
    %v3739 = vunpack.c.l.s4 1934713408
    %v3740 = vunpack.c.0.s8 %v3739
    %v3741 = vlaneseq
    %v3742 = vshrl.u32 %v3741, 7
    %v3743 = vsub.s32 %v3740, %v3742
    %v3744 = vrot.slane %v3730, %v3743
    %v3745 = vcombine.high %v3721, 0.0
    %v3746 = vcombine.high %v3728, 0.0
    %v3747 = vcombine.high %v3737, 0.0
    %v3748 = vcombine.high %v3744, 0.0
    %3750 = vrot.lane.b32.xlu0 %v3745, 32
    %v3751 = vpop.permute.xlu0 %3750
    %3754 = vrot.lane.b32.xlu0 %v3728, 64
    %v3755 = vpop.permute.xlu0 %3754
    %3758 = vrot.lane.b32.xlu0 %v3746, 96
    %v3759 = vpop.permute.xlu0 %3758
    %3762 = vrot.lane.b32.xlu0 %v3747, 32
    %v3763 = vpop.permute.xlu0 %3762
    %3766 = vrot.lane.b32.xlu0 %v3744, 64
    %v3767 = vpop.permute.xlu0 %3766
    %3770 = vrot.lane.b32.xlu0 %v3748, 96
    %v3771 = vpop.permute.xlu0 %3770
    %v3773 = vsel %vm1127, %v3721, %v3751
    %v3774 = vsel %vm3348, %v3773, %v3755
    %vm3775 = vcmask 785408
    %v3776 = vsel %vm3775, %v3774, %v3759
    %v3777 = vsel %vm1127, %v3737, %v3763
    %v3778 = vsel %vm3348, %v3777, %v3767
    %v3779 = vsel %vm3775, %v3778, %v3771
    %v3782 = vcombine.low %v3776, %v3779
    %v3784 = vunpack.c.l.s4 1983009808
    %v3785 = vunpack.c.0.s8 %v3784
    %v3786 = vlaneseq
    %v3787 = vshrl.u32 %v3786, 7
    %v3788 = vsub.s32 %v3785, %v3787
    %v3789 = vrot.slane %v3782, %v3788
    %3791 = vst [vmem:[#allocation2] sm:$0xf] %v3789
    // Predicated region
    $region78: #{tpu_custom_call.1} parent=1 // pred_check
      _
    $region79: #{tpu_custom_call.1} parent=1 // pred_check_branch
      %3793 = sbr.rel (0) target = $region81
    $region80: #{tpu_custom_call.1} parent=1 // pred_region
      %s3795 = ssub.s32 64, 64
      %3796 = vsyncadd [#allocation3], %s3795
      %s3798 = sshll.u32 [#allocation2], 4
      %s3799 = int_to_ptr.vmem [resolvable:$true] %s3798
      %3801 = dma.vmem_to_hbm [thread:$0]  %s3799, 64, %s19, [#allocation3]
    $region81: #{tpu_custom_call.1} parent=1 // pred_fallthru
      _
    // Predicated region
    $region82: #{tpu_custom_call.1} parent=1 // pred_check
      _
    $region83: #{tpu_custom_call.1} parent=1 // pred_check_branch
      %3803 = sbr.rel (0) target = $region85
    $region84: #{tpu_custom_call.1} parent=1 // pred_region
      %s3805 = ssub.s32 64, 64
      %3806 = vsyncadd [#allocation5], %s3805
      %s3808 = sshll.u32 [#allocation4], 4
      %s3809 = int_to_ptr.vmem [resolvable:$true] %s3808
      %3811 = dma.vmem_to_hbm [thread:$0]  %s3809, 64, %s20, [#allocation5]
    $region85: #{tpu_custom_call.1} parent=1 // pred_fallthru
      _
    // Predicated region
    $region86: #{tpu_custom_call.1} parent=1 // pred_check
      _
    $region87: #{tpu_custom_call.1} parent=1 // pred_check_branch
      %3813 = sbr.rel (0) target = $region89
    $region88: #{tpu_custom_call.1} parent=1 // pred_region
      %3814 = dma.done [#allocation3], 64
    $region89: #{tpu_custom_call.1} parent=1 // pred_fallthru
      _
    // Predicated region
    $region90: #{tpu_custom_call.1} parent=1 // pred_check
      _
    $region91: #{tpu_custom_call.1} parent=1 // pred_check_branch
      %3816 = sbr.rel (0) target = $region93
    $region92: #{tpu_custom_call.1} parent=1 // pred_region
      %3817 = dma.done [#allocation5], 64
    $region93: #{tpu_custom_call.1} parent=1 // pred_fallthru
      _
    %3818 = vsyncpa [#allocation3], 1
    %3819 = vsyncpa [#allocation5], 1

</llo_original>
